<compile_context>
chip_gen: v7x
topology: tpu7x:2x2x1
jax: 0.10.0
libtpu: 0.0.40
codegen_flags: <defaults>
</compile_context>

<pallas_src>
import math

import jax
import jax.numpy as jnp
import numpy as np
from jax.experimental import pallas as pl
from jax.experimental.pallas import tpu as pltpu

C = 10                 # class_num
H1, H2, H3 = 256, 128, 50
H3P = 128              # LSTM3 hidden padded to a full lane tile (padded columns compute exactly 0)
OUT_PAD = 128          # 2-wide head padded to a lane-dense store; wrapper slices [:, :2]

# sum of K*N over all matmuls per row (for the cost estimate)
_KN_SUM = (C * 1280 + H1 * 3 * H2 + H2 * 3 * H3P
           + 512 * 256 + 256 * 128 + 128 * 64          # Output-MLP layers 2-4
           + 512 * 64                                   # Prediction layer 2
           + H3P * 512 + 64 * 512 + 64 * 512            # joint layer 1 (row-split)
           + 512 * 256 + 256 * 128 + 128 * OUT_PAD)     # joint layers 2-4


# ----------------------------------------------------------------------------- kernel
def _memia_kernel(x_ref, pred_ref, wa_ref, w256_ref, w128_ref, w512_ref, w64_ref,
                  b_ref, out_ref):
    f32 = jnp.float32
    relu = lambda t: jnp.maximum(t, 0.0)
    dot = lambda a, b: jnp.dot(a, b, preferred_element_type=f32)

    def brow(r, w):                      # bias/row slab row r, first w lanes
        return b_ref[r:r + 1, 0:w]

    def lstm(pre, h):                    # zero-(h0,c0) single-step LSTM from fused gate pre-acts
        i = jax.nn.sigmoid(pre[:, 0:h])
        g = jnp.tanh(pre[:, h:2 * h])
        o = jax.nn.sigmoid(pre[:, 2 * h:3 * h])
        return o * jnp.tanh(i * g)

    x = x_ref[...]                       # (Bb, C)
    pred = pred_ref[...]                 # (Bb, 1)

    # -- Stage A: one (C -> 1280) matmul feeds LSTM1 gates and Output-MLP layer 1.
    pre_a = dot(x, wa_ref[...]) + brow(0, 1280)
    h1 = lstm(pre_a[:, 0:3 * H1], H1)                                   # (Bb, 256)
    oc = relu(pre_a[:, 3 * H1:1280])                                    # (Bb, 512)

    # -- LSTM chain and Output-MLP chain (independent; interleaved for ILP).
    h2 = lstm(dot(h1, w256_ref[:, 0:3 * H2]) + brow(1, 3 * H2), H2)     # (Bb, 128)
    oc = relu(dot(oc, w512_ref[:, 0:256]) + brow(3, 256))               # (Bb, 256)
    h3 = lstm(dot(h2, w128_ref[:, 0:3 * H3P]) + brow(2, 3 * H3P), H3P)  # (Bb, 128); cols >= 50 are 0
    oc = relu(dot(oc, w256_ref[:, 384:512]) + brow(4, 128))             # (Bb, 128)
    oc = dot(oc, w128_ref[:, 1024:1088]) + brow(5, 64)                  # (Bb, 64)   (no ReLU on last layer)

    # -- Prediction component: Linear(1, 512) == broadcast multiply, then 512 -> 64.
    pc = relu(pred * brow(6, 512) + brow(7, 512))                       # (Bb, 512)
    pc = dot(pc, w512_ref[:, 512:576]) + brow(8, 64)                    # (Bb, 64)

    # -- Joint encoder; concat([h3, pc, oc]) folded into a row-split of its first weight.
    h = relu(dot(h3, w128_ref[:, 384:896])
             + dot(pc, w64_ref[:, 0:512])
             + dot(oc, w64_ref[:, 512:1024])
             + brow(9, 512))                                            # (Bb, 512)
    h = relu(dot(h, w512_ref[:, 256:512]) + brow(10, 256))              # (Bb, 256)
    h = relu(dot(h, w256_ref[:, 512:640]) + brow(11, 128))              # (Bb, 128)
    out_ref[...] = dot(h, w128_ref[:, 896:1024]) + brow(12, OUT_PAD)    # (Bb, 128); only [:, :2] meaningful


# ----------------------------------------------------------------------------- wrapper
def combined_shadow_attack(output, prediction, label, packed, block_b=64):
    WA, W256, W128, W512, W64, bias = packed
    # The reference forward one-hot encodes the label but never uses it (dead value).
    _ = jax.nn.one_hot(label.astype(jnp.int32), C, dtype=jnp.float32)

    x = output.reshape(-1, C).astype(jnp.float32)
    p = prediction.reshape(-1, 1).astype(jnp.float32)
    B = x.shape[0]
    nb = pl.cdiv(B, block_b)
    Bp = nb * block_b
    if Bp != B:
        x = jnp.pad(x, ((0, Bp - B), (0, 0)))
        p = jnp.pad(p, ((0, Bp - B), (0, 0)))

    weights = (WA, W256, W128, W512, W64, bias)
    in_specs = (
        [pl.BlockSpec((block_b, C), lambda i: (i, 0)),       # activations tiled over batch
         pl.BlockSpec((block_b, 1), lambda i: (i, 0))]
        # constant block index -> weights stay VMEM-resident across batch tiles
        + [pl.BlockSpec(w.shape, lambda i: (0, 0)) for w in weights]
    )

    weight_bytes = sum(int(np.prod(w.shape)) * 4 for w in weights)
    cost = pl.CostEstimate(
        flops=2 * Bp * _KN_SUM,
        transcendentals=4 * Bp * (H1 + H2 + H3P),
        bytes_accessed=weight_bytes + 4 * Bp * (C + 1 + OUT_PAD),
    )

    res = pl.pallas_call(
        _memia_kernel,
        out_shape=jax.ShapeDtypeStruct((Bp, OUT_PAD), jnp.float32),
        grid=(nb,),
        in_specs=in_specs,
        out_specs=pl.BlockSpec((block_b, OUT_PAD), lambda i: (i, 0)),
        compiler_params=pltpu.CompilerParams(dimension_semantics=("parallel",)),
        cost_estimate=cost,
    )(x, p, *weights)
    return res[:B, :2]


# ----------------------------------------------------------------------------- params
def init_raw_params(key):
    """PyTorch-style raw parameters (same init distributions as nn.LSTM / nn.Linear)."""
    ks = iter(jax.random.split(key, 64))

    def uni(shape, bound):
        return jax.random.uniform(next(ks), shape, jnp.float32, -bound, bound)

    def lstm(in_dim, hidden):
        b = 1.0 / math.sqrt(hidden)
        return dict(w_ih=uni((4 * hidden, in_dim), b), w_hh=uni((4 * hidden, hidden), b),
                    b_ih=uni((4 * hidden,), b), b_hh=uni((4 * hidden,), b))

    def linear(in_dim, out_dim):
        b = 1.0 / math.sqrt(in_dim)
        return dict(w=uni((out_dim, in_dim), b), b=uni((out_dim,), b))

    return dict(
        lstm1=lstm(C, H1), lstm2=lstm(H1, H2), lstm3=lstm(H2, H3),
        oc1=linear(C, 512), oc2=linear(512, 256), oc3=linear(256, 128), oc4=linear(128, 64),
        pc1=linear(1, 512), pc2=linear(512, 64),
        j1=linear(H3 + 64 + 64, 512), j2=linear(512, 256), j3=linear(256, 128), j4=linear(128, 2),
    )


def _fused_lstm_gates(p, hidden, hidden_pad):
    """(in, 3*hidden_pad) fused i|g|o gate weight (transposed) and (3*hidden_pad,) bias.
    Padded gate columns / bias entries are zero -> padded h columns compute exactly 0."""
    w_ih, b = p["w_ih"], p["b_ih"] + p["b_hh"]          # gate order i, f, g, o

    def gate(g):
        return w_ih[g * hidden:(g + 1) * hidden].T, b[g * hidden:(g + 1) * hidden]

    def pad_w(w):
        return jnp.pad(w, ((0, 0), (0, hidden_pad - hidden)))

    def pad_b(v):
        return jnp.pad(v, (0, hidden_pad - hidden))

    (wi, bi), (wg, bg), (wo, bo) = gate(0), gate(2), gate(3)
    W = jnp.concatenate([pad_w(wi), pad_w(wg), pad_w(wo)], axis=1)
    B = jnp.concatenate([pad_b(bi), pad_b(bg), pad_b(bo)])
    return W, B


def pack_params(raw):
    """Pack ~40 raw tensors into 5 weight slabs (grouped by input dim) + 1 bias slab."""
    T = lambda p: p["w"].T

    g1w, g1b = _fused_lstm_gates(raw["lstm1"], H1, H1)
    g2w, g2b = _fused_lstm_gates(raw["lstm2"], H2, H2)
    g3w, g3b = _fused_lstm_gates(raw["lstm3"], H3, H3P)

    # joint first-layer weight row-split (concat order in forward: [h3, pc, oc])
    j1wT = T(raw["j1"])                                          # (178, 512)
    j1a = jnp.pad(j1wT[0:H3], ((0, H3P - H3), (0, 0)))           # (128, 512), zero pad rows
    j1b = j1wT[H3:H3 + 64]                                       # (64, 512)  -> pc
    j1c = j1wT[H3 + 64:H3 + 128]                                 # (64, 512)  -> oc
    j4w = jnp.pad(T(raw["j4"]), ((0, 0), (0, OUT_PAD - 2)))      # (128, 128), zero pad cols

    WA = jnp.concatenate([g1w, T(raw["oc1"])], axis=1)                        # (10, 1280)
    W256 = jnp.concatenate([g2w, T(raw["oc3"]), T(raw["j3"])], axis=1)        # (256, 640)
    W128 = jnp.concatenate([g3w, j1a, j4w, T(raw["oc4"])], axis=1)            # (128, 1088)
    W512 = jnp.concatenate([T(raw["oc2"]), T(raw["j2"]), T(raw["pc2"])], axis=1)  # (512, 576)
    W64 = jnp.concatenate([j1b, j1c], axis=1)                                 # (64, 1024)

    BW = 1280
    row = lambda v: jnp.pad(v, (0, BW - v.shape[0]))[None, :]
    bias = jnp.concatenate([
        row(jnp.concatenate([g1b, raw["oc1"]["b"]])),    # 0: LSTM1 gates | oc layer-1 bias
        row(g2b),                                        # 1: LSTM2 gate bias
        row(g3b),                                        # 2: LSTM3 gate bias (padded)
        row(raw["oc2"]["b"]),                            # 3
        row(raw["oc3"]["b"]),                            # 4
        row(raw["oc4"]["b"]),                            # 5
        row(raw["pc1"]["w"][:, 0]),                      # 6: Linear(1,512) weight as a row
        row(raw["pc1"]["b"]),                            # 7
        row(raw["pc2"]["b"]),                            # 8
        row(raw["j1"]["b"]),                             # 9
        row(raw["j2"]["b"]),                             # 10
        row(raw["j3"]["b"]),                             # 11
        row(jnp.pad(raw["j4"]["b"], (0, OUT_PAD - 2))),  # 12 (padded)
    ], axis=0)                                           # (13, 1280)

    return WA, W256, W128, W512, W64, bias


# ----------------------------------------------------------------------------- reference (plain JAX)
def reference(output, prediction, label, raw):
    sig = jax.nn.sigmoid
    relu = lambda t: jnp.maximum(t, 0.0)
    B = output.shape[0]
    _ = jax.nn.one_hot(label.astype(jnp.int32), C, dtype=jnp.float32)   # dead, as in the module

    def lstm(x, p, hidden):
        h0 = jnp.zeros((B, hidden), jnp.float32)
        c0 = jnp.zeros((B, hidden), jnp.float32)
        gates = x @ p["w_ih"].T + h0 @ p["w_hh"].T + p["b_ih"] + p["b_hh"]
        i = sig(gates[:, 0:hidden])
        f = sig(gates[:, hidden:2 * hidden])
        g = jnp.tanh(gates[:, 2 * hidden:3 * hidden])
        o = sig(gates[:, 3 * hidden:4 * hidden])
        c = f * c0 + i * g
        return o * jnp.tanh(c)

    lin = lambda x, p: x @ p["w"].T + p["b"]

    h3 = lstm(lstm(lstm(output, raw["lstm1"], H1), raw["lstm2"], H2), raw["lstm3"], H3)

    oc = relu(lin(output, raw["oc1"]))
    oc = relu(lin(oc, raw["oc2"]))
    oc = relu(lin(oc, raw["oc3"]))
    oc = lin(oc, raw["oc4"])

    pc = relu(lin(prediction, raw["pc1"]))
    pc = lin(pc, raw["pc2"])

    h = relu(lin(jnp.concatenate([h3, pc, oc], axis=1), raw["j1"]))
    h = relu(lin(h, raw["j2"]))
    h = relu(lin(h, raw["j3"]))
    return lin(h, raw["j4"])


# ----------------------------------------------------------------------------- main
if __name__ == "__main__":
    key = jax.random.PRNGKey(0)
    k_out, k_pred, k_lab, k_par = jax.random.split(key, 4)

    raw = init_raw_params(k_par)
    packed = pack_params(raw)

    # The nn.Module hard-codes batch_size = 64 (output.view(64, 1, class_num)).
    B = 64
    output = jax.random.normal(k_out, (B, C), jnp.float32)
    prediction = jax.random.uniform(k_pred, (B, 1), jnp.float32)
    label = jax.random.randint(k_lab, (B,), 0, C)

    res = combined_shadow_attack(output, prediction, label, packed, block_b=64)
    jax.block_until_ready(res)
    assert res.shape == (B, 2)
    ref = reference(output, prediction, label, raw)
    np.testing.assert_allclose(np.asarray(res), np.asarray(ref), rtol=2e-4, atol=2e-4)

    # Multi-tile path: several 64-row module batches in one launch. The batch grid axis
    # keeps the packed weights VMEM-resident across tiles and is megacore-parallel on v7x.
    B2 = 256
    out2 = jax.random.normal(jax.random.PRNGKey(1), (B2, C), jnp.float32)
    pred2 = jax.random.uniform(jax.random.PRNGKey(2), (B2, 1), jnp.float32)
    lab2 = jax.random.randint(jax.random.PRNGKey(3), (B2,), 0, C)
    res2 = combined_shadow_attack(out2, pred2, lab2, packed, block_b=128)
    jax.block_until_ready(res2)
    ref2 = reference(out2, pred2, lab2, raw)
    np.testing.assert_allclose(np.asarray(res2), np.asarray(ref2), rtol=2e-4, atol=2e-4)

    print("KERNEL_OK")
</pallas_src>

<mosaic_0001>
module attributes {stable_mosaic.version = 11 : i64} {
  func.func @_memia_kernel(%arg0: i32, %arg1: memref<64x10xf32, #tpu.memory_space<vmem>>, %arg2: memref<64x1xf32, #tpu.memory_space<vmem>>, %arg3: memref<10x1280xf32, #tpu.memory_space<vmem>>, %arg4: memref<256x640xf32, #tpu.memory_space<vmem>>, %arg5: memref<128x1088xf32, #tpu.memory_space<vmem>>, %arg6: memref<512x576xf32, #tpu.memory_space<vmem>>, %arg7: memref<64x1024xf32, #tpu.memory_space<vmem>>, %arg8: memref<13x1280xf32, #tpu.memory_space<vmem>>, %arg9: memref<64x128xf32, #tpu.memory_space<vmem>>) attributes {dimension_semantics = [#tpu.dimension_semantics<parallel>], iteration_bounds = array<i64: 1>, scalar_prefetch = 0 : i64, scratch_operands = 0 : i64, tpu.core_type = #tpu.core_type<tc>, window_params = [{transform_indices = @transform_0, window_bounds = array<i64: 64, 10>}, {transform_indices = @transform_1, window_bounds = array<i64: 64, 1>}, {pipeline_mode = #tpu.pipeline_mode<synchronous>, transform_indices = @transform_2, window_bounds = array<i64: 10, 1280>}, {pipeline_mode = #tpu.pipeline_mode<synchronous>, transform_indices = @transform_3, window_bounds = array<i64: 256, 640>}, {pipeline_mode = #tpu.pipeline_mode<synchronous>, transform_indices = @transform_4, window_bounds = array<i64: 128, 1088>}, {pipeline_mode = #tpu.pipeline_mode<synchronous>, transform_indices = @transform_5, window_bounds = array<i64: 512, 576>}, {pipeline_mode = #tpu.pipeline_mode<synchronous>, transform_indices = @transform_6, window_bounds = array<i64: 64, 1024>}, {pipeline_mode = #tpu.pipeline_mode<synchronous>, transform_indices = @transform_7, window_bounds = array<i64: 13, 1280>}, {transform_indices = @transform_8, window_bounds = array<i64: 64, 128>}]} {
    %c0 = arith.constant 0 : index
    %c0_0 = arith.constant 0 : index
    %0 = vector.load %arg1[%c0, %c0_0] : memref<64x10xf32, #tpu.memory_space<vmem>>, vector<64x10xf32>
    %c0_1 = arith.constant 0 : index
    %c0_2 = arith.constant 0 : index
    %1 = vector.load %arg2[%c0_1, %c0_2] : memref<64x1xf32, #tpu.memory_space<vmem>>, vector<64x1xf32>
    %c0_3 = arith.constant 0 : index
    %c0_4 = arith.constant 0 : index
    %2 = vector.load %arg3[%c0_3, %c0_4] : memref<10x1280xf32, #tpu.memory_space<vmem>>, vector<10x1280xf32>
    %cst = arith.constant dense<0.000000e+00> : vector<64x1280xf32>
    %3 = tpu.matmul %0, %2, %cst {dimension_numbers = #tpu.dot_dimension_numbers<[1], [0], [0], [1], [0, 0, 1, 1], [], []>} : vector<64x10xf32>, vector<10x1280xf32>, vector<64x1280xf32> -> vector<64x1280xf32>
    %c0_5 = arith.constant 0 : index
    %c0_6 = arith.constant 0 : index
    %4 = vector.load %arg8[%c0_5, %c0_6] : memref<13x1280xf32, #tpu.memory_space<vmem>>, vector<1x1280xf32>
    %5 = vector.broadcast %4 : vector<1x1280xf32> to vector<64x1280xf32>
    %6 = arith.addf %3, %5 : vector<64x1280xf32>
    %7 = vector.extract_strided_slice %6 {offsets = [0, 0], sizes = [64, 768], strides = [1, 1]} : vector<64x1280xf32> to vector<64x768xf32>
    %8 = vector.extract_strided_slice %7 {offsets = [0, 0], sizes = [64, 256], strides = [1, 1]} : vector<64x768xf32> to vector<64x256xf32>
    %9 = arith.negf %8 : vector<64x256xf32>
    %10 = math.exp %9 : vector<64x256xf32>
    %cst_7 = arith.constant 1.000000e+00 : f32
    %11 = vector.broadcast %cst_7 : f32 to vector<64x256xf32>
    %12 = arith.addf %11, %10 : vector<64x256xf32>
    %13 = arith.divf %11, %12 : vector<64x256xf32>
    %14 = vector.extract_strided_slice %7 {offsets = [0, 256], sizes = [64, 256], strides = [1, 1]} : vector<64x768xf32> to vector<64x256xf32>
    %15 = math.tanh %14 : vector<64x256xf32>
    %16 = vector.extract_strided_slice %7 {offsets = [0, 512], sizes = [64, 256], strides = [1, 1]} : vector<64x768xf32> to vector<64x256xf32>
    %17 = arith.negf %16 : vector<64x256xf32>
    %18 = math.exp %17 : vector<64x256xf32>
    %cst_8 = arith.constant 1.000000e+00 : f32
    %19 = vector.broadcast %cst_8 : f32 to vector<64x256xf32>
    %20 = arith.addf %19, %18 : vector<64x256xf32>
    %21 = arith.divf %19, %20 : vector<64x256xf32>
    %22 = arith.mulf %13, %15 : vector<64x256xf32>
    %23 = math.tanh %22 : vector<64x256xf32>
    %24 = arith.mulf %21, %23 : vector<64x256xf32>
    %25 = vector.extract_strided_slice %6 {offsets = [0, 768], sizes = [64, 512], strides = [1, 1]} : vector<64x1280xf32> to vector<64x512xf32>
    %cst_9 = arith.constant 0.000000e+00 : f32
    %26 = vector.broadcast %cst_9 : f32 to vector<64x512xf32>
    %27 = arith.maximumf %25, %26 : vector<64x512xf32>
    %c0_10 = arith.constant 0 : index
    %c0_11 = arith.constant 0 : index
    %28 = vector.load %arg4[%c0_10, %c0_11] : memref<256x640xf32, #tpu.memory_space<vmem>>, vector<256x384xf32>
    %cst_12 = arith.constant dense<0.000000e+00> : vector<64x384xf32>
    %29 = tpu.matmul %24, %28, %cst_12 {dimension_numbers = #tpu.dot_dimension_numbers<[1], [0], [0], [1], [0, 0, 1, 1], [], []>} : vector<64x256xf32>, vector<256x384xf32>, vector<64x384xf32> -> vector<64x384xf32>
    %c1 = arith.constant 1 : index
    %c0_13 = arith.constant 0 : index
    %30 = vector.load %arg8[%c1, %c0_13] : memref<13x1280xf32, #tpu.memory_space<vmem>>, vector<1x384xf32>
    %31 = vector.broadcast %30 : vector<1x384xf32> to vector<64x384xf32>
    %32 = arith.addf %29, %31 : vector<64x384xf32>
    %33 = vector.extract_strided_slice %32 {offsets = [0, 0], sizes = [64, 128], strides = [1, 1]} : vector<64x384xf32> to vector<64x128xf32>
    %34 = arith.negf %33 : vector<64x128xf32>
    %35 = math.exp %34 : vector<64x128xf32>
    %cst_14 = arith.constant 1.000000e+00 : f32
    %36 = vector.broadcast %cst_14 : f32 to vector<64x128xf32>
    %37 = arith.addf %36, %35 : vector<64x128xf32>
    %38 = arith.divf %36, %37 : vector<64x128xf32>
    %39 = vector.extract_strided_slice %32 {offsets = [0, 128], sizes = [64, 128], strides = [1, 1]} : vector<64x384xf32> to vector<64x128xf32>
    %40 = math.tanh %39 : vector<64x128xf32>
    %41 = vector.extract_strided_slice %32 {offsets = [0, 256], sizes = [64, 128], strides = [1, 1]} : vector<64x384xf32> to vector<64x128xf32>
    %42 = arith.negf %41 : vector<64x128xf32>
    %43 = math.exp %42 : vector<64x128xf32>
    %cst_15 = arith.constant 1.000000e+00 : f32
    %44 = vector.broadcast %cst_15 : f32 to vector<64x128xf32>
    %45 = arith.addf %44, %43 : vector<64x128xf32>
    %46 = arith.divf %44, %45 : vector<64x128xf32>
    %47 = arith.mulf %38, %40 : vector<64x128xf32>
    %48 = math.tanh %47 : vector<64x128xf32>
    %49 = arith.mulf %46, %48 : vector<64x128xf32>
    %c0_16 = arith.constant 0 : index
    %c0_17 = arith.constant 0 : index
    %50 = vector.load %arg6[%c0_16, %c0_17] : memref<512x576xf32, #tpu.memory_space<vmem>>, vector<512x256xf32>
    %cst_18 = arith.constant dense<0.000000e+00> : vector<64x256xf32>
    %51 = tpu.matmul %27, %50, %cst_18 {dimension_numbers = #tpu.dot_dimension_numbers<[1], [0], [0], [1], [0, 0, 1, 1], [], []>} : vector<64x512xf32>, vector<512x256xf32>, vector<64x256xf32> -> vector<64x256xf32>
    %c3 = arith.constant 3 : index
    %c0_19 = arith.constant 0 : index
    %52 = vector.load %arg8[%c3, %c0_19] : memref<13x1280xf32, #tpu.memory_space<vmem>>, vector<1x256xf32>
    %53 = vector.broadcast %52 : vector<1x256xf32> to vector<64x256xf32>
    %54 = arith.addf %51, %53 : vector<64x256xf32>
    %cst_20 = arith.constant 0.000000e+00 : f32
    %55 = vector.broadcast %cst_20 : f32 to vector<64x256xf32>
    %56 = arith.maximumf %54, %55 : vector<64x256xf32>
    %c0_21 = arith.constant 0 : index
    %c0_22 = arith.constant 0 : index
    %57 = vector.load %arg5[%c0_21, %c0_22] : memref<128x1088xf32, #tpu.memory_space<vmem>>, vector<128x384xf32>
    %cst_23 = arith.constant dense<0.000000e+00> : vector<64x384xf32>
    %58 = tpu.matmul %49, %57, %cst_23 {dimension_numbers = #tpu.dot_dimension_numbers<[1], [0], [0], [1], [0, 0, 1, 1], [], []>} : vector<64x128xf32>, vector<128x384xf32>, vector<64x384xf32> -> vector<64x384xf32>
    %c2 = arith.constant 2 : index
    %c0_24 = arith.constant 0 : index
    %59 = vector.load %arg8[%c2, %c0_24] : memref<13x1280xf32, #tpu.memory_space<vmem>>, vector<1x384xf32>
    %60 = vector.broadcast %59 : vector<1x384xf32> to vector<64x384xf32>
    %61 = arith.addf %58, %60 : vector<64x384xf32>
    %62 = vector.extract_strided_slice %61 {offsets = [0, 0], sizes = [64, 128], strides = [1, 1]} : vector<64x384xf32> to vector<64x128xf32>
    %63 = arith.negf %62 : vector<64x128xf32>
    %64 = math.exp %63 : vector<64x128xf32>
    %cst_25 = arith.constant 1.000000e+00 : f32
    %65 = vector.broadcast %cst_25 : f32 to vector<64x128xf32>
    %66 = arith.addf %65, %64 : vector<64x128xf32>
    %67 = arith.divf %65, %66 : vector<64x128xf32>
    %68 = vector.extract_strided_slice %61 {offsets = [0, 128], sizes = [64, 128], strides = [1, 1]} : vector<64x384xf32> to vector<64x128xf32>
    %69 = math.tanh %68 : vector<64x128xf32>
    %70 = vector.extract_strided_slice %61 {offsets = [0, 256], sizes = [64, 128], strides = [1, 1]} : vector<64x384xf32> to vector<64x128xf32>
    %71 = arith.negf %70 : vector<64x128xf32>
    %72 = math.exp %71 : vector<64x128xf32>
    %cst_26 = arith.constant 1.000000e+00 : f32
    %73 = vector.broadcast %cst_26 : f32 to vector<64x128xf32>
    %74 = arith.addf %73, %72 : vector<64x128xf32>
    %75 = arith.divf %73, %74 : vector<64x128xf32>
    %76 = arith.mulf %67, %69 : vector<64x128xf32>
    %77 = math.tanh %76 : vector<64x128xf32>
    %78 = arith.mulf %75, %77 : vector<64x128xf32>
    %c0_27 = arith.constant 0 : index
    %c384 = arith.constant 384 : index
    %79 = vector.load %arg4[%c0_27, %c384] : memref<256x640xf32, #tpu.memory_space<vmem>>, vector<256x128xf32>
    %cst_28 = arith.constant dense<0.000000e+00> : vector<64x128xf32>
    %80 = tpu.matmul %56, %79, %cst_28 {dimension_numbers = #tpu.dot_dimension_numbers<[1], [0], [0], [1], [0, 0, 1, 1], [], []>} : vector<64x256xf32>, vector<256x128xf32>, vector<64x128xf32> -> vector<64x128xf32>
    %c4 = arith.constant 4 : index
    %c0_29 = arith.constant 0 : index
    %81 = vector.load %arg8[%c4, %c0_29] : memref<13x1280xf32, #tpu.memory_space<vmem>>, vector<1x128xf32>
    %82 = vector.broadcast %81 : vector<1x128xf32> to vector<64x128xf32>
    %83 = arith.addf %80, %82 : vector<64x128xf32>
    %cst_30 = arith.constant 0.000000e+00 : f32
    %84 = vector.broadcast %cst_30 : f32 to vector<64x128xf32>
    %85 = arith.maximumf %83, %84 : vector<64x128xf32>
    %c0_31 = arith.constant 0 : index
    %c1024 = arith.constant 1024 : index
    %86 = vector.load %arg5[%c0_31, %c1024] : memref<128x1088xf32, #tpu.memory_space<vmem>>, vector<128x64xf32>
    %cst_32 = arith.constant dense<0.000000e+00> : vector<64x64xf32>
    %87 = tpu.matmul %85, %86, %cst_32 {dimension_numbers = #tpu.dot_dimension_numbers<[1], [0], [0], [1], [0, 0, 1, 1], [], []>} : vector<64x128xf32>, vector<128x64xf32>, vector<64x64xf32> -> vector<64x64xf32>
    %c5 = arith.constant 5 : index
    %c0_33 = arith.constant 0 : index
    %88 = vector.load %arg8[%c5, %c0_33] : memref<13x1280xf32, #tpu.memory_space<vmem>>, vector<1x64xf32>
    %89 = vector.broadcast %88 : vector<1x64xf32> to vector<64x64xf32>
    %90 = arith.addf %87, %89 : vector<64x64xf32>
    %c6 = arith.constant 6 : index
    %c0_34 = arith.constant 0 : index
    %91 = vector.load %arg8[%c6, %c0_34] : memref<13x1280xf32, #tpu.memory_space<vmem>>, vector<1x512xf32>
    %92 = vector.broadcast %1 : vector<64x1xf32> to vector<64x512xf32>
    %93 = vector.broadcast %91 : vector<1x512xf32> to vector<64x512xf32>
    %94 = arith.mulf %92, %93 : vector<64x512xf32>
    %c7 = arith.constant 7 : index
    %c0_35 = arith.constant 0 : index
    %95 = vector.load %arg8[%c7, %c0_35] : memref<13x1280xf32, #tpu.memory_space<vmem>>, vector<1x512xf32>
    %96 = vector.broadcast %95 : vector<1x512xf32> to vector<64x512xf32>
    %97 = arith.addf %94, %96 : vector<64x512xf32>
    %cst_36 = arith.constant 0.000000e+00 : f32
    %98 = vector.broadcast %cst_36 : f32 to vector<64x512xf32>
    %99 = arith.maximumf %97, %98 : vector<64x512xf32>
    %c0_37 = arith.constant 0 : index
    %c512 = arith.constant 512 : index
    %100 = vector.load %arg6[%c0_37, %c512] : memref<512x576xf32, #tpu.memory_space<vmem>>, vector<512x64xf32>
    %cst_38 = arith.constant dense<0.000000e+00> : vector<64x64xf32>
    %101 = tpu.matmul %99, %100, %cst_38 {dimension_numbers = #tpu.dot_dimension_numbers<[1], [0], [0], [1], [0, 0, 1, 1], [], []>} : vector<64x512xf32>, vector<512x64xf32>, vector<64x64xf32> -> vector<64x64xf32>
    %c8 = arith.constant 8 : index
    %c0_39 = arith.constant 0 : index
    %102 = vector.load %arg8[%c8, %c0_39] : memref<13x1280xf32, #tpu.memory_space<vmem>>, vector<1x64xf32>
    %103 = vector.broadcast %102 : vector<1x64xf32> to vector<64x64xf32>
    %104 = arith.addf %101, %103 : vector<64x64xf32>
    %c0_40 = arith.constant 0 : index
    %c384_41 = arith.constant 384 : index
    %105 = vector.load %arg5[%c0_40, %c384_41] : memref<128x1088xf32, #tpu.memory_space<vmem>>, vector<128x512xf32>
    %cst_42 = arith.constant dense<0.000000e+00> : vector<64x512xf32>
    %106 = tpu.matmul %78, %105, %cst_42 {dimension_numbers = #tpu.dot_dimension_numbers<[1], [0], [0], [1], [0, 0, 1, 1], [], []>} : vector<64x128xf32>, vector<128x512xf32>, vector<64x512xf32> -> vector<64x512xf32>
    %c0_43 = arith.constant 0 : index
    %c0_44 = arith.constant 0 : index
    %107 = vector.load %arg7[%c0_43, %c0_44] : memref<64x1024xf32, #tpu.memory_space<vmem>>, vector<64x512xf32>
    %cst_45 = arith.constant dense<0.000000e+00> : vector<64x512xf32>
    %108 = tpu.matmul %104, %107, %cst_45 {dimension_numbers = #tpu.dot_dimension_numbers<[1], [0], [0], [1], [0, 0, 1, 1], [], []>} : vector<64x64xf32>, vector<64x512xf32>, vector<64x512xf32> -> vector<64x512xf32>
    %109 = arith.addf %106, %108 : vector<64x512xf32>
    %c0_46 = arith.constant 0 : index
    %c512_47 = arith.constant 512 : index
    %110 = vector.load %arg7[%c0_46, %c512_47] : memref<64x1024xf32, #tpu.memory_space<vmem>>, vector<64x512xf32>
    %cst_48 = arith.constant dense<0.000000e+00> : vector<64x512xf32>
    %111 = tpu.matmul %90, %110, %cst_48 {dimension_numbers = #tpu.dot_dimension_numbers<[1], [0], [0], [1], [0, 0, 1, 1], [], []>} : vector<64x64xf32>, vector<64x512xf32>, vector<64x512xf32> -> vector<64x512xf32>
    %112 = arith.addf %109, %111 : vector<64x512xf32>
    %c9 = arith.constant 9 : index
    %c0_49 = arith.constant 0 : index
    %113 = vector.load %arg8[%c9, %c0_49] : memref<13x1280xf32, #tpu.memory_space<vmem>>, vector<1x512xf32>
    %114 = vector.broadcast %113 : vector<1x512xf32> to vector<64x512xf32>
    %115 = arith.addf %112, %114 : vector<64x512xf32>
    %cst_50 = arith.constant 0.000000e+00 : f32
    %116 = vector.broadcast %cst_50 : f32 to vector<64x512xf32>
    %117 = arith.maximumf %115, %116 : vector<64x512xf32>
    %c0_51 = arith.constant 0 : index
    %c256 = arith.constant 256 : index
    %118 = vector.load %arg6[%c0_51, %c256] : memref<512x576xf32, #tpu.memory_space<vmem>>, vector<512x256xf32>
    %cst_52 = arith.constant dense<0.000000e+00> : vector<64x256xf32>
    %119 = tpu.matmul %117, %118, %cst_52 {dimension_numbers = #tpu.dot_dimension_numbers<[1], [0], [0], [1], [0, 0, 1, 1], [], []>} : vector<64x512xf32>, vector<512x256xf32>, vector<64x256xf32> -> vector<64x256xf32>
    %c10 = arith.constant 10 : index
    %c0_53 = arith.constant 0 : index
    %120 = vector.load %arg8[%c10, %c0_53] : memref<13x1280xf32, #tpu.memory_space<vmem>>, vector<1x256xf32>
    %121 = vector.broadcast %120 : vector<1x256xf32> to vector<64x256xf32>
    %122 = arith.addf %119, %121 : vector<64x256xf32>
    %cst_54 = arith.constant 0.000000e+00 : f32
    %123 = vector.broadcast %cst_54 : f32 to vector<64x256xf32>
    %124 = arith.maximumf %122, %123 : vector<64x256xf32>
    %c0_55 = arith.constant 0 : index
    %c512_56 = arith.constant 512 : index
    %125 = vector.load %arg4[%c0_55, %c512_56] : memref<256x640xf32, #tpu.memory_space<vmem>>, vector<256x128xf32>
    %cst_57 = arith.constant dense<0.000000e+00> : vector<64x128xf32>
    %126 = tpu.matmul %124, %125, %cst_57 {dimension_numbers = #tpu.dot_dimension_numbers<[1], [0], [0], [1], [0, 0, 1, 1], [], []>} : vector<64x256xf32>, vector<256x128xf32>, vector<64x128xf32> -> vector<64x128xf32>
    %c11 = arith.constant 11 : index
    %c0_58 = arith.constant 0 : index
    %127 = vector.load %arg8[%c11, %c0_58] : memref<13x1280xf32, #tpu.memory_space<vmem>>, vector<1x128xf32>
    %128 = vector.broadcast %127 : vector<1x128xf32> to vector<64x128xf32>
    %129 = arith.addf %126, %128 : vector<64x128xf32>
    %cst_59 = arith.constant 0.000000e+00 : f32
    %130 = vector.broadcast %cst_59 : f32 to vector<64x128xf32>
    %131 = arith.maximumf %129, %130 : vector<64x128xf32>
    %c0_60 = arith.constant 0 : index
    %c896 = arith.constant 896 : index
    %132 = vector.load %arg5[%c0_60, %c896] : memref<128x1088xf32, #tpu.memory_space<vmem>>, vector<128x128xf32>
    %cst_61 = arith.constant dense<0.000000e+00> : vector<64x128xf32>
    %133 = tpu.matmul %131, %132, %cst_61 {dimension_numbers = #tpu.dot_dimension_numbers<[1], [0], [0], [1], [0, 0, 1, 1], [], []>} : vector<64x128xf32>, vector<128x128xf32>, vector<64x128xf32> -> vector<64x128xf32>
    %c12 = arith.constant 12 : index
    %c0_62 = arith.constant 0 : index
    %134 = vector.load %arg8[%c12, %c0_62] : memref<13x1280xf32, #tpu.memory_space<vmem>>, vector<1x128xf32>
    %135 = vector.broadcast %134 : vector<1x128xf32> to vector<64x128xf32>
    %136 = arith.addf %133, %135 : vector<64x128xf32>
    %c0_63 = arith.constant 0 : index
    %c0_64 = arith.constant 0 : index
    %137 = vector.load %arg9[%c0_63, %c0_64] : memref<64x128xf32, #tpu.memory_space<vmem>>, vector<64x128xf32>
    tpu.vector_store %arg9[%c0_63, %c0_64], %136 {strides = array<i32>} : memref<64x128xf32, #tpu.memory_space<vmem>>, vector<64x128xf32>,
    return
  }
  func.func @transform_0(%arg0: i32) -> (i32, i32) {
    %c0_i32 = arith.constant 0 : i32
    %c0_i32_0 = arith.constant 0 : i32
    return %arg0, %c0_i32 : i32, i32
  }
  func.func @transform_1(%arg0: i32) -> (i32, i32) {
    %c0_i32 = arith.constant 0 : i32
    %c0_i32_0 = arith.constant 0 : i32
    return %arg0, %c0_i32 : i32, i32
  }
  func.func @transform_2(%arg0: i32) -> (i32, i32) {
    %c0_i32 = arith.constant 0 : i32
    %c0_i32_0 = arith.constant 0 : i32
    %c0_i32_1 = arith.constant 0 : i32
    return %c0_i32, %c0_i32_0 : i32, i32
  }
  func.func @transform_3(%arg0: i32) -> (i32, i32) {
    %c0_i32 = arith.constant 0 : i32
    %c0_i32_0 = arith.constant 0 : i32
    %c0_i32_1 = arith.constant 0 : i32
    return %c0_i32, %c0_i32_0 : i32, i32
  }
  func.func @transform_4(%arg0: i32) -> (i32, i32) {
    %c0_i32 = arith.constant 0 : i32
    %c0_i32_0 = arith.constant 0 : i32
    %c0_i32_1 = arith.constant 0 : i32
    return %c0_i32, %c0_i32_0 : i32, i32
  }
  func.func @transform_5(%arg0: i32) -> (i32, i32) {
    %c0_i32 = arith.constant 0 : i32
    %c0_i32_0 = arith.constant 0 : i32
    %c0_i32_1 = arith.constant 0 : i32
    return %c0_i32, %c0_i32_0 : i32, i32
  }
  func.func @transform_6(%arg0: i32) -> (i32, i32) {
    %c0_i32 = arith.constant 0 : i32
    %c0_i32_0 = arith.constant 0 : i32
    %c0_i32_1 = arith.constant 0 : i32
    return %c0_i32, %c0_i32_0 : i32, i32
  }
  func.func @transform_7(%arg0: i32) -> (i32, i32) {
    %c0_i32 = arith.constant 0 : i32
    %c0_i32_0 = arith.constant 0 : i32
    %c0_i32_1 = arith.constant 0 : i32
    return %c0_i32, %c0_i32_0 : i32, i32
  }
  func.func @transform_8(%arg0: i32) -> (i32, i32) {
    %c0_i32 = arith.constant 0 : i32
    %c0_i32_0 = arith.constant 0 : i32
    return %arg0, %c0_i32 : i32, i32
  }
}

</mosaic_0001>

<llo_original>
// kernel: tpu_custom_call.1
$region0: #{tpu_custom_call.1}
  #allocation0 [shape = 'u32[]', space=smem, size = 0x4, offset = 0x4, fixed_abs, tag = 'smem constant byte address 0x4 - core index']
  #allocation1 [shape = 'u32[144,128]{1,0:T(1,128)}', space=vmem, size = 0x12000, scoped, tag = 'internal scratch']
  %s0 = inlined_call_operand.vmem [shape: f32[64,10], index: 0, kind: input, shape index: {}]
  %s1 = inlined_call_operand.vmem [shape: f32[64,1], index: 1, kind: input, shape index: {}]
  %s2 = inlined_call_operand.vmem [shape: f32[10,1280], index: 2, kind: input, shape index: {}]
  %s3 = inlined_call_operand.vmem [shape: f32[256,640], index: 3, kind: input, shape index: {}]
  %s4 = inlined_call_operand.vmem [shape: f32[128,1088], index: 4, kind: input, shape index: {}]
  %s5 = inlined_call_operand.vmem [shape: f32[512,576], index: 5, kind: input, shape index: {}]
  %s6 = inlined_call_operand.vmem [shape: f32[64,1024], index: 6, kind: input, shape index: {}]
  %s7 = inlined_call_operand.vmem [shape: f32[13,1280], index: 7, kind: input, shape index: {}]
  %s8 = inlined_call_operand.hbm [shape: f32[64,128], index: 8, kind: output, shape index: {}]
  %s9 = sld [smem:[#allocation0]]
  $region42: #{tpu_custom_call.1} parent=0
    _
  %s11 = ssub.s32 1, %s9
  %s12 = scalar_select 0, %s11, %s9
  $region1: #{tpu_custom_call.1} parent=0
    #allocation2 [shape = 'u8[32768]{0}', space=vmem, size = 0x8000, scoped, tag = 'output window, operand 0, single buffered']
    #allocation3 [shape = 's32[1]{0}', space=sflag, size = 0x4, scoped, tag = 'scoped memory for tpu_custom_call.1']
    %13 = vsyncpa [#allocation3], 0
    // Predicated region
    $region2: #{tpu_custom_call.1} parent=1 // pred_check
      _
    $region3: #{tpu_custom_call.1} parent=1 // pred_check_branch
      %15 = sbr.rel (0) target = $region5
    $region4: #{tpu_custom_call.1} parent=1 // pred_region
      _
    $region5: #{tpu_custom_call.1} parent=1 // pred_fallthru
      _
    // Predicated region
    $region6: #{tpu_custom_call.1} parent=1 // pred_check
      _
    $region7: #{tpu_custom_call.1} parent=1 // pred_check_branch
      %17 = sbr.rel (0) target = $region9
    $region8: #{tpu_custom_call.1} parent=1 // pred_region
      _
    $region9: #{tpu_custom_call.1} parent=1 // pred_fallthru
      _
    // Predicated region
    $region10: #{tpu_custom_call.1} parent=1 // pred_check
      _
    $region11: #{tpu_custom_call.1} parent=1 // pred_check_branch
      %19 = sbr.rel (0) target = $region13
    $region12: #{tpu_custom_call.1} parent=1 // pred_region
      _
    $region13: #{tpu_custom_call.1} parent=1 // pred_fallthru
      _
    // Predicated region
    $region14: #{tpu_custom_call.1} parent=1 // pred_check
      _
    $region15: #{tpu_custom_call.1} parent=1 // pred_check_branch
      %21 = sbr.rel (0) target = $region17
    $region16: #{tpu_custom_call.1} parent=1 // pred_region
      _
    $region17: #{tpu_custom_call.1} parent=1 // pred_fallthru
      _
    // Predicated region
    $region18: #{tpu_custom_call.1} parent=1 // pred_check
      _
    $region19: #{tpu_custom_call.1} parent=1 // pred_check_branch
      %23 = sbr.rel (0) target = $region21
    $region20: #{tpu_custom_call.1} parent=1 // pred_region
      _
    $region21: #{tpu_custom_call.1} parent=1 // pred_fallthru
      _
    // Predicated region
    $region22: #{tpu_custom_call.1} parent=1 // pred_check
      _
    $region23: #{tpu_custom_call.1} parent=1 // pred_check_branch
      %25 = sbr.rel (0) target = $region25
    $region24: #{tpu_custom_call.1} parent=1 // pred_region
      _
    $region25: #{tpu_custom_call.1} parent=1 // pred_fallthru
      _
    // Predicated region
    $region26: #{tpu_custom_call.1} parent=1 // pred_check
      _
    $region27: #{tpu_custom_call.1} parent=1 // pred_check_branch
      %27 = sbr.rel (0) target = $region29
    $region28: #{tpu_custom_call.1} parent=1 // pred_region
      _
    $region29: #{tpu_custom_call.1} parent=1 // pred_fallthru
      _
    // Predicated region
    $region30: #{tpu_custom_call.1} parent=1 // pred_check
      _
    $region31: #{tpu_custom_call.1} parent=1 // pred_check_branch
      %29 = sbr.rel (0) target = $region33
    $region32: #{tpu_custom_call.1} parent=1 // pred_region
      _
    $region33: #{tpu_custom_call.1} parent=1 // pred_fallthru
      _
    %v30 = vld [vmem:[%s0] sm:$0xff]
    %v31 = vld [vmem:[%s0 + $0x8] sm:$0xff]
    %v32 = vld [vmem:[%s0 + $0x10] sm:$0xff]
    %v33 = vld [vmem:[%s0 + $0x18] sm:$0xff]
    %v34 = vld [vmem:[%s0 + $0x20] sm:$0xff]
    %v35 = vld [vmem:[%s0 + $0x28] sm:$0xff]
    %v36 = vld [vmem:[%s0 + $0x30] sm:$0xff]
    %v37 = vld [vmem:[%s0 + $0x38] sm:$0xff]
    %v38 = vld [vmem:[%s1] sm:$0xff]
    %v39 = vld [vmem:[%s1 + $0x8] sm:$0xff]
    %v40 = vld [vmem:[%s1 + $0x10] sm:$0xff]
    %v41 = vld [vmem:[%s1 + $0x18] sm:$0xff]
    %v42 = vld [vmem:[%s1 + $0x20] sm:$0xff]
    %v43 = vld [vmem:[%s1 + $0x28] sm:$0xff]
    %v44 = vld [vmem:[%s1 + $0x30] sm:$0xff]
    %v45 = vld [vmem:[%s1 + $0x38] sm:$0xff]
    %v46 = vld [vmem:[%s2] sm:$0xff]
    %v47 = vld [vmem:[%s2 + $0x8] sm:$0xff]
    %v48 = vld [vmem:[%s2 + $0x10] sm:$0xff]
    %v49 = vld [vmem:[%s2 + $0x18] sm:$0xff]
    %v50 = vld [vmem:[%s2 + $0x20] sm:$0xff]
    %v51 = vld [vmem:[%s2 + $0x28] sm:$0xff]
    %v52 = vld [vmem:[%s2 + $0x30] sm:$0xff]
    %v53 = vld [vmem:[%s2 + $0x38] sm:$0xff]
    %v54 = vld [vmem:[%s2 + $0x40] sm:$0xff]
    %v55 = vld [vmem:[%s2 + $0x48] sm:$0xff]
    %v56 = vld [vmem:[%s2 + $0x50] sm:$0x3]
    %v57 = vld [vmem:[%s2 + $0x58] sm:$0x3]
    %v58 = vld [vmem:[%s2 + $0x60] sm:$0x3]
    %v59 = vld [vmem:[%s2 + $0x68] sm:$0x3]
    %v60 = vld [vmem:[%s2 + $0x70] sm:$0x3]
    %v61 = vld [vmem:[%s2 + $0x78] sm:$0x3]
    %v62 = vld [vmem:[%s2 + $0x80] sm:$0x3]
    %v63 = vld [vmem:[%s2 + $0x88] sm:$0x3]
    %v64 = vld [vmem:[%s2 + $0x90] sm:$0x3]
    %v65 = vld [vmem:[%s2 + $0x98] sm:$0x3]
    %v66 = vld [vmem:[%s7] ss:$8 sm:$0xf]
    %v67 = vld [vmem:[%s7] ss:$8 sm:$0xf0]
    %v68 = vor.u32 %v66, %v67
    %s69 = scalar_lea.vmem %s7, 64
    %v70 = vld [vmem:[%s69] ss:$8 sm:$0x3]
    %v73 = vlaneseq
    %v74 = vshrl.u32 %v73, 7
    %v75 = vsub.s32 0, %v74
    %v76 = vrot.slane %v68, %v75
    %v77 = vlaneseq
    %v78 = vshrl.u32 %v77, 7
    %v79 = vsub.s32 1, %v78
    %v80 = vrot.slane %v68, %v79
    %v81 = vlaneseq
    %v82 = vshrl.u32 %v81, 7
    %v83 = vsub.s32 2, %v82
    %v84 = vrot.slane %v68, %v83
    %v85 = vlaneseq
    %v86 = vshrl.u32 %v85, 7
    %v87 = vsub.s32 3, %v86
    %v88 = vrot.slane %v68, %v87
    %v89 = vlaneseq
    %v90 = vshrl.u32 %v89, 7
    %v91 = vsub.s32 4, %v90
    %v92 = vrot.slane %v68, %v91
    %v93 = vlaneseq
    %v94 = vshrl.u32 %v93, 7
    %v95 = vsub.s32 5, %v94
    %v96 = vrot.slane %v68, %v95
    %v97 = vlaneseq
    %v98 = vshrl.u32 %v97, 7
    %v99 = vsub.s32 6, %v98
    %v100 = vrot.slane %v68, %v99
    %v101 = vlaneseq
    %v102 = vshrl.u32 %v101, 7
    %v103 = vsub.s32 7, %v102
    %v104 = vrot.slane %v68, %v103
    %v105 = vlaneseq
    %v106 = vshrl.u32 %v105, 7
    %v107 = vsub.s32 0, %v106
    %v108 = vrot.slane %v70, %v107
    %v109 = vlaneseq
    %v110 = vshrl.u32 %v109, 7
    %v111 = vsub.s32 1, %v110
    %v112 = vrot.slane %v70, %v111
    %vm123 = vcmask 80896
    %v125 = vsel %vm123, %v30, 0
    %v128 = vsel %vm123, %v31, 0
    %v131 = vsel %vm123, %v32, 0
    %v134 = vsel %vm123, %v33, 0
    %v137 = vsel %vm123, %v34, 0
    %v140 = vsel %vm123, %v35, 0
    %v143 = vsel %vm123, %v36, 0
    %v146 = vsel %vm123, %v37, 0
    %vm148 = vcmask 1041408
    %v150 = vsel %vm148, %v56, 0
    %v153 = vsel %vm148, %v57, 0
    %v156 = vsel %vm148, %v58, 0
    %v159 = vsel %vm148, %v59, 0
    %v162 = vsel %vm148, %v60, 0
    %v165 = vsel %vm148, %v61, 0
    %v168 = vsel %vm148, %v62, 0
    %v171 = vsel %vm148, %v63, 0
    %v174 = vsel %vm148, %v64, 0
    %v177 = vsel %vm148, %v65, 0
    %179 = vmatprep.subr.mxu0 %v47
    %180 = vmatpush1.msra.mxu0 %v46
    %181 = vmatprep.subr.mxu0 %v153
    %182 = vmatpush1.msra.mxu0 %v150
    %183 = vmatprep.subr.mxu0 0.0
    %184 = vmatpush1.msra.mxu0 0.0
    %185 = vmatprep.subr.mxu0 0.0
    %186 = vmatpush1.msra.mxu0 0.0
    %187 = vmatprep.subr.mxu0 0.0
    %188 = vmatpush1.msra.mxu0 0.0
    %189 = vmatprep.subr.mxu0 0.0
    %190 = vmatpush1.msra.mxu0 0.0
    %191 = vmatprep.subr.mxu0 0.0
    %192 = vmatpush1.msra.mxu0 0.0
    %193 = vmatprep.subr.mxu0 0.0
    %194 = vmatpush1.msra.mxu0 0.0
    %195 = vmatprep.subr.mxu0 0.0
    %196 = vmatpush1.msra.mxu0 0.0
    %197 = vmatprep.subr.mxu0 0.0
    %198 = vmatpush1.msra.mxu0 0.0
    %199 = vmatprep.subr.mxu0 0.0
    %200 = vmatpush1.msra.mxu0 0.0
    %201 = vmatprep.subr.mxu0 0.0
    %202 = vmatpush1.msra.mxu0 0.0
    %203 = vmatprep.subr.mxu0 0.0
    %204 = vmatpush1.msra.mxu0 0.0
    %205 = vmatprep.subr.mxu0 0.0
    %206 = vmatpush1.msra.mxu0 0.0
    %207 = vmatprep.subr.mxu0 0.0
    %208 = vmatpush1.msra.mxu0 0.0
    %209 = vmatprep.subr.mxu0 0.0
    %210 = vmatpush1.msra.mxu0 0.0
    %211 = vmatprep.subr.mxu0 0.0
    %212 = vmatpush1.msra.mxu0 0.0
    %213 = vmatprep.subr.mxu0 0.0
    %214 = vmatpush1.msra.mxu0 0.0
    %215 = vmatprep.subr.mxu0 0.0
    %216 = vmatpush1.msra.mxu0 0.0
    %217 = vmatprep.subr.mxu0 0.0
    %218 = vmatpush1.msra.mxu0 0.0
    %219 = vmatprep.subr.mxu0 0.0
    %220 = vmatpush1.msra.mxu0 0.0
    %221 = vmatprep.subr.mxu0 0.0
    %222 = vmatpush1.msra.mxu0 0.0
    %223 = vmatprep.subr.mxu0 0.0
    %224 = vmatpush1.msra.mxu0 0.0
    %225 = vmatprep.subr.mxu0 0.0
    %226 = vmatpush1.msra.mxu0 0.0
    %227 = vmatprep.subr.mxu0 0.0
    %228 = vmatpush1.msra.mxu0 0.0
    %229 = vmatprep.subr.mxu0 0.0
    %230 = vmatpush1.msra.mxu0 0.0
    %231 = vmatprep.subr.mxu0 0.0
    %232 = vmatpush1.msra.mxu0 0.0
    %233 = vmatprep.subr.mxu0 0.0
    %234 = vmatpush1.msra.mxu0 0.0
    %235 = vmatprep.subr.mxu0 0.0
    %236 = vmatpush1.msra.mxu0 0.0
    %237 = vmatprep.subr.mxu0 0.0
    %238 = vmatpush1.msra.mxu0 0.0
    %239 = vmatprep.subr.mxu0 0.0
    %240 = vmatpush1.msra.mxu0 0.0
    %241 = vmatprep.subr.mxu0 0.0
    %242 = vmatpush1.msra.mxu0 0.0
    %243 = vmatprep.mubr.f32.mxu0 0.0
    %244 = vmatmul.mubr.f32.gmra.mrb[0].mxu0 %v125
    %v245 = vpop.f32.mrb[0].mxu0
    %v246 = vadd.f32 %v76, %v245
    %v247 = vpop.f32.mrb[0].mxu0
    %v248 = vadd.f32 %v80, %v247
    %249 = vmatprep.mubr.f32.mxu0 0.0
    %250 = vmatmul.mubr.f32.gmra.mrb[0].mxu0 %v128
    %v251 = vpop.f32.mrb[0].mxu0
    %v252 = vadd.f32 %v76, %v251
    %v253 = vpop.f32.mrb[0].mxu0
    %v254 = vadd.f32 %v80, %v253
    %255 = vmatprep.mubr.f32.mxu0 0.0
    %256 = vmatmul.mubr.f32.gmra.mrb[0].mxu0 %v131
    %v257 = vpop.f32.mrb[0].mxu0
    %v258 = vadd.f32 %v76, %v257
    %v259 = vpop.f32.mrb[0].mxu0
    %v260 = vadd.f32 %v80, %v259
    %261 = vmatprep.mubr.f32.mxu0 0.0
    %262 = vmatmul.mubr.f32.gmra.mrb[0].mxu0 %v134
    %v263 = vpop.f32.mrb[0].mxu0
    %v264 = vadd.f32 %v76, %v263
    %v265 = vpop.f32.mrb[0].mxu0
    %v266 = vadd.f32 %v80, %v265
    %267 = vmatprep.mubr.f32.mxu0 0.0
    %268 = vmatmul.mubr.f32.gmra.mrb[0].mxu0 %v137
    %v269 = vpop.f32.mrb[0].mxu0
    %v270 = vadd.f32 %v76, %v269
    %v271 = vpop.f32.mrb[0].mxu0
    %v272 = vadd.f32 %v80, %v271
    %273 = vmatprep.mubr.f32.mxu0 0.0
    %274 = vmatmul.mubr.f32.gmra.mrb[0].mxu0 %v140
    %v275 = vpop.f32.mrb[0].mxu0
    %v276 = vadd.f32 %v76, %v275
    %v277 = vpop.f32.mrb[0].mxu0
    %v278 = vadd.f32 %v80, %v277
    %279 = vmatprep.mubr.f32.mxu0 0.0
    %280 = vmatmul.mubr.f32.gmra.mrb[0].mxu0 %v143
    %v281 = vpop.f32.mrb[0].mxu0
    %v282 = vadd.f32 %v76, %v281
    %v283 = vpop.f32.mrb[0].mxu0
    %v284 = vadd.f32 %v80, %v283
    %285 = vmatprep.mubr.f32.mxu0 0.0
    %286 = vmatmul.mubr.f32.gmra.mrb[0].mxu0 %v146
    %v287 = vpop.f32.mrb[0].mxu0
    %v288 = vadd.f32 %v76, %v287
    %v289 = vpop.f32.mrb[0].mxu0
    %v290 = vadd.f32 %v80, %v289
    %291 = vdwg.mxu0
    %292 = vmatprep.subr.mxu0 %v49
    %293 = vmatpush1.msra.mxu0 %v48
    %294 = vmatprep.subr.mxu0 %v159
    %295 = vmatpush1.msra.mxu0 %v156
    %296 = vmatprep.subr.mxu0 0.0
    %297 = vmatpush1.msra.mxu0 0.0
    %298 = vmatprep.subr.mxu0 0.0
    %299 = vmatpush1.msra.mxu0 0.0
    %300 = vmatprep.subr.mxu0 0.0
    %301 = vmatpush1.msra.mxu0 0.0
    %302 = vmatprep.subr.mxu0 0.0
    %303 = vmatpush1.msra.mxu0 0.0
    %304 = vmatprep.subr.mxu0 0.0
    %305 = vmatpush1.msra.mxu0 0.0
    %306 = vmatprep.subr.mxu0 0.0
    %307 = vmatpush1.msra.mxu0 0.0
    %308 = vmatprep.subr.mxu0 0.0
    %309 = vmatpush1.msra.mxu0 0.0
    %310 = vmatprep.subr.mxu0 0.0
    %311 = vmatpush1.msra.mxu0 0.0
    %312 = vmatprep.subr.mxu0 0.0
    %313 = vmatpush1.msra.mxu0 0.0
    %314 = vmatprep.subr.mxu0 0.0
    %315 = vmatpush1.msra.mxu0 0.0
    %316 = vmatprep.subr.mxu0 0.0
    %317 = vmatpush1.msra.mxu0 0.0
    %318 = vmatprep.subr.mxu0 0.0
    %319 = vmatpush1.msra.mxu0 0.0
    %320 = vmatprep.subr.mxu0 0.0
    %321 = vmatpush1.msra.mxu0 0.0
    %322 = vmatprep.subr.mxu0 0.0
    %323 = vmatpush1.msra.mxu0 0.0
    %324 = vmatprep.subr.mxu0 0.0
    %325 = vmatpush1.msra.mxu0 0.0
    %326 = vmatprep.subr.mxu0 0.0
    %327 = vmatpush1.msra.mxu0 0.0
    %328 = vmatprep.subr.mxu0 0.0
    %329 = vmatpush1.msra.mxu0 0.0
    %330 = vmatprep.subr.mxu0 0.0
    %331 = vmatpush1.msra.mxu0 0.0
    %332 = vmatprep.subr.mxu0 0.0
    %333 = vmatpush1.msra.mxu0 0.0
    %334 = vmatprep.subr.mxu0 0.0
    %335 = vmatpush1.msra.mxu0 0.0
    %336 = vmatprep.subr.mxu0 0.0
    %337 = vmatpush1.msra.mxu0 0.0
    %338 = vmatprep.subr.mxu0 0.0
    %339 = vmatpush1.msra.mxu0 0.0
    %340 = vmatprep.subr.mxu0 0.0
    %341 = vmatpush1.msra.mxu0 0.0
    %342 = vmatprep.subr.mxu0 0.0
    %343 = vmatpush1.msra.mxu0 0.0
    %344 = vmatprep.subr.mxu0 0.0
    %345 = vmatpush1.msra.mxu0 0.0
    %346 = vmatprep.subr.mxu0 0.0
    %347 = vmatpush1.msra.mxu0 0.0
    %348 = vmatprep.subr.mxu0 0.0
    %349 = vmatpush1.msra.mxu0 0.0
    %350 = vmatprep.subr.mxu0 0.0
    %351 = vmatpush1.msra.mxu0 0.0
    %352 = vmatprep.subr.mxu0 0.0
    %353 = vmatpush1.msra.mxu0 0.0
    %354 = vmatprep.subr.mxu0 0.0
    %355 = vmatpush1.msra.mxu0 0.0
    %356 = vmatprep.mubr.f32.mxu0 0.0
    %357 = vmatmul.mubr.f32.gmra.mrb[0].mxu0 %v125
    %v358 = vpop.f32.mrb[0].mxu0
    %v359 = vadd.f32 %v84, %v358
    %v360 = vpop.f32.mrb[0].mxu0
    %v361 = vadd.f32 %v88, %v360
    %362 = vmatprep.mubr.f32.mxu0 0.0
    %363 = vmatmul.mubr.f32.gmra.mrb[0].mxu0 %v128
    %v364 = vpop.f32.mrb[0].mxu0
    %v365 = vadd.f32 %v84, %v364
    %v366 = vpop.f32.mrb[0].mxu0
    %v367 = vadd.f32 %v88, %v366
    %368 = vmatprep.mubr.f32.mxu0 0.0
    %369 = vmatmul.mubr.f32.gmra.mrb[0].mxu0 %v131
    %v370 = vpop.f32.mrb[0].mxu0
    %v371 = vadd.f32 %v84, %v370
    %v372 = vpop.f32.mrb[0].mxu0
    %v373 = vadd.f32 %v88, %v372
    %374 = vmatprep.mubr.f32.mxu0 0.0
    %375 = vmatmul.mubr.f32.gmra.mrb[0].mxu0 %v134
    %v376 = vpop.f32.mrb[0].mxu0
    %v377 = vadd.f32 %v84, %v376
    %v378 = vpop.f32.mrb[0].mxu0
    %v379 = vadd.f32 %v88, %v378
    %380 = vmatprep.mubr.f32.mxu0 0.0
    %381 = vmatmul.mubr.f32.gmra.mrb[0].mxu0 %v137
    %v382 = vpop.f32.mrb[0].mxu0
    %v383 = vadd.f32 %v84, %v382
    %v384 = vpop.f32.mrb[0].mxu0
    %v385 = vadd.f32 %v88, %v384
    %386 = vmatprep.mubr.f32.mxu0 0.0
    %387 = vmatmul.mubr.f32.gmra.mrb[0].mxu0 %v140
    %v388 = vpop.f32.mrb[0].mxu0
    %v389 = vadd.f32 %v84, %v388
    %v390 = vpop.f32.mrb[0].mxu0
    %v391 = vadd.f32 %v88, %v390
    %392 = vmatprep.mubr.f32.mxu0 0.0
    %393 = vmatmul.mubr.f32.gmra.mrb[0].mxu0 %v143
    %v394 = vpop.f32.mrb[0].mxu0
    %v395 = vadd.f32 %v84, %v394
    %v396 = vpop.f32.mrb[0].mxu0
    %v397 = vadd.f32 %v88, %v396
    %398 = vmatprep.mubr.f32.mxu0 0.0
    %399 = vmatmul.mubr.f32.gmra.mrb[0].mxu0 %v146
    %v400 = vpop.f32.mrb[0].mxu0
    %v401 = vadd.f32 %v84, %v400
    %v402 = vpop.f32.mrb[0].mxu0
    %v403 = vadd.f32 %v88, %v402
    %404 = vdwg.mxu0
    %405 = vmatprep.subr.mxu0 %v51
    %406 = vmatpush1.msra.mxu0 %v50
    %407 = vmatprep.subr.mxu0 %v165
    %408 = vmatpush1.msra.mxu0 %v162
    %409 = vmatprep.subr.mxu0 0.0
    %410 = vmatpush1.msra.mxu0 0.0
    %411 = vmatprep.subr.mxu0 0.0
    %412 = vmatpush1.msra.mxu0 0.0
    %413 = vmatprep.subr.mxu0 0.0
    %414 = vmatpush1.msra.mxu0 0.0
    %415 = vmatprep.subr.mxu0 0.0
    %416 = vmatpush1.msra.mxu0 0.0
    %417 = vmatprep.subr.mxu0 0.0
    %418 = vmatpush1.msra.mxu0 0.0
    %419 = vmatprep.subr.mxu0 0.0
    %420 = vmatpush1.msra.mxu0 0.0
    %421 = vmatprep.subr.mxu0 0.0
    %422 = vmatpush1.msra.mxu0 0.0
    %423 = vmatprep.subr.mxu0 0.0
    %424 = vmatpush1.msra.mxu0 0.0
    %425 = vmatprep.subr.mxu0 0.0
    %426 = vmatpush1.msra.mxu0 0.0
    %427 = vmatprep.subr.mxu0 0.0
    %428 = vmatpush1.msra.mxu0 0.0
    %429 = vmatprep.subr.mxu0 0.0
    %430 = vmatpush1.msra.mxu0 0.0
    %431 = vmatprep.subr.mxu0 0.0
    %432 = vmatpush1.msra.mxu0 0.0
    %433 = vmatprep.subr.mxu0 0.0
    %434 = vmatpush1.msra.mxu0 0.0
    %435 = vmatprep.subr.mxu0 0.0
    %436 = vmatpush1.msra.mxu0 0.0
    %437 = vmatprep.subr.mxu0 0.0
    %438 = vmatpush1.msra.mxu0 0.0
    %439 = vmatprep.subr.mxu0 0.0
    %440 = vmatpush1.msra.mxu0 0.0
    %441 = vmatprep.subr.mxu0 0.0
    %442 = vmatpush1.msra.mxu0 0.0
    %443 = vmatprep.subr.mxu0 0.0
    %444 = vmatpush1.msra.mxu0 0.0
    %445 = vmatprep.subr.mxu0 0.0
    %446 = vmatpush1.msra.mxu0 0.0
    %447 = vmatprep.subr.mxu0 0.0
    %448 = vmatpush1.msra.mxu0 0.0
    %449 = vmatprep.subr.mxu0 0.0
    %450 = vmatpush1.msra.mxu0 0.0
    %451 = vmatprep.subr.mxu0 0.0
    %452 = vmatpush1.msra.mxu0 0.0
    %453 = vmatprep.subr.mxu0 0.0
    %454 = vmatpush1.msra.mxu0 0.0
    %455 = vmatprep.subr.mxu0 0.0
    %456 = vmatpush1.msra.mxu0 0.0
    %457 = vmatprep.subr.mxu0 0.0
    %458 = vmatpush1.msra.mxu0 0.0
    %459 = vmatprep.subr.mxu0 0.0
    %460 = vmatpush1.msra.mxu0 0.0
    %461 = vmatprep.subr.mxu0 0.0
    %462 = vmatpush1.msra.mxu0 0.0
    %463 = vmatprep.subr.mxu0 0.0
    %464 = vmatpush1.msra.mxu0 0.0
    %465 = vmatprep.subr.mxu0 0.0
    %466 = vmatpush1.msra.mxu0 0.0
    %467 = vmatprep.subr.mxu0 0.0
    %468 = vmatpush1.msra.mxu0 0.0
    %469 = vmatprep.mubr.f32.mxu0 0.0
    %470 = vmatmul.mubr.f32.gmra.mrb[0].mxu0 %v125
    %v471 = vpop.f32.mrb[0].mxu0
    %v472 = vadd.f32 %v92, %v471
    %v473 = vpop.f32.mrb[0].mxu0
    %v474 = vadd.f32 %v96, %v473
    %475 = vmatprep.mubr.f32.mxu0 0.0
    %476 = vmatmul.mubr.f32.gmra.mrb[0].mxu0 %v128
    %v477 = vpop.f32.mrb[0].mxu0
    %v478 = vadd.f32 %v92, %v477
    %v479 = vpop.f32.mrb[0].mxu0
    %v480 = vadd.f32 %v96, %v479
    %481 = vmatprep.mubr.f32.mxu0 0.0
    %482 = vmatmul.mubr.f32.gmra.mrb[0].mxu0 %v131
    %v483 = vpop.f32.mrb[0].mxu0
    %v484 = vadd.f32 %v92, %v483
    %v485 = vpop.f32.mrb[0].mxu0
    %v486 = vadd.f32 %v96, %v485
    %487 = vmatprep.mubr.f32.mxu0 0.0
    %488 = vmatmul.mubr.f32.gmra.mrb[0].mxu0 %v134
    %v489 = vpop.f32.mrb[0].mxu0
    %v490 = vadd.f32 %v92, %v489
    %v491 = vpop.f32.mrb[0].mxu0
    %v492 = vadd.f32 %v96, %v491
    %493 = vmatprep.mubr.f32.mxu0 0.0
    %494 = vmatmul.mubr.f32.gmra.mrb[0].mxu0 %v137
    %v495 = vpop.f32.mrb[0].mxu0
    %v496 = vadd.f32 %v92, %v495
    %v497 = vpop.f32.mrb[0].mxu0
    %v498 = vadd.f32 %v96, %v497
    %499 = vmatprep.mubr.f32.mxu0 0.0
    %500 = vmatmul.mubr.f32.gmra.mrb[0].mxu0 %v140
    %v501 = vpop.f32.mrb[0].mxu0
    %v502 = vadd.f32 %v92, %v501
    %v503 = vpop.f32.mrb[0].mxu0
    %v504 = vadd.f32 %v96, %v503
    %505 = vmatprep.mubr.f32.mxu0 0.0
    %506 = vmatmul.mubr.f32.gmra.mrb[0].mxu0 %v143
    %v507 = vpop.f32.mrb[0].mxu0
    %v508 = vadd.f32 %v92, %v507
    %v509 = vpop.f32.mrb[0].mxu0
    %v510 = vadd.f32 %v96, %v509
    %511 = vmatprep.mubr.f32.mxu0 0.0
    %512 = vmatmul.mubr.f32.gmra.mrb[0].mxu0 %v146
    %v513 = vpop.f32.mrb[0].mxu0
    %v514 = vadd.f32 %v92, %v513
    %v515 = vpop.f32.mrb[0].mxu0
    %v516 = vadd.f32 %v96, %v515
    %517 = vdwg.mxu0
    %518 = vmatprep.subr.mxu0 %v53
    %519 = vmatpush1.msra.mxu0 %v52
    %520 = vmatprep.subr.mxu0 %v171
    %521 = vmatpush1.msra.mxu0 %v168
    %522 = vmatprep.subr.mxu0 0.0
    %523 = vmatpush1.msra.mxu0 0.0
    %524 = vmatprep.subr.mxu0 0.0
    %525 = vmatpush1.msra.mxu0 0.0
    %526 = vmatprep.subr.mxu0 0.0
    %527 = vmatpush1.msra.mxu0 0.0
    %528 = vmatprep.subr.mxu0 0.0
    %529 = vmatpush1.msra.mxu0 0.0
    %530 = vmatprep.subr.mxu0 0.0
    %531 = vmatpush1.msra.mxu0 0.0
    %532 = vmatprep.subr.mxu0 0.0
    %533 = vmatpush1.msra.mxu0 0.0
    %534 = vmatprep.subr.mxu0 0.0
    %535 = vmatpush1.msra.mxu0 0.0
    %536 = vmatprep.subr.mxu0 0.0
    %537 = vmatpush1.msra.mxu0 0.0
    %538 = vmatprep.subr.mxu0 0.0
    %539 = vmatpush1.msra.mxu0 0.0
    %540 = vmatprep.subr.mxu0 0.0
    %541 = vmatpush1.msra.mxu0 0.0
    %542 = vmatprep.subr.mxu0 0.0
    %543 = vmatpush1.msra.mxu0 0.0
    %544 = vmatprep.subr.mxu0 0.0
    %545 = vmatpush1.msra.mxu0 0.0
    %546 = vmatprep.subr.mxu0 0.0
    %547 = vmatpush1.msra.mxu0 0.0
    %548 = vmatprep.subr.mxu0 0.0
    %549 = vmatpush1.msra.mxu0 0.0
    %550 = vmatprep.subr.mxu0 0.0
    %551 = vmatpush1.msra.mxu0 0.0
    %552 = vmatprep.subr.mxu0 0.0
    %553 = vmatpush1.msra.mxu0 0.0
    %554 = vmatprep.subr.mxu0 0.0
    %555 = vmatpush1.msra.mxu0 0.0
    %556 = vmatprep.subr.mxu0 0.0
    %557 = vmatpush1.msra.mxu0 0.0
    %558 = vmatprep.subr.mxu0 0.0
    %559 = vmatpush1.msra.mxu0 0.0
    %560 = vmatprep.subr.mxu0 0.0
    %561 = vmatpush1.msra.mxu0 0.0
    %562 = vmatprep.subr.mxu0 0.0
    %563 = vmatpush1.msra.mxu0 0.0
    %564 = vmatprep.subr.mxu0 0.0
    %565 = vmatpush1.msra.mxu0 0.0
    %566 = vmatprep.subr.mxu0 0.0
    %567 = vmatpush1.msra.mxu0 0.0
    %568 = vmatprep.subr.mxu0 0.0
    %569 = vmatpush1.msra.mxu0 0.0
    %570 = vmatprep.subr.mxu0 0.0
    %571 = vmatpush1.msra.mxu0 0.0
    %572 = vmatprep.subr.mxu0 0.0
    %573 = vmatpush1.msra.mxu0 0.0
    %574 = vmatprep.subr.mxu0 0.0
    %575 = vmatpush1.msra.mxu0 0.0
    %576 = vmatprep.subr.mxu0 0.0
    %577 = vmatpush1.msra.mxu0 0.0
    %578 = vmatprep.subr.mxu0 0.0
    %579 = vmatpush1.msra.mxu0 0.0
    %580 = vmatprep.subr.mxu0 0.0
    %581 = vmatpush1.msra.mxu0 0.0
    %582 = vmatprep.mubr.f32.mxu0 0.0
    %583 = vmatmul.mubr.f32.gmra.mrb[0].mxu0 %v125
    %v584 = vpop.f32.mrb[0].mxu0
    %v585 = vadd.f32 %v100, %v584
    %v586 = vpop.f32.mrb[0].mxu0
    %v587 = vadd.f32 %v104, %v586
    %588 = vmatprep.mubr.f32.mxu0 0.0
    %589 = vmatmul.mubr.f32.gmra.mrb[0].mxu0 %v128
    %v590 = vpop.f32.mrb[0].mxu0
    %v591 = vadd.f32 %v100, %v590
    %v592 = vpop.f32.mrb[0].mxu0
    %v593 = vadd.f32 %v104, %v592
    %594 = vmatprep.mubr.f32.mxu0 0.0
    %595 = vmatmul.mubr.f32.gmra.mrb[0].mxu0 %v131
    %v596 = vpop.f32.mrb[0].mxu0
    %v597 = vadd.f32 %v100, %v596
    %v598 = vpop.f32.mrb[0].mxu0
    %v599 = vadd.f32 %v104, %v598
    %600 = vmatprep.mubr.f32.mxu0 0.0
    %601 = vmatmul.mubr.f32.gmra.mrb[0].mxu0 %v134
    %v602 = vpop.f32.mrb[0].mxu0
    %v603 = vadd.f32 %v100, %v602
    %v604 = vpop.f32.mrb[0].mxu0
    %v605 = vadd.f32 %v104, %v604
    %606 = vmatprep.mubr.f32.mxu0 0.0
    %607 = vmatmul.mubr.f32.gmra.mrb[0].mxu0 %v137
    %v608 = vpop.f32.mrb[0].mxu0
    %v609 = vadd.f32 %v100, %v608
    %v610 = vpop.f32.mrb[0].mxu0
    %v611 = vadd.f32 %v104, %v610
    %612 = vmatprep.mubr.f32.mxu0 0.0
    %613 = vmatmul.mubr.f32.gmra.mrb[0].mxu0 %v140
    %v614 = vpop.f32.mrb[0].mxu0
    %v615 = vadd.f32 %v100, %v614
    %v616 = vpop.f32.mrb[0].mxu0
    %v617 = vadd.f32 %v104, %v616
    %618 = vmatprep.mubr.f32.mxu0 0.0
    %619 = vmatmul.mubr.f32.gmra.mrb[0].mxu0 %v143
    %v620 = vpop.f32.mrb[0].mxu0
    %v621 = vadd.f32 %v100, %v620
    %v622 = vpop.f32.mrb[0].mxu0
    %v623 = vadd.f32 %v104, %v622
    %624 = vmatprep.mubr.f32.mxu0 0.0
    %625 = vmatmul.mubr.f32.gmra.mrb[0].mxu0 %v146
    %v626 = vpop.f32.mrb[0].mxu0
    %v627 = vadd.f32 %v100, %v626
    %v628 = vpop.f32.mrb[0].mxu0
    %v629 = vadd.f32 %v104, %v628
    %630 = vdwg.mxu0
    %631 = vmatprep.subr.mxu0 %v55
    %632 = vmatpush1.msra.mxu0 %v54
    %633 = vmatprep.subr.mxu0 %v177
    %634 = vmatpush1.msra.mxu0 %v174
    %635 = vmatprep.subr.mxu0 0.0
    %636 = vmatpush1.msra.mxu0 0.0
    %637 = vmatprep.subr.mxu0 0.0
    %638 = vmatpush1.msra.mxu0 0.0
    %639 = vmatprep.subr.mxu0 0.0
    %640 = vmatpush1.msra.mxu0 0.0
    %641 = vmatprep.subr.mxu0 0.0
    %642 = vmatpush1.msra.mxu0 0.0
    %643 = vmatprep.subr.mxu0 0.0
    %644 = vmatpush1.msra.mxu0 0.0
    %645 = vmatprep.subr.mxu0 0.0
    %646 = vmatpush1.msra.mxu0 0.0
    %647 = vmatprep.subr.mxu0 0.0
    %648 = vmatpush1.msra.mxu0 0.0
    %649 = vmatprep.subr.mxu0 0.0
    %650 = vmatpush1.msra.mxu0 0.0
    %651 = vmatprep.subr.mxu0 0.0
    %652 = vmatpush1.msra.mxu0 0.0
    %653 = vmatprep.subr.mxu0 0.0
    %654 = vmatpush1.msra.mxu0 0.0
    %655 = vmatprep.subr.mxu0 0.0
    %656 = vmatpush1.msra.mxu0 0.0
    %657 = vmatprep.subr.mxu0 0.0
    %658 = vmatpush1.msra.mxu0 0.0
    %659 = vmatprep.subr.mxu0 0.0
    %660 = vmatpush1.msra.mxu0 0.0
    %661 = vmatprep.subr.mxu0 0.0
    %662 = vmatpush1.msra.mxu0 0.0
    %663 = vmatprep.subr.mxu0 0.0
    %664 = vmatpush1.msra.mxu0 0.0
    %665 = vmatprep.subr.mxu0 0.0
    %666 = vmatpush1.msra.mxu0 0.0
    %667 = vmatprep.subr.mxu0 0.0
    %668 = vmatpush1.msra.mxu0 0.0
    %669 = vmatprep.subr.mxu0 0.0
    %670 = vmatpush1.msra.mxu0 0.0
    %671 = vmatprep.subr.mxu0 0.0
    %672 = vmatpush1.msra.mxu0 0.0
    %673 = vmatprep.subr.mxu0 0.0
    %674 = vmatpush1.msra.mxu0 0.0
    %675 = vmatprep.subr.mxu0 0.0
    %676 = vmatpush1.msra.mxu0 0.0
    %677 = vmatprep.subr.mxu0 0.0
    %678 = vmatpush1.msra.mxu0 0.0
    %679 = vmatprep.subr.mxu0 0.0
    %680 = vmatpush1.msra.mxu0 0.0
    %681 = vmatprep.subr.mxu0 0.0
    %682 = vmatpush1.msra.mxu0 0.0
    %683 = vmatprep.subr.mxu0 0.0
    %684 = vmatpush1.msra.mxu0 0.0
    %685 = vmatprep.subr.mxu0 0.0
    %686 = vmatpush1.msra.mxu0 0.0
    %687 = vmatprep.subr.mxu0 0.0
    %688 = vmatpush1.msra.mxu0 0.0
    %689 = vmatprep.subr.mxu0 0.0
    %690 = vmatpush1.msra.mxu0 0.0
    %691 = vmatprep.subr.mxu0 0.0
    %692 = vmatpush1.msra.mxu0 0.0
    %693 = vmatprep.subr.mxu0 0.0
    %694 = vmatpush1.msra.mxu0 0.0
    %695 = vmatprep.mubr.f32.mxu0 0.0
    %696 = vmatmul.mubr.f32.gmra.mrb[0].mxu0 %v125
    %v697 = vpop.f32.mrb[0].mxu0
    %v698 = vadd.f32 %v108, %v697
    %v699 = vpop.f32.mrb[0].mxu0
    %v700 = vadd.f32 %v112, %v699
    %701 = vmatprep.mubr.f32.mxu0 0.0
    %702 = vmatmul.mubr.f32.gmra.mrb[0].mxu0 %v128
    %v703 = vpop.f32.mrb[0].mxu0
    %v704 = vadd.f32 %v108, %v703
    %v705 = vpop.f32.mrb[0].mxu0
    %v706 = vadd.f32 %v112, %v705
    %707 = vmatprep.mubr.f32.mxu0 0.0
    %708 = vmatmul.mubr.f32.gmra.mrb[0].mxu0 %v131
    %v709 = vpop.f32.mrb[0].mxu0
    %v710 = vadd.f32 %v108, %v709
    %v711 = vpop.f32.mrb[0].mxu0
    %v712 = vadd.f32 %v112, %v711
    %713 = vmatprep.mubr.f32.mxu0 0.0
    %714 = vmatmul.mubr.f32.gmra.mrb[0].mxu0 %v134
    %v715 = vpop.f32.mrb[0].mxu0
    %v716 = vadd.f32 %v108, %v715
    %v717 = vpop.f32.mrb[0].mxu0
    %v718 = vadd.f32 %v112, %v717
    %719 = vmatprep.mubr.f32.mxu0 0.0
    %720 = vmatmul.mubr.f32.gmra.mrb[0].mxu0 %v137
    %v721 = vpop.f32.mrb[0].mxu0
    %v722 = vadd.f32 %v108, %v721
    %v723 = vpop.f32.mrb[0].mxu0
    %v724 = vadd.f32 %v112, %v723
    %725 = vmatprep.mubr.f32.mxu0 0.0
    %726 = vmatmul.mubr.f32.gmra.mrb[0].mxu0 %v140
    %v727 = vpop.f32.mrb[0].mxu0
    %v728 = vadd.f32 %v108, %v727
    %v729 = vpop.f32.mrb[0].mxu0
    %v730 = vadd.f32 %v112, %v729
    %731 = vmatprep.mubr.f32.mxu0 0.0
    %732 = vmatmul.mubr.f32.gmra.mrb[0].mxu0 %v143
    %v733 = vpop.f32.mrb[0].mxu0
    %v734 = vadd.f32 %v108, %v733
    %v735 = vpop.f32.mrb[0].mxu0
    %v736 = vadd.f32 %v112, %v735
    %737 = vmatprep.mubr.f32.mxu0 0.0
    %738 = vmatmul.mubr.f32.gmra.mrb[0].mxu0 %v146
    %v739 = vpop.f32.mrb[0].mxu0
    %v740 = vadd.f32 %v108, %v739
    %v741 = vpop.f32.mrb[0].mxu0
    %v742 = vadd.f32 %v112, %v741
    %743 = vdwg.mxu0
    %v744 = vxor.u32 %v246, 2147483648
    %v745 = vxor.u32 %v248, 2147483648
    %v746 = vxor.u32 %v252, 2147483648
    %v747 = vxor.u32 %v254, 2147483648
    %v748 = vxor.u32 %v258, 2147483648
    %v749 = vxor.u32 %v260, 2147483648
    %v750 = vxor.u32 %v264, 2147483648
    %v751 = vxor.u32 %v266, 2147483648
    %v752 = vxor.u32 %v270, 2147483648
    %v753 = vxor.u32 %v272, 2147483648
    %v754 = vxor.u32 %v276, 2147483648
    %v755 = vxor.u32 %v278, 2147483648
    %v756 = vxor.u32 %v282, 2147483648
    %v757 = vxor.u32 %v284, 2147483648
    %v758 = vxor.u32 %v288, 2147483648
    %v759 = vxor.u32 %v290, 2147483648
    %v760 = vmul.f32 %v744, 1.442695
    %v761 = vpow.pop %v760
    %v762 = vmul.f32 %v745, 1.442695
    %v763 = vpow.pop %v762
    %v764 = vmul.f32 %v746, 1.442695
    %v765 = vpow.pop %v764
    %v766 = vmul.f32 %v747, 1.442695
    %v767 = vpow.pop %v766
    %v768 = vmul.f32 %v748, 1.442695
    %v769 = vpow.pop %v768
    %v770 = vmul.f32 %v749, 1.442695
    %v771 = vpow.pop %v770
    %v772 = vmul.f32 %v750, 1.442695
    %v773 = vpow.pop %v772
    %v774 = vmul.f32 %v751, 1.442695
    %v775 = vpow.pop %v774
    %v776 = vmul.f32 %v752, 1.442695
    %v777 = vpow.pop %v776
    %v778 = vmul.f32 %v753, 1.442695
    %v779 = vpow.pop %v778
    %v780 = vmul.f32 %v754, 1.442695
    %v781 = vpow.pop %v780
    %v782 = vmul.f32 %v755, 1.442695
    %v783 = vpow.pop %v782
    %v784 = vmul.f32 %v756, 1.442695
    %v785 = vpow.pop %v784
    %v786 = vmul.f32 %v757, 1.442695
    %v787 = vpow.pop %v786
    %v788 = vmul.f32 %v758, 1.442695
    %v789 = vpow.pop %v788
    %v790 = vmul.f32 %v759, 1.442695
    %v791 = vpow.pop %v790
    %v792 = vadd.f32 %v761, 1.0
    %v793 = vadd.f32 %v763, 1.0
    %v794 = vadd.f32 %v765, 1.0
    %v795 = vadd.f32 %v767, 1.0
    %v796 = vadd.f32 %v769, 1.0
    %v797 = vadd.f32 %v771, 1.0
    %v798 = vadd.f32 %v773, 1.0
    %v799 = vadd.f32 %v775, 1.0
    %v800 = vadd.f32 %v777, 1.0
    %v801 = vadd.f32 %v779, 1.0
    %v802 = vadd.f32 %v781, 1.0
    %v803 = vadd.f32 %v783, 1.0
    %v804 = vadd.f32 %v785, 1.0
    %v805 = vadd.f32 %v787, 1.0
    %v806 = vadd.f32 %v789, 1.0
    %v807 = vadd.f32 %v791, 1.0
    %v808 = vrcp.pop %v792
    %v809 = vmul.f32 1.0, %v808
    %v810 = vrcp.pop %v793
    %v811 = vmul.f32 1.0, %v810
    %v812 = vrcp.pop %v794
    %v813 = vmul.f32 1.0, %v812
    %v814 = vrcp.pop %v795
    %v815 = vmul.f32 1.0, %v814
    %v816 = vrcp.pop %v796
    %v817 = vmul.f32 1.0, %v816
    %v818 = vrcp.pop %v797
    %v819 = vmul.f32 1.0, %v818
    %v820 = vrcp.pop %v798
    %v821 = vmul.f32 1.0, %v820
    %v822 = vrcp.pop %v799
    %v823 = vmul.f32 1.0, %v822
    %v824 = vrcp.pop %v800
    %v825 = vmul.f32 1.0, %v824
    %v826 = vrcp.pop %v801
    %v827 = vmul.f32 1.0, %v826
    %v828 = vrcp.pop %v802
    %v829 = vmul.f32 1.0, %v828
    %v830 = vrcp.pop %v803
    %v831 = vmul.f32 1.0, %v830
    %v832 = vrcp.pop %v804
    %v833 = vmul.f32 1.0, %v832
    %v834 = vrcp.pop %v805
    %v835 = vmul.f32 1.0, %v834
    %v836 = vrcp.pop %v806
    %v837 = vmul.f32 1.0, %v836
    %v838 = vrcp.pop %v807
    %v839 = vmul.f32 1.0, %v838
    %v840 = vtanh.pop %v359
    %v841 = vtanh.pop %v361
    %v842 = vtanh.pop %v365
    %v843 = vtanh.pop %v367
    %v844 = vtanh.pop %v371
    %v845 = vtanh.pop %v373
    %v846 = vtanh.pop %v377
    %v847 = vtanh.pop %v379
    %v848 = vtanh.pop %v383
    %v849 = vtanh.pop %v385
    %v850 = vtanh.pop %v389
    %v851 = vtanh.pop %v391
    %v852 = vtanh.pop %v395
    %v853 = vtanh.pop %v397
    %v854 = vtanh.pop %v401
    %v855 = vtanh.pop %v403
    %v856 = vxor.u32 %v472, 2147483648
    %v857 = vxor.u32 %v474, 2147483648
    %v858 = vxor.u32 %v478, 2147483648
    %v859 = vxor.u32 %v480, 2147483648
    %v860 = vxor.u32 %v484, 2147483648
    %v861 = vxor.u32 %v486, 2147483648
    %v862 = vxor.u32 %v490, 2147483648
    %v863 = vxor.u32 %v492, 2147483648
    %v864 = vxor.u32 %v496, 2147483648
    %v865 = vxor.u32 %v498, 2147483648
    %v866 = vxor.u32 %v502, 2147483648
    %v867 = vxor.u32 %v504, 2147483648
    %v868 = vxor.u32 %v508, 2147483648
    %v869 = vxor.u32 %v510, 2147483648
    %v870 = vxor.u32 %v514, 2147483648
    %v871 = vxor.u32 %v516, 2147483648
    %v872 = vmul.f32 %v856, 1.442695
    %v873 = vpow.pop %v872
    %v874 = vmul.f32 %v857, 1.442695
    %v875 = vpow.pop %v874
    %v876 = vmul.f32 %v858, 1.442695
    %v877 = vpow.pop %v876
    %v878 = vmul.f32 %v859, 1.442695
    %v879 = vpow.pop %v878
    %v880 = vmul.f32 %v860, 1.442695
    %v881 = vpow.pop %v880
    %v882 = vmul.f32 %v861, 1.442695
    %v883 = vpow.pop %v882
    %v884 = vmul.f32 %v862, 1.442695
    %v885 = vpow.pop %v884
    %v886 = vmul.f32 %v863, 1.442695
    %v887 = vpow.pop %v886
    %v888 = vmul.f32 %v864, 1.442695
    %v889 = vpow.pop %v888
    %v890 = vmul.f32 %v865, 1.442695
    %v891 = vpow.pop %v890
    %v892 = vmul.f32 %v866, 1.442695
    %v893 = vpow.pop %v892
    %v894 = vmul.f32 %v867, 1.442695
    %v895 = vpow.pop %v894
    %v896 = vmul.f32 %v868, 1.442695
    %v897 = vpow.pop %v896
    %v898 = vmul.f32 %v869, 1.442695
    %v899 = vpow.pop %v898
    %v900 = vmul.f32 %v870, 1.442695
    %v901 = vpow.pop %v900
    %v902 = vmul.f32 %v871, 1.442695
    %v903 = vpow.pop %v902
    %v904 = vadd.f32 %v873, 1.0
    %v905 = vadd.f32 %v875, 1.0
    %v906 = vadd.f32 %v877, 1.0
    %v907 = vadd.f32 %v879, 1.0
    %v908 = vadd.f32 %v881, 1.0
    %v909 = vadd.f32 %v883, 1.0
    %v910 = vadd.f32 %v885, 1.0
    %v911 = vadd.f32 %v887, 1.0
    %v912 = vadd.f32 %v889, 1.0
    %v913 = vadd.f32 %v891, 1.0
    %v914 = vadd.f32 %v893, 1.0
    %v915 = vadd.f32 %v895, 1.0
    %v916 = vadd.f32 %v897, 1.0
    %v917 = vadd.f32 %v899, 1.0
    %v918 = vadd.f32 %v901, 1.0
    %v919 = vadd.f32 %v903, 1.0
    %v920 = vrcp.pop %v904
    %v921 = vmul.f32 1.0, %v920
    %v922 = vrcp.pop %v905
    %v923 = vmul.f32 1.0, %v922
    %v924 = vrcp.pop %v906
    %v925 = vmul.f32 1.0, %v924
    %v926 = vrcp.pop %v907
    %v927 = vmul.f32 1.0, %v926
    %v928 = vrcp.pop %v908
    %v929 = vmul.f32 1.0, %v928
    %v930 = vrcp.pop %v909
    %v931 = vmul.f32 1.0, %v930
    %v932 = vrcp.pop %v910
    %v933 = vmul.f32 1.0, %v932
    %v934 = vrcp.pop %v911
    %v935 = vmul.f32 1.0, %v934
    %v936 = vrcp.pop %v912
    %v937 = vmul.f32 1.0, %v936
    %v938 = vrcp.pop %v913
    %v939 = vmul.f32 1.0, %v938
    %v940 = vrcp.pop %v914
    %v941 = vmul.f32 1.0, %v940
    %v942 = vrcp.pop %v915
    %v943 = vmul.f32 1.0, %v942
    %v944 = vrcp.pop %v916
    %v945 = vmul.f32 1.0, %v944
    %v946 = vrcp.pop %v917
    %v947 = vmul.f32 1.0, %v946
    %v948 = vrcp.pop %v918
    %v949 = vmul.f32 1.0, %v948
    %v950 = vrcp.pop %v919
    %v951 = vmul.f32 1.0, %v950
    %v952 = vmul.f32 %v809, %v840
    %v953 = vmul.f32 %v811, %v841
    %v954 = vmul.f32 %v813, %v842
    %v955 = vmul.f32 %v815, %v843
    %v956 = vmul.f32 %v817, %v844
    %v957 = vmul.f32 %v819, %v845
    %v958 = vmul.f32 %v821, %v846
    %v959 = vmul.f32 %v823, %v847
    %v960 = vmul.f32 %v825, %v848
    %v961 = vmul.f32 %v827, %v849
    %v962 = vmul.f32 %v829, %v850
    %v963 = vmul.f32 %v831, %v851
    %v964 = vmul.f32 %v833, %v852
    %v965 = vmul.f32 %v835, %v853
    %v966 = vmul.f32 %v837, %v854
    %v967 = vmul.f32 %v839, %v855
    %v968 = vtanh.pop %v952
    %v969 = vtanh.pop %v953
    %v970 = vtanh.pop %v954
    %v971 = vtanh.pop %v955
    %v972 = vtanh.pop %v956
    %v973 = vtanh.pop %v957
    %v974 = vtanh.pop %v958
    %v975 = vtanh.pop %v959
    %v976 = vtanh.pop %v960
    %v977 = vtanh.pop %v961
    %v978 = vtanh.pop %v962
    %v979 = vtanh.pop %v963
    %v980 = vtanh.pop %v964
    %v981 = vtanh.pop %v965
    %v982 = vtanh.pop %v966
    %v983 = vtanh.pop %v967
    %v984 = vmul.f32 %v921, %v968
    %v985 = vmul.f32 %v923, %v969
    %v986 = vmul.f32 %v925, %v970
    %v987 = vmul.f32 %v927, %v971
    %v988 = vmul.f32 %v929, %v972
    %v989 = vmul.f32 %v931, %v973
    %v990 = vmul.f32 %v933, %v974
    %v991 = vmul.f32 %v935, %v975
    %v992 = vmul.f32 %v937, %v976
    %v993 = vmul.f32 %v939, %v977
    %v994 = vmul.f32 %v941, %v978
    %v995 = vmul.f32 %v943, %v979
    %v996 = vmul.f32 %v945, %v980
    %v997 = vmul.f32 %v947, %v981
    %v998 = vmul.f32 %v949, %v982
    %v999 = vmul.f32 %v951, %v983
    %v1000 = vmax.f32 %v585, 0.0
    %v1001 = vmax.f32 %v587, 0.0
    %v1002 = vmax.f32 %v698, 0.0
    %v1003 = vmax.f32 %v700, 0.0
    %v1004 = vmax.f32 %v591, 0.0
    %v1005 = vmax.f32 %v593, 0.0
    %v1006 = vmax.f32 %v704, 0.0
    %v1007 = vmax.f32 %v706, 0.0
    %v1008 = vmax.f32 %v597, 0.0
    %v1009 = vmax.f32 %v599, 0.0
    %v1010 = vmax.f32 %v710, 0.0
    %v1011 = vmax.f32 %v712, 0.0
    %v1012 = vmax.f32 %v603, 0.0
    %v1013 = vmax.f32 %v605, 0.0
    %v1014 = vmax.f32 %v716, 0.0
    %v1015 = vmax.f32 %v718, 0.0
    %v1016 = vmax.f32 %v609, 0.0
    %v1017 = vmax.f32 %v611, 0.0
    %v1018 = vmax.f32 %v722, 0.0
    %v1019 = vmax.f32 %v724, 0.0
    %v1020 = vmax.f32 %v615, 0.0
    %v1021 = vmax.f32 %v617, 0.0
    %v1022 = vmax.f32 %v728, 0.0
    %v1023 = vmax.f32 %v730, 0.0
    %v1024 = vmax.f32 %v621, 0.0
    %v1025 = vmax.f32 %v623, 0.0
    %v1026 = vmax.f32 %v734, 0.0
    %v1027 = vmax.f32 %v736, 0.0
    %v1028 = vmax.f32 %v627, 0.0
    %v1029 = vmax.f32 %v629, 0.0
    %v1030 = vmax.f32 %v740, 0.0
    %v1031 = vmax.f32 %v742, 0.0
    %v1032 = vld [vmem:[%s3] sm:$0xff]
    %v1033 = vld [vmem:[%s3 + $0x8] sm:$0xff]
    %v1034 = vld [vmem:[%s3 + $0x10] sm:$0xff]
    %v1035 = vld [vmem:[%s3 + $0x28] sm:$0xff]
    %v1036 = vld [vmem:[%s3 + $0x30] sm:$0xff]
    %v1037 = vld [vmem:[%s3 + $0x38] sm:$0xff]
    %v1038 = vld [vmem:[%s3 + $0x50] sm:$0xff]
    %v1039 = vld [vmem:[%s3 + $0x58] sm:$0xff]
    %v1040 = vld [vmem:[%s3 + $0x60] sm:$0xff]
    %v1041 = vld [vmem:[%s3 + $0x78] sm:$0xff]
    %v1042 = vld [vmem:[%s3 + $0x80] sm:$0xff]
    %v1043 = vld [vmem:[%s3 + $0x88] sm:$0xff]
    %v1044 = vld [vmem:[%s3 + $0xa0] sm:$0xff]
    %v1045 = vld [vmem:[%s3 + $0xa8] sm:$0xff]
    %v1046 = vld [vmem:[%s3 + $0xb0] sm:$0xff]
    %v1047 = vld [vmem:[%s3 + $0xc8] sm:$0xff]
    %v1048 = vld [vmem:[%s3 + $0xd0] sm:$0xff]
    %v1049 = vld [vmem:[%s3 + $0xd8] sm:$0xff]
    %v1050 = vld [vmem:[%s3 + $0xf0] sm:$0xff]
    %v1051 = vld [vmem:[%s3 + $0xf8] sm:$0xff]
    %v1052 = vld [vmem:[%s3 + $0x100] sm:$0xff]
    %v1053 = vld [vmem:[%s3 + $0x118] sm:$0xff]
    %v1054 = vld [vmem:[%s3 + $0x120] sm:$0xff]
    %v1055 = vld [vmem:[%s3 + $0x128] sm:$0xff]
    %v1056 = vld [vmem:[%s3 + $0x140] sm:$0xff]
    %v1057 = vld [vmem:[%s3 + $0x148] sm:$0xff]
    %v1058 = vld [vmem:[%s3 + $0x150] sm:$0xff]
    %v1059 = vld [vmem:[%s3 + $0x168] sm:$0xff]
    %v1060 = vld [vmem:[%s3 + $0x170] sm:$0xff]
    %v1061 = vld [vmem:[%s3 + $0x178] sm:$0xff]
    %v1062 = vld [vmem:[%s3 + $0x190] sm:$0xff]
    %v1063 = vld [vmem:[%s3 + $0x198] sm:$0xff]
    %v1064 = vld [vmem:[%s3 + $0x1a0] sm:$0xff]
    %v1065 = vld [vmem:[%s3 + $0x1b8] sm:$0xff]
    %v1066 = vld [vmem:[%s3 + $0x1c0] sm:$0xff]
    %v1067 = vld [vmem:[%s3 + $0x1c8] sm:$0xff]
    %v1068 = vld [vmem:[%s3 + $0x1e0] sm:$0xff]
    %v1069 = vld [vmem:[%s3 + $0x1e8] sm:$0xff]
    %v1070 = vld [vmem:[%s3 + $0x1f0] sm:$0xff]
    %v1071 = vld [vmem:[%s3 + $0x208] sm:$0xff]
    %v1072 = vld [vmem:[%s3 + $0x210] sm:$0xff]
    %v1073 = vld [vmem:[%s3 + $0x218] sm:$0xff]
    %v1074 = vld [vmem:[%s3 + $0x230] sm:$0xff]
    %v1075 = vld [vmem:[%s3 + $0x238] sm:$0xff]
    %v1076 = vld [vmem:[%s3 + $0x240] sm:$0xff]
    %v1077 = vld [vmem:[%s3 + $0x258] sm:$0xff]
    %v1078 = vld [vmem:[%s3 + $0x260] sm:$0xff]
    %v1079 = vld [vmem:[%s3 + $0x268] sm:$0xff]
    %v1080 = vld [vmem:[%s3 + $0x280] sm:$0xff]
    %v1081 = vld [vmem:[%s3 + $0x288] sm:$0xff]
    %v1082 = vld [vmem:[%s3 + $0x290] sm:$0xff]
    %v1083 = vld [vmem:[%s3 + $0x2a8] sm:$0xff]
    %v1084 = vld [vmem:[%s3 + $0x2b0] sm:$0xff]
    %v1085 = vld [vmem:[%s3 + $0x2b8] sm:$0xff]
    %v1086 = vld [vmem:[%s3 + $0x2d0] sm:$0xff]
    %v1087 = vld [vmem:[%s3 + $0x2d8] sm:$0xff]
    %v1088 = vld [vmem:[%s3 + $0x2e0] sm:$0xff]
    %v1089 = vld [vmem:[%s3 + $0x2f8] sm:$0xff]
    %v1090 = vld [vmem:[%s3 + $0x300] sm:$0xff]
    %v1091 = vld [vmem:[%s3 + $0x308] sm:$0xff]
    %v1092 = vld [vmem:[%s3 + $0x320] sm:$0xff]
    %v1093 = vld [vmem:[%s3 + $0x328] sm:$0xff]
    %v1094 = vld [vmem:[%s3 + $0x330] sm:$0xff]
    %v1095 = vld [vmem:[%s3 + $0x348] sm:$0xff]
    %v1096 = vld [vmem:[%s3 + $0x350] sm:$0xff]
    %v1097 = vld [vmem:[%s3 + $0x358] sm:$0xff]
    %v1098 = vld [vmem:[%s3 + $0x370] sm:$0xff]
    %v1099 = vld [vmem:[%s3 + $0x378] sm:$0xff]
    %v1100 = vld [vmem:[%s3 + $0x380] sm:$0xff]
    %v1101 = vld [vmem:[%s3 + $0x398] sm:$0xff]
    %v1102 = vld [vmem:[%s3 + $0x3a0] sm:$0xff]
    %v1103 = vld [vmem:[%s3 + $0x3a8] sm:$0xff]
    %v1104 = vld [vmem:[%s3 + $0x3c0] sm:$0xff]
    %v1105 = vld [vmem:[%s3 + $0x3c8] sm:$0xff]
    %v1106 = vld [vmem:[%s3 + $0x3d0] sm:$0xff]
    %v1107 = vld [vmem:[%s3 + $0x3e8] sm:$0xff]
    %v1108 = vld [vmem:[%s3 + $0x3f0] sm:$0xff]
    %v1109 = vld [vmem:[%s3 + $0x3f8] sm:$0xff]
    %v1110 = vld [vmem:[%s3 + $0x410] sm:$0xff]
    %v1111 = vld [vmem:[%s3 + $0x418] sm:$0xff]
    %v1112 = vld [vmem:[%s3 + $0x420] sm:$0xff]
    %v1113 = vld [vmem:[%s3 + $0x438] sm:$0xff]
    %v1114 = vld [vmem:[%s3 + $0x440] sm:$0xff]
    %v1115 = vld [vmem:[%s3 + $0x448] sm:$0xff]
    %v1116 = vld [vmem:[%s3 + $0x460] sm:$0xff]
    %v1117 = vld [vmem:[%s3 + $0x468] sm:$0xff]
    %v1118 = vld [vmem:[%s3 + $0x470] sm:$0xff]
    %v1119 = vld [vmem:[%s3 + $0x488] sm:$0xff]
    %v1120 = vld [vmem:[%s3 + $0x490] sm:$0xff]
    %v1121 = vld [vmem:[%s3 + $0x498] sm:$0xff]
    %v1122 = vld [vmem:[%s3 + $0x4b0] sm:$0xff]
    %v1123 = vld [vmem:[%s3 + $0x4b8] sm:$0xff]
    %v1124 = vld [vmem:[%s3 + $0x4c0] sm:$0xff]
    %v1125 = vld [vmem:[%s3 + $0x4d8] sm:$0xff]
    %v1126 = vld [vmem:[%s3 + $0x4e0] sm:$0xff]
    %v1127 = vld [vmem:[%s3 + $0x4e8] sm:$0xff]
    %s1128 = scalar_lea.vmem %s7, 1
    %v1129 = vld [vmem:[%s1128] ss:$8 sm:$0x7]
    %v1131 = vlaneseq
    %v1132 = vshrl.u32 %v1131, 7
    %v1133 = vsub.s32 0, %v1132
    %v1134 = vrot.slane %v1129, %v1133
    %v1135 = vlaneseq
    %v1136 = vshrl.u32 %v1135, 7
    %v1137 = vsub.s32 1, %v1136
    %v1138 = vrot.slane %v1129, %v1137
    %v1139 = vlaneseq
    %v1140 = vshrl.u32 %v1139, 7
    %v1141 = vsub.s32 2, %v1140
    %v1142 = vrot.slane %v1129, %v1141
    %1146 = vmatprep.subr.mxu0 %v1033
    %1147 = vmatpush1.msra.mxu0 %v1032
    %1148 = vmatprep.subr.mxu0 %v1036
    %1149 = vmatpush1.msra.mxu0 %v1035
    %1150 = vmatprep.subr.mxu0 %v1039
    %1151 = vmatpush1.msra.mxu0 %v1038
    %1152 = vmatprep.subr.mxu0 %v1042
    %1153 = vmatpush1.msra.mxu0 %v1041
    %1154 = vmatprep.subr.mxu0 %v1045
    %1155 = vmatpush1.msra.mxu0 %v1044
    %1156 = vmatprep.subr.mxu0 %v1048
    %1157 = vmatpush1.msra.mxu0 %v1047
    %1158 = vmatprep.subr.mxu0 %v1051
    %1159 = vmatpush1.msra.mxu0 %v1050
    %1160 = vmatprep.subr.mxu0 %v1054
    %1161 = vmatpush1.msra.mxu0 %v1053
    %1162 = vmatprep.subr.mxu0 %v1057
    %1163 = vmatpush1.msra.mxu0 %v1056
    %1164 = vmatprep.subr.mxu0 %v1060
    %1165 = vmatpush1.msra.mxu0 %v1059
    %1166 = vmatprep.subr.mxu0 %v1063
    %1167 = vmatpush1.msra.mxu0 %v1062
    %1168 = vmatprep.subr.mxu0 %v1066
    %1169 = vmatpush1.msra.mxu0 %v1065
    %1170 = vmatprep.subr.mxu0 %v1069
    %1171 = vmatpush1.msra.mxu0 %v1068
    %1172 = vmatprep.subr.mxu0 %v1072
    %1173 = vmatpush1.msra.mxu0 %v1071
    %1174 = vmatprep.subr.mxu0 %v1075
    %1175 = vmatpush1.msra.mxu0 %v1074
    %1176 = vmatprep.subr.mxu0 %v1078
    %1177 = vmatpush1.msra.mxu0 %v1077
    %1178 = vmatprep.subr.mxu0 %v1081
    %1179 = vmatpush1.msra.mxu0 %v1080
    %1180 = vmatprep.subr.mxu0 %v1084
    %1181 = vmatpush1.msra.mxu0 %v1083
    %1182 = vmatprep.subr.mxu0 %v1087
    %1183 = vmatpush1.msra.mxu0 %v1086
    %1184 = vmatprep.subr.mxu0 %v1090
    %1185 = vmatpush1.msra.mxu0 %v1089
    %1186 = vmatprep.subr.mxu0 %v1093
    %1187 = vmatpush1.msra.mxu0 %v1092
    %1188 = vmatprep.subr.mxu0 %v1096
    %1189 = vmatpush1.msra.mxu0 %v1095
    %1190 = vmatprep.subr.mxu0 %v1099
    %1191 = vmatpush1.msra.mxu0 %v1098
    %1192 = vmatprep.subr.mxu0 %v1102
    %1193 = vmatpush1.msra.mxu0 %v1101
    %1194 = vmatprep.subr.mxu0 %v1105
    %1195 = vmatpush1.msra.mxu0 %v1104
    %1196 = vmatprep.subr.mxu0 %v1108
    %1197 = vmatpush1.msra.mxu0 %v1107
    %1198 = vmatprep.subr.mxu0 %v1111
    %1199 = vmatpush1.msra.mxu0 %v1110
    %1200 = vmatprep.subr.mxu0 %v1114
    %1201 = vmatpush1.msra.mxu0 %v1113
    %1202 = vmatprep.subr.mxu0 %v1117
    %1203 = vmatpush1.msra.mxu0 %v1116
    %1204 = vmatprep.subr.mxu0 %v1120
    %1205 = vmatpush1.msra.mxu0 %v1119
    %1206 = vmatprep.subr.mxu0 %v1123
    %1207 = vmatpush1.msra.mxu0 %v1122
    %1208 = vmatprep.subr.mxu0 %v1126
    %1209 = vmatpush1.msra.mxu0 %v1125
    %1210 = vmatprep.mubr.f32.mxu0 %v985
    %1211 = vmatmul.mubr.f32.gmra.mrb[0].mxu0 %v984
    %v1212 = vpop.f32.mrb[0].mxu0
    %v1213 = vadd.f32 %v1134, %v1212
    %v1214 = vpop.f32.mrb[0].mxu0
    %v1215 = vadd.f32 %v1138, %v1214
    %1216 = vmatprep.mubr.f32.mxu0 %v987
    %1217 = vmatmul.mubr.f32.gmra.mrb[0].mxu0 %v986
    %v1218 = vpop.f32.mrb[0].mxu0
    %v1219 = vadd.f32 %v1134, %v1218
    %v1220 = vpop.f32.mrb[0].mxu0
    %v1221 = vadd.f32 %v1138, %v1220
    %1222 = vmatprep.mubr.f32.mxu0 %v989
    %1223 = vmatmul.mubr.f32.gmra.mrb[0].mxu0 %v988
    %v1224 = vpop.f32.mrb[0].mxu0
    %v1225 = vadd.f32 %v1134, %v1224
    %v1226 = vpop.f32.mrb[0].mxu0
    %v1227 = vadd.f32 %v1138, %v1226
    %1228 = vmatprep.mubr.f32.mxu0 %v991
    %1229 = vmatmul.mubr.f32.gmra.mrb[0].mxu0 %v990
    %v1230 = vpop.f32.mrb[0].mxu0
    %v1231 = vadd.f32 %v1134, %v1230
    %v1232 = vpop.f32.mrb[0].mxu0
    %v1233 = vadd.f32 %v1138, %v1232
    %1234 = vmatprep.mubr.f32.mxu0 %v993
    %1235 = vmatmul.mubr.f32.gmra.mrb[0].mxu0 %v992
    %v1236 = vpop.f32.mrb[0].mxu0
    %v1237 = vadd.f32 %v1134, %v1236
    %v1238 = vpop.f32.mrb[0].mxu0
    %v1239 = vadd.f32 %v1138, %v1238
    %1240 = vmatprep.mubr.f32.mxu0 %v995
    %1241 = vmatmul.mubr.f32.gmra.mrb[0].mxu0 %v994
    %v1242 = vpop.f32.mrb[0].mxu0
    %v1243 = vadd.f32 %v1134, %v1242
    %v1244 = vpop.f32.mrb[0].mxu0
    %v1245 = vadd.f32 %v1138, %v1244
    %1246 = vmatprep.mubr.f32.mxu0 %v997
    %1247 = vmatmul.mubr.f32.gmra.mrb[0].mxu0 %v996
    %v1248 = vpop.f32.mrb[0].mxu0
    %v1249 = vadd.f32 %v1134, %v1248
    %v1250 = vpop.f32.mrb[0].mxu0
    %v1251 = vadd.f32 %v1138, %v1250
    %1252 = vmatprep.mubr.f32.mxu0 %v999
    %1253 = vmatmul.mubr.f32.gmra.mrb[0].mxu0 %v998
    %v1254 = vpop.f32.mrb[0].mxu0
    %v1255 = vadd.f32 %v1134, %v1254
    %v1256 = vpop.f32.mrb[0].mxu0
    %v1257 = vadd.f32 %v1138, %v1256
    %1258 = vdwg.mxu0
    %1259 = vmatprep.subr.mxu0 0.0
    %1260 = vmatpush1.msra.mxu0 %v1034
    %1261 = vmatprep.subr.mxu0 0.0
    %1262 = vmatpush1.msra.mxu0 %v1037
    %1263 = vmatprep.subr.mxu0 0.0
    %1264 = vmatpush1.msra.mxu0 %v1040
    %1265 = vmatprep.subr.mxu0 0.0
    %1266 = vmatpush1.msra.mxu0 %v1043
    %1267 = vmatprep.subr.mxu0 0.0
    %1268 = vmatpush1.msra.mxu0 %v1046
    %1269 = vmatprep.subr.mxu0 0.0
    %1270 = vmatpush1.msra.mxu0 %v1049
    %1271 = vmatprep.subr.mxu0 0.0
    %1272 = vmatpush1.msra.mxu0 %v1052
    %1273 = vmatprep.subr.mxu0 0.0
    %1274 = vmatpush1.msra.mxu0 %v1055
    %1275 = vmatprep.subr.mxu0 0.0
    %1276 = vmatpush1.msra.mxu0 %v1058
    %1277 = vmatprep.subr.mxu0 0.0
    %1278 = vmatpush1.msra.mxu0 %v1061
    %1279 = vmatprep.subr.mxu0 0.0
    %1280 = vmatpush1.msra.mxu0 %v1064
    %1281 = vmatprep.subr.mxu0 0.0
    %1282 = vmatpush1.msra.mxu0 %v1067
    %1283 = vmatprep.subr.mxu0 0.0
    %1284 = vmatpush1.msra.mxu0 %v1070
    %1285 = vmatprep.subr.mxu0 0.0
    %1286 = vmatpush1.msra.mxu0 %v1073
    %1287 = vmatprep.subr.mxu0 0.0
    %1288 = vmatpush1.msra.mxu0 %v1076
    %1289 = vmatprep.subr.mxu0 0.0
    %1290 = vmatpush1.msra.mxu0 %v1079
    %1291 = vmatprep.subr.mxu0 0.0
    %1292 = vmatpush1.msra.mxu0 %v1082
    %1293 = vmatprep.subr.mxu0 0.0
    %1294 = vmatpush1.msra.mxu0 %v1085
    %1295 = vmatprep.subr.mxu0 0.0
    %1296 = vmatpush1.msra.mxu0 %v1088
    %1297 = vmatprep.subr.mxu0 0.0
    %1298 = vmatpush1.msra.mxu0 %v1091
    %1299 = vmatprep.subr.mxu0 0.0
    %1300 = vmatpush1.msra.mxu0 %v1094
    %1301 = vmatprep.subr.mxu0 0.0
    %1302 = vmatpush1.msra.mxu0 %v1097
    %1303 = vmatprep.subr.mxu0 0.0
    %1304 = vmatpush1.msra.mxu0 %v1100
    %1305 = vmatprep.subr.mxu0 0.0
    %1306 = vmatpush1.msra.mxu0 %v1103
    %1307 = vmatprep.subr.mxu0 0.0
    %1308 = vmatpush1.msra.mxu0 %v1106
    %1309 = vmatprep.subr.mxu0 0.0
    %1310 = vmatpush1.msra.mxu0 %v1109
    %1311 = vmatprep.subr.mxu0 0.0
    %1312 = vmatpush1.msra.mxu0 %v1112
    %1313 = vmatprep.subr.mxu0 0.0
    %1314 = vmatpush1.msra.mxu0 %v1115
    %1315 = vmatprep.subr.mxu0 0.0
    %1316 = vmatpush1.msra.mxu0 %v1118
    %1317 = vmatprep.subr.mxu0 0.0
    %1318 = vmatpush1.msra.mxu0 %v1121
    %1319 = vmatprep.subr.mxu0 0.0
    %1320 = vmatpush1.msra.mxu0 %v1124
    %1321 = vmatprep.subr.mxu0 0.0
    %1322 = vmatpush1.msra.mxu0 %v1127
    %1323 = vmatprep.mubr.f32.mxu0 %v985
    %1324 = vmatmul.mubr.f32.gmra.mrb[0].mxu0 %v984
    %v1325 = vpop.f32.mrb[0].mxu0
    %v1326 = vadd.f32 %v1142, %v1325
    %v1327 = vpop.f32.mrb[0].mxu0
    %1328 = vmatprep.mubr.f32.mxu0 %v987
    %1329 = vmatmul.mubr.f32.gmra.mrb[0].mxu0 %v986
    %v1330 = vpop.f32.mrb[0].mxu0
    %v1331 = vadd.f32 %v1142, %v1330
    %v1332 = vpop.f32.mrb[0].mxu0
    %1333 = vmatprep.mubr.f32.mxu0 %v989
    %1334 = vmatmul.mubr.f32.gmra.mrb[0].mxu0 %v988
    %v1335 = vpop.f32.mrb[0].mxu0
    %v1336 = vadd.f32 %v1142, %v1335
    %v1337 = vpop.f32.mrb[0].mxu0
    %1338 = vmatprep.mubr.f32.mxu0 %v991
    %1339 = vmatmul.mubr.f32.gmra.mrb[0].mxu0 %v990
    %v1340 = vpop.f32.mrb[0].mxu0
    %v1341 = vadd.f32 %v1142, %v1340
    %v1342 = vpop.f32.mrb[0].mxu0
    %1343 = vmatprep.mubr.f32.mxu0 %v993
    %1344 = vmatmul.mubr.f32.gmra.mrb[0].mxu0 %v992
    %v1345 = vpop.f32.mrb[0].mxu0
    %v1346 = vadd.f32 %v1142, %v1345
    %v1347 = vpop.f32.mrb[0].mxu0
    %1348 = vmatprep.mubr.f32.mxu0 %v995
    %1349 = vmatmul.mubr.f32.gmra.mrb[0].mxu0 %v994
    %v1350 = vpop.f32.mrb[0].mxu0
    %v1351 = vadd.f32 %v1142, %v1350
    %v1352 = vpop.f32.mrb[0].mxu0
    %1353 = vmatprep.mubr.f32.mxu0 %v997
    %1354 = vmatmul.mubr.f32.gmra.mrb[0].mxu0 %v996
    %v1355 = vpop.f32.mrb[0].mxu0
    %v1356 = vadd.f32 %v1142, %v1355
    %v1357 = vpop.f32.mrb[0].mxu0
    %1358 = vmatprep.mubr.f32.mxu0 %v999
    %1359 = vmatmul.mubr.f32.gmra.mrb[0].mxu0 %v998
    %v1360 = vpop.f32.mrb[0].mxu0
    %v1361 = vadd.f32 %v1142, %v1360
    %v1362 = vpop.f32.mrb[0].mxu0
    %1363 = vdwg.mxu0
    %v1364 = vxor.u32 %v1213, 2147483648
    %v1365 = vxor.u32 %v1219, 2147483648
    %v1366 = vxor.u32 %v1225, 2147483648
    %v1367 = vxor.u32 %v1231, 2147483648
    %v1368 = vxor.u32 %v1237, 2147483648
    %v1369 = vxor.u32 %v1243, 2147483648
    %v1370 = vxor.u32 %v1249, 2147483648
    %v1371 = vxor.u32 %v1255, 2147483648
    %v1372 = vmul.f32 %v1364, 1.442695
    %v1373 = vpow.pop %v1372
    %v1374 = vmul.f32 %v1365, 1.442695
    %v1375 = vpow.pop %v1374
    %v1376 = vmul.f32 %v1366, 1.442695
    %v1377 = vpow.pop %v1376
    %v1378 = vmul.f32 %v1367, 1.442695
    %v1379 = vpow.pop %v1378
    %v1380 = vmul.f32 %v1368, 1.442695
    %v1381 = vpow.pop %v1380
    %v1382 = vmul.f32 %v1369, 1.442695
    %v1383 = vpow.pop %v1382
    %v1384 = vmul.f32 %v1370, 1.442695
    %v1385 = vpow.pop %v1384
    %v1386 = vmul.f32 %v1371, 1.442695
    %v1387 = vpow.pop %v1386
    %v1388 = vadd.f32 %v1373, 1.0
    %v1389 = vadd.f32 %v1375, 1.0
    %v1390 = vadd.f32 %v1377, 1.0
    %v1391 = vadd.f32 %v1379, 1.0
    %v1392 = vadd.f32 %v1381, 1.0
    %v1393 = vadd.f32 %v1383, 1.0
    %v1394 = vadd.f32 %v1385, 1.0
    %v1395 = vadd.f32 %v1387, 1.0
    %v1396 = vrcp.pop %v1388
    %v1397 = vmul.f32 1.0, %v1396
    %v1398 = vrcp.pop %v1389
    %v1399 = vmul.f32 1.0, %v1398
    %v1400 = vrcp.pop %v1390
    %v1401 = vmul.f32 1.0, %v1400
    %v1402 = vrcp.pop %v1391
    %v1403 = vmul.f32 1.0, %v1402
    %v1404 = vrcp.pop %v1392
    %v1405 = vmul.f32 1.0, %v1404
    %v1406 = vrcp.pop %v1393
    %v1407 = vmul.f32 1.0, %v1406
    %v1408 = vrcp.pop %v1394
    %v1409 = vmul.f32 1.0, %v1408
    %v1410 = vrcp.pop %v1395
    %v1411 = vmul.f32 1.0, %v1410
    %v1412 = vtanh.pop %v1215
    %v1413 = vtanh.pop %v1221
    %v1414 = vtanh.pop %v1227
    %v1415 = vtanh.pop %v1233
    %v1416 = vtanh.pop %v1239
    %v1417 = vtanh.pop %v1245
    %v1418 = vtanh.pop %v1251
    %v1419 = vtanh.pop %v1257
    %v1420 = vxor.u32 %v1326, 2147483648
    %v1421 = vxor.u32 %v1331, 2147483648
    %v1422 = vxor.u32 %v1336, 2147483648
    %v1423 = vxor.u32 %v1341, 2147483648
    %v1424 = vxor.u32 %v1346, 2147483648
    %v1425 = vxor.u32 %v1351, 2147483648
    %v1426 = vxor.u32 %v1356, 2147483648
    %v1427 = vxor.u32 %v1361, 2147483648
    %v1428 = vmul.f32 %v1420, 1.442695
    %v1429 = vpow.pop %v1428
    %v1430 = vmul.f32 %v1421, 1.442695
    %v1431 = vpow.pop %v1430
    %v1432 = vmul.f32 %v1422, 1.442695
    %v1433 = vpow.pop %v1432
    %v1434 = vmul.f32 %v1423, 1.442695
    %v1435 = vpow.pop %v1434
    %v1436 = vmul.f32 %v1424, 1.442695
    %v1437 = vpow.pop %v1436
    %v1438 = vmul.f32 %v1425, 1.442695
    %v1439 = vpow.pop %v1438
    %v1440 = vmul.f32 %v1426, 1.442695
    %v1441 = vpow.pop %v1440
    %v1442 = vmul.f32 %v1427, 1.442695
    %v1443 = vpow.pop %v1442
    %v1444 = vadd.f32 %v1429, 1.0
    %v1445 = vadd.f32 %v1431, 1.0
    %v1446 = vadd.f32 %v1433, 1.0
    %v1447 = vadd.f32 %v1435, 1.0
    %v1448 = vadd.f32 %v1437, 1.0
    %v1449 = vadd.f32 %v1439, 1.0
    %v1450 = vadd.f32 %v1441, 1.0
    %v1451 = vadd.f32 %v1443, 1.0
    %v1452 = vrcp.pop %v1444
    %v1453 = vmul.f32 1.0, %v1452
    %v1454 = vrcp.pop %v1445
    %v1455 = vmul.f32 1.0, %v1454
    %v1456 = vrcp.pop %v1446
    %v1457 = vmul.f32 1.0, %v1456
    %v1458 = vrcp.pop %v1447
    %v1459 = vmul.f32 1.0, %v1458
    %v1460 = vrcp.pop %v1448
    %v1461 = vmul.f32 1.0, %v1460
    %v1462 = vrcp.pop %v1449
    %v1463 = vmul.f32 1.0, %v1462
    %v1464 = vrcp.pop %v1450
    %v1465 = vmul.f32 1.0, %v1464
    %v1466 = vrcp.pop %v1451
    %v1467 = vmul.f32 1.0, %v1466
    %v1468 = vmul.f32 %v1397, %v1412
    %v1469 = vmul.f32 %v1399, %v1413
    %v1470 = vmul.f32 %v1401, %v1414
    %v1471 = vmul.f32 %v1403, %v1415
    %v1472 = vmul.f32 %v1405, %v1416
    %v1473 = vmul.f32 %v1407, %v1417
    %v1474 = vmul.f32 %v1409, %v1418
    %v1475 = vmul.f32 %v1411, %v1419
    %v1476 = vtanh.pop %v1468
    %v1477 = vtanh.pop %v1469
    %v1478 = vtanh.pop %v1470
    %v1479 = vtanh.pop %v1471
    %v1480 = vtanh.pop %v1472
    %v1481 = vtanh.pop %v1473
    %v1482 = vtanh.pop %v1474
    %v1483 = vtanh.pop %v1475
    %v1484 = vmul.f32 %v1453, %v1476
    %v1485 = vmul.f32 %v1455, %v1477
    %v1486 = vmul.f32 %v1457, %v1478
    %v1487 = vmul.f32 %v1459, %v1479
    %v1488 = vmul.f32 %v1461, %v1480
    %v1489 = vmul.f32 %v1463, %v1481
    %v1490 = vmul.f32 %v1465, %v1482
    %v1491 = vmul.f32 %v1467, %v1483
    %v1492 = vld [vmem:[%s5] sm:$0xff]
    %v1493 = vld [vmem:[%s5 + $0x8] sm:$0xff]
    %v1494 = vld [vmem:[%s5 + $0x28] sm:$0xff]
    %v1495 = vld [vmem:[%s5 + $0x30] sm:$0xff]
    %v1496 = vld [vmem:[%s5 + $0x50] sm:$0xff]
    %v1497 = vld [vmem:[%s5 + $0x58] sm:$0xff]
    %v1498 = vld [vmem:[%s5 + $0x78] sm:$0xff]
    %v1499 = vld [vmem:[%s5 + $0x80] sm:$0xff]
    %v1500 = vld [vmem:[%s5 + $0xa0] sm:$0xff]
    %v1501 = vld [vmem:[%s5 + $0xa8] sm:$0xff]
    %v1502 = vld [vmem:[%s5 + $0xc8] sm:$0xff]
    %v1503 = vld [vmem:[%s5 + $0xd0] sm:$0xff]
    %v1504 = vld [vmem:[%s5 + $0xf0] sm:$0xff]
    %v1505 = vld [vmem:[%s5 + $0xf8] sm:$0xff]
    %v1506 = vld [vmem:[%s5 + $0x118] sm:$0xff]
    %v1507 = vld [vmem:[%s5 + $0x120] sm:$0xff]
    %v1508 = vld [vmem:[%s5 + $0x140] sm:$0xff]
    %v1509 = vld [vmem:[%s5 + $0x148] sm:$0xff]
    %v1510 = vld [vmem:[%s5 + $0x168] sm:$0xff]
    %v1511 = vld [vmem:[%s5 + $0x170] sm:$0xff]
    %v1512 = vld [vmem:[%s5 + $0x190] sm:$0xff]
    %v1513 = vld [vmem:[%s5 + $0x198] sm:$0xff]
    %v1514 = vld [vmem:[%s5 + $0x1b8] sm:$0xff]
    %v1515 = vld [vmem:[%s5 + $0x1c0] sm:$0xff]
    %v1516 = vld [vmem:[%s5 + $0x1e0] sm:$0xff]
    %v1517 = vld [vmem:[%s5 + $0x1e8] sm:$0xff]
    %v1518 = vld [vmem:[%s5 + $0x208] sm:$0xff]
    %v1519 = vld [vmem:[%s5 + $0x210] sm:$0xff]
    %v1520 = vld [vmem:[%s5 + $0x230] sm:$0xff]
    %v1521 = vld [vmem:[%s5 + $0x238] sm:$0xff]
    %v1522 = vld [vmem:[%s5 + $0x258] sm:$0xff]
    %v1523 = vld [vmem:[%s5 + $0x260] sm:$0xff]
    %v1524 = vld [vmem:[%s5 + $0x280] sm:$0xff]
    %v1525 = vld [vmem:[%s5 + $0x288] sm:$0xff]
    %v1526 = vld [vmem:[%s5 + $0x2a8] sm:$0xff]
    %v1527 = vld [vmem:[%s5 + $0x2b0] sm:$0xff]
    %v1528 = vld [vmem:[%s5 + $0x2d0] sm:$0xff]
    %v1529 = vld [vmem:[%s5 + $0x2d8] sm:$0xff]
    %v1530 = vld [vmem:[%s5 + $0x2f8] sm:$0xff]
    %v1531 = vld [vmem:[%s5 + $0x300] sm:$0xff]
    %v1532 = vld [vmem:[%s5 + $0x320] sm:$0xff]
    %v1533 = vld [vmem:[%s5 + $0x328] sm:$0xff]
    %v1534 = vld [vmem:[%s5 + $0x348] sm:$0xff]
    %v1535 = vld [vmem:[%s5 + $0x350] sm:$0xff]
    %v1536 = vld [vmem:[%s5 + $0x370] sm:$0xff]
    %v1537 = vld [vmem:[%s5 + $0x378] sm:$0xff]
    %v1538 = vld [vmem:[%s5 + $0x398] sm:$0xff]
    %v1539 = vld [vmem:[%s5 + $0x3a0] sm:$0xff]
    %v1540 = vld [vmem:[%s5 + $0x3c0] sm:$0xff]
    %v1541 = vld [vmem:[%s5 + $0x3c8] sm:$0xff]
    %v1542 = vld [vmem:[%s5 + $0x3e8] sm:$0xff]
    %v1543 = vld [vmem:[%s5 + $0x3f0] sm:$0xff]
    %v1544 = vld [vmem:[%s5 + $0x410] sm:$0xff]
    %v1545 = vld [vmem:[%s5 + $0x418] sm:$0xff]
    %v1546 = vld [vmem:[%s5 + $0x438] sm:$0xff]
    %v1547 = vld [vmem:[%s5 + $0x440] sm:$0xff]
    %v1548 = vld [vmem:[%s5 + $0x460] sm:$0xff]
    %v1549 = vld [vmem:[%s5 + $0x468] sm:$0xff]
    %v1550 = vld [vmem:[%s5 + $0x488] sm:$0xff]
    %v1551 = vld [vmem:[%s5 + $0x490] sm:$0xff]
    %v1552 = vld [vmem:[%s5 + $0x4b0] sm:$0xff]
    %v1553 = vld [vmem:[%s5 + $0x4b8] sm:$0xff]
    %v1554 = vld [vmem:[%s5 + $0x4d8] sm:$0xff]
    %v1555 = vld [vmem:[%s5 + $0x4e0] sm:$0xff]
    %v1556 = vld [vmem:[%s5 + $0x500] sm:$0xff]
    %v1557 = vld [vmem:[%s5 + $0x508] sm:$0xff]
    %v1558 = vld [vmem:[%s5 + $0x528] sm:$0xff]
    %v1559 = vld [vmem:[%s5 + $0x530] sm:$0xff]
    %v1560 = vld [vmem:[%s5 + $0x550] sm:$0xff]
    %v1561 = vld [vmem:[%s5 + $0x558] sm:$0xff]
    %v1562 = vld [vmem:[%s5 + $0x578] sm:$0xff]
    %v1563 = vld [vmem:[%s5 + $0x580] sm:$0xff]
    %v1564 = vld [vmem:[%s5 + $0x5a0] sm:$0xff]
    %v1565 = vld [vmem:[%s5 + $0x5a8] sm:$0xff]
    %v1566 = vld [vmem:[%s5 + $0x5c8] sm:$0xff]
    %v1567 = vld [vmem:[%s5 + $0x5d0] sm:$0xff]
    %v1568 = vld [vmem:[%s5 + $0x5f0] sm:$0xff]
    %v1569 = vld [vmem:[%s5 + $0x5f8] sm:$0xff]
    %v1570 = vld [vmem:[%s5 + $0x618] sm:$0xff]
    %v1571 = vld [vmem:[%s5 + $0x620] sm:$0xff]
    %v1572 = vld [vmem:[%s5 + $0x640] sm:$0xff]
    %v1573 = vld [vmem:[%s5 + $0x648] sm:$0xff]
    %v1574 = vld [vmem:[%s5 + $0x668] sm:$0xff]
    %v1575 = vld [vmem:[%s5 + $0x670] sm:$0xff]
    %v1576 = vld [vmem:[%s5 + $0x690] sm:$0xff]
    %v1577 = vld [vmem:[%s5 + $0x698] sm:$0xff]
    %v1578 = vld [vmem:[%s5 + $0x6b8] sm:$0xff]
    %v1579 = vld [vmem:[%s5 + $0x6c0] sm:$0xff]
    %v1580 = vld [vmem:[%s5 + $0x6e0] sm:$0xff]
    %v1581 = vld [vmem:[%s5 + $0x6e8] sm:$0xff]
    %v1582 = vld [vmem:[%s5 + $0x708] sm:$0xff]
    %v1583 = vld [vmem:[%s5 + $0x710] sm:$0xff]
    %v1584 = vld [vmem:[%s5 + $0x730] sm:$0xff]
    %v1585 = vld [vmem:[%s5 + $0x738] sm:$0xff]
    %v1586 = vld [vmem:[%s5 + $0x758] sm:$0xff]
    %v1587 = vld [vmem:[%s5 + $0x760] sm:$0xff]
    %v1588 = vld [vmem:[%s5 + $0x780] sm:$0xff]
    %v1589 = vld [vmem:[%s5 + $0x788] sm:$0xff]
    %v1590 = vld [vmem:[%s5 + $0x7a8] sm:$0xff]
    %v1591 = vld [vmem:[%s5 + $0x7b0] sm:$0xff]
    %v1592 = vld [vmem:[%s5 + $0x7d0] sm:$0xff]
    %v1593 = vld [vmem:[%s5 + $0x7d8] sm:$0xff]
    %v1594 = vld [vmem:[%s5 + $0x7f8] sm:$0xff]
    %v1595 = vld [vmem:[%s5 + $0x800] sm:$0xff]
    %v1596 = vld [vmem:[%s5 + $0x820] sm:$0xff]
    %v1597 = vld [vmem:[%s5 + $0x828] sm:$0xff]
    %v1598 = vld [vmem:[%s5 + $0x848] sm:$0xff]
    %v1599 = vld [vmem:[%s5 + $0x850] sm:$0xff]
    %v1600 = vld [vmem:[%s5 + $0x870] sm:$0xff]
    %v1601 = vld [vmem:[%s5 + $0x878] sm:$0xff]
    %v1602 = vld [vmem:[%s5 + $0x898] sm:$0xff]
    %v1603 = vld [vmem:[%s5 + $0x8a0] sm:$0xff]
    %v1604 = vld [vmem:[%s5 + $0x8c0] sm:$0xff]
    %v1605 = vld [vmem:[%s5 + $0x8c8] sm:$0xff]
    %v1606 = vld [vmem:[%s5 + $0x8e8] sm:$0xff]
    %v1607 = vld [vmem:[%s5 + $0x8f0] sm:$0xff]
    %v1608 = vld [vmem:[%s5 + $0x910] sm:$0xff]
    %v1609 = vld [vmem:[%s5 + $0x918] sm:$0xff]
    %v1610 = vld [vmem:[%s5 + $0x938] sm:$0xff]
    %v1611 = vld [vmem:[%s5 + $0x940] sm:$0xff]
    %v1612 = vld [vmem:[%s5 + $0x960] sm:$0xff]
    %v1613 = vld [vmem:[%s5 + $0x968] sm:$0xff]
    %v1614 = vld [vmem:[%s5 + $0x988] sm:$0xff]
    %v1615 = vld [vmem:[%s5 + $0x990] sm:$0xff]
    %v1616 = vld [vmem:[%s5 + $0x9b0] sm:$0xff]
    %v1617 = vld [vmem:[%s5 + $0x9b8] sm:$0xff]
    %v1618 = vld [vmem:[%s5 + $0x9d8] sm:$0xff]
    %v1619 = vld [vmem:[%s5 + $0x9e0] sm:$0xff]
    %s1620 = scalar_lea.vmem %s7, 3
    %v1621 = vld [vmem:[%s1620] ss:$8 sm:$0x3]
    %v1623 = vlaneseq
    %v1624 = vshrl.u32 %v1623, 7
    %v1625 = vsub.s32 0, %v1624
    %v1626 = vrot.slane %v1621, %v1625
    %v1627 = vlaneseq
    %v1628 = vshrl.u32 %v1627, 7
    %v1629 = vsub.s32 1, %v1628
    %v1630 = vrot.slane %v1621, %v1629
    %1633 = vmatprep.subr.mxu0 %v1493
    %1634 = vmatpush1.msra.mxu0 %v1492
    %1635 = vmatprep.subr.mxu0 %v1495
    %1636 = vmatpush1.msra.mxu0 %v1494
    %1637 = vmatprep.subr.mxu0 %v1497
    %1638 = vmatpush1.msra.mxu0 %v1496
    %1639 = vmatprep.subr.mxu0 %v1499
    %1640 = vmatpush1.msra.mxu0 %v1498
    %1641 = vmatprep.subr.mxu0 %v1501
    %1642 = vmatpush1.msra.mxu0 %v1500
    %1643 = vmatprep.subr.mxu0 %v1503
    %1644 = vmatpush1.msra.mxu0 %v1502
    %1645 = vmatprep.subr.mxu0 %v1505
    %1646 = vmatpush1.msra.mxu0 %v1504
    %1647 = vmatprep.subr.mxu0 %v1507
    %1648 = vmatpush1.msra.mxu0 %v1506
    %1649 = vmatprep.subr.mxu0 %v1509
    %1650 = vmatpush1.msra.mxu0 %v1508
    %1651 = vmatprep.subr.mxu0 %v1511
    %1652 = vmatpush1.msra.mxu0 %v1510
    %1653 = vmatprep.subr.mxu0 %v1513
    %1654 = vmatpush1.msra.mxu0 %v1512
    %1655 = vmatprep.subr.mxu0 %v1515
    %1656 = vmatpush1.msra.mxu0 %v1514
    %1657 = vmatprep.subr.mxu0 %v1517
    %1658 = vmatpush1.msra.mxu0 %v1516
    %1659 = vmatprep.subr.mxu0 %v1519
    %1660 = vmatpush1.msra.mxu0 %v1518
    %1661 = vmatprep.subr.mxu0 %v1521
    %1662 = vmatpush1.msra.mxu0 %v1520
    %1663 = vmatprep.subr.mxu0 %v1523
    %1664 = vmatpush1.msra.mxu0 %v1522
    %1665 = vmatprep.subr.mxu0 %v1525
    %1666 = vmatpush1.msra.mxu0 %v1524
    %1667 = vmatprep.subr.mxu0 %v1527
    %1668 = vmatpush1.msra.mxu0 %v1526
    %1669 = vmatprep.subr.mxu0 %v1529
    %1670 = vmatpush1.msra.mxu0 %v1528
    %1671 = vmatprep.subr.mxu0 %v1531
    %1672 = vmatpush1.msra.mxu0 %v1530
    %1673 = vmatprep.subr.mxu0 %v1533
    %1674 = vmatpush1.msra.mxu0 %v1532
    %1675 = vmatprep.subr.mxu0 %v1535
    %1676 = vmatpush1.msra.mxu0 %v1534
    %1677 = vmatprep.subr.mxu0 %v1537
    %1678 = vmatpush1.msra.mxu0 %v1536
    %1679 = vmatprep.subr.mxu0 %v1539
    %1680 = vmatpush1.msra.mxu0 %v1538
    %1681 = vmatprep.subr.mxu0 %v1541
    %1682 = vmatpush1.msra.mxu0 %v1540
    %1683 = vmatprep.subr.mxu0 %v1543
    %1684 = vmatpush1.msra.mxu0 %v1542
    %1685 = vmatprep.subr.mxu0 %v1545
    %1686 = vmatpush1.msra.mxu0 %v1544
    %1687 = vmatprep.subr.mxu0 %v1547
    %1688 = vmatpush1.msra.mxu0 %v1546
    %1689 = vmatprep.subr.mxu0 %v1549
    %1690 = vmatpush1.msra.mxu0 %v1548
    %1691 = vmatprep.subr.mxu0 %v1551
    %1692 = vmatpush1.msra.mxu0 %v1550
    %1693 = vmatprep.subr.mxu0 %v1553
    %1694 = vmatpush1.msra.mxu0 %v1552
    %1695 = vmatprep.subr.mxu0 %v1555
    %1696 = vmatpush1.msra.mxu0 %v1554
    %1697 = vmatprep.mubr.f32.mxu0 %v1001
    %1698 = vmatmul.mubr.f32.gmra.mrb[0].mxu0 %v1000
    %v1699 = vpop.f32.mrb[0].mxu0
    %v1700 = vadd.f32 %v1626, %v1699
    %v1701 = vpop.f32.mrb[0].mxu0
    %v1702 = vadd.f32 %v1630, %v1701
    %1703 = vmatprep.mubr.f32.mxu0 %v1005
    %1704 = vmatmul.mubr.f32.gmra.mrb[0].mxu0 %v1004
    %v1705 = vpop.f32.mrb[0].mxu0
    %v1706 = vadd.f32 %v1626, %v1705
    %v1707 = vpop.f32.mrb[0].mxu0
    %v1708 = vadd.f32 %v1630, %v1707
    %1709 = vmatprep.mubr.f32.mxu0 %v1009
    %1710 = vmatmul.mubr.f32.gmra.mrb[0].mxu0 %v1008
    %v1711 = vpop.f32.mrb[0].mxu0
    %v1712 = vadd.f32 %v1626, %v1711
    %v1713 = vpop.f32.mrb[0].mxu0
    %v1714 = vadd.f32 %v1630, %v1713
    %1715 = vmatprep.mubr.f32.mxu0 %v1013
    %1716 = vmatmul.mubr.f32.gmra.mrb[0].mxu0 %v1012
    %v1717 = vpop.f32.mrb[0].mxu0
    %v1718 = vadd.f32 %v1626, %v1717
    %v1719 = vpop.f32.mrb[0].mxu0
    %v1720 = vadd.f32 %v1630, %v1719
    %1721 = vmatprep.mubr.f32.mxu0 %v1017
    %1722 = vmatmul.mubr.f32.gmra.mrb[0].mxu0 %v1016
    %v1723 = vpop.f32.mrb[0].mxu0
    %v1724 = vadd.f32 %v1626, %v1723
    %v1725 = vpop.f32.mrb[0].mxu0
    %v1726 = vadd.f32 %v1630, %v1725
    %1727 = vmatprep.mubr.f32.mxu0 %v1021
    %1728 = vmatmul.mubr.f32.gmra.mrb[0].mxu0 %v1020
    %v1729 = vpop.f32.mrb[0].mxu0
    %v1730 = vadd.f32 %v1626, %v1729
    %v1731 = vpop.f32.mrb[0].mxu0
    %v1732 = vadd.f32 %v1630, %v1731
    %1733 = vmatprep.mubr.f32.mxu0 %v1025
    %1734 = vmatmul.mubr.f32.gmra.mrb[0].mxu0 %v1024
    %v1735 = vpop.f32.mrb[0].mxu0
    %v1736 = vadd.f32 %v1626, %v1735
    %v1737 = vpop.f32.mrb[0].mxu0
    %v1738 = vadd.f32 %v1630, %v1737
    %1739 = vmatprep.mubr.f32.mxu0 %v1029
    %1740 = vmatmul.mubr.f32.gmra.mrb[0].mxu0 %v1028
    %v1741 = vpop.f32.mrb[0].mxu0
    %v1742 = vadd.f32 %v1626, %v1741
    %v1743 = vpop.f32.mrb[0].mxu0
    %v1744 = vadd.f32 %v1630, %v1743
    %1745 = vdwg.mxu0
    %1746 = vmatprep.subr.mxu0 %v1557
    %1747 = vmatpush1.msra.mxu0 %v1556
    %1748 = vmatprep.subr.mxu0 %v1559
    %1749 = vmatpush1.msra.mxu0 %v1558
    %1750 = vmatprep.subr.mxu0 %v1561
    %1751 = vmatpush1.msra.mxu0 %v1560
    %1752 = vmatprep.subr.mxu0 %v1563
    %1753 = vmatpush1.msra.mxu0 %v1562
    %1754 = vmatprep.subr.mxu0 %v1565
    %1755 = vmatpush1.msra.mxu0 %v1564
    %1756 = vmatprep.subr.mxu0 %v1567
    %1757 = vmatpush1.msra.mxu0 %v1566
    %1758 = vmatprep.subr.mxu0 %v1569
    %1759 = vmatpush1.msra.mxu0 %v1568
    %1760 = vmatprep.subr.mxu0 %v1571
    %1761 = vmatpush1.msra.mxu0 %v1570
    %1762 = vmatprep.subr.mxu0 %v1573
    %1763 = vmatpush1.msra.mxu0 %v1572
    %1764 = vmatprep.subr.mxu0 %v1575
    %1765 = vmatpush1.msra.mxu0 %v1574
    %1766 = vmatprep.subr.mxu0 %v1577
    %1767 = vmatpush1.msra.mxu0 %v1576
    %1768 = vmatprep.subr.mxu0 %v1579
    %1769 = vmatpush1.msra.mxu0 %v1578
    %1770 = vmatprep.subr.mxu0 %v1581
    %1771 = vmatpush1.msra.mxu0 %v1580
    %1772 = vmatprep.subr.mxu0 %v1583
    %1773 = vmatpush1.msra.mxu0 %v1582
    %1774 = vmatprep.subr.mxu0 %v1585
    %1775 = vmatpush1.msra.mxu0 %v1584
    %1776 = vmatprep.subr.mxu0 %v1587
    %1777 = vmatpush1.msra.mxu0 %v1586
    %1778 = vmatprep.subr.mxu0 %v1589
    %1779 = vmatpush1.msra.mxu0 %v1588
    %1780 = vmatprep.subr.mxu0 %v1591
    %1781 = vmatpush1.msra.mxu0 %v1590
    %1782 = vmatprep.subr.mxu0 %v1593
    %1783 = vmatpush1.msra.mxu0 %v1592
    %1784 = vmatprep.subr.mxu0 %v1595
    %1785 = vmatpush1.msra.mxu0 %v1594
    %1786 = vmatprep.subr.mxu0 %v1597
    %1787 = vmatpush1.msra.mxu0 %v1596
    %1788 = vmatprep.subr.mxu0 %v1599
    %1789 = vmatpush1.msra.mxu0 %v1598
    %1790 = vmatprep.subr.mxu0 %v1601
    %1791 = vmatpush1.msra.mxu0 %v1600
    %1792 = vmatprep.subr.mxu0 %v1603
    %1793 = vmatpush1.msra.mxu0 %v1602
    %1794 = vmatprep.subr.mxu0 %v1605
    %1795 = vmatpush1.msra.mxu0 %v1604
    %1796 = vmatprep.subr.mxu0 %v1607
    %1797 = vmatpush1.msra.mxu0 %v1606
    %1798 = vmatprep.subr.mxu0 %v1609
    %1799 = vmatpush1.msra.mxu0 %v1608
    %1800 = vmatprep.subr.mxu0 %v1611
    %1801 = vmatpush1.msra.mxu0 %v1610
    %1802 = vmatprep.subr.mxu0 %v1613
    %1803 = vmatpush1.msra.mxu0 %v1612
    %1804 = vmatprep.subr.mxu0 %v1615
    %1805 = vmatpush1.msra.mxu0 %v1614
    %1806 = vmatprep.subr.mxu0 %v1617
    %1807 = vmatpush1.msra.mxu0 %v1616
    %1808 = vmatprep.subr.mxu0 %v1619
    %1809 = vmatpush1.msra.mxu0 %v1618
    %1810 = vmatprep.mubr.f32.mxu0 %v1003
    %1811 = vmatmul.mubr.f32.gmra.mrb[0].mxu0 %v1002
    %v1812 = vpop.f32.mrb[0].mxu0
    %v1813 = vadd.f32 %v1700, %v1812
    %v1814 = vpop.f32.mrb[0].mxu0
    %v1815 = vadd.f32 %v1702, %v1814
    %1816 = vmatprep.mubr.f32.mxu0 %v1007
    %1817 = vmatmul.mubr.f32.gmra.mrb[0].mxu0 %v1006
    %v1818 = vpop.f32.mrb[0].mxu0
    %v1819 = vadd.f32 %v1706, %v1818
    %v1820 = vpop.f32.mrb[0].mxu0
    %v1821 = vadd.f32 %v1708, %v1820
    %1822 = vmatprep.mubr.f32.mxu0 %v1011
    %1823 = vmatmul.mubr.f32.gmra.mrb[0].mxu0 %v1010
    %v1824 = vpop.f32.mrb[0].mxu0
    %v1825 = vadd.f32 %v1712, %v1824
    %v1826 = vpop.f32.mrb[0].mxu0
    %v1827 = vadd.f32 %v1714, %v1826
    %1828 = vmatprep.mubr.f32.mxu0 %v1015
    %1829 = vmatmul.mubr.f32.gmra.mrb[0].mxu0 %v1014
    %v1830 = vpop.f32.mrb[0].mxu0
    %v1831 = vadd.f32 %v1718, %v1830
    %v1832 = vpop.f32.mrb[0].mxu0
    %v1833 = vadd.f32 %v1720, %v1832
    %1834 = vmatprep.mubr.f32.mxu0 %v1019
    %1835 = vmatmul.mubr.f32.gmra.mrb[0].mxu0 %v1018
    %v1836 = vpop.f32.mrb[0].mxu0
    %v1837 = vadd.f32 %v1724, %v1836
    %v1838 = vpop.f32.mrb[0].mxu0
    %v1839 = vadd.f32 %v1726, %v1838
    %1840 = vmatprep.mubr.f32.mxu0 %v1023
    %1841 = vmatmul.mubr.f32.gmra.mrb[0].mxu0 %v1022
    %v1842 = vpop.f32.mrb[0].mxu0
    %v1843 = vadd.f32 %v1730, %v1842
    %v1844 = vpop.f32.mrb[0].mxu0
    %v1845 = vadd.f32 %v1732, %v1844
    %1846 = vmatprep.mubr.f32.mxu0 %v1027
    %1847 = vmatmul.mubr.f32.gmra.mrb[0].mxu0 %v1026
    %v1848 = vpop.f32.mrb[0].mxu0
    %v1849 = vadd.f32 %v1736, %v1848
    %v1850 = vpop.f32.mrb[0].mxu0
    %v1851 = vadd.f32 %v1738, %v1850
    %1852 = vmatprep.mubr.f32.mxu0 %v1031
    %1853 = vmatmul.mubr.f32.gmra.mrb[0].mxu0 %v1030
    %v1854 = vpop.f32.mrb[0].mxu0
    %v1855 = vadd.f32 %v1742, %v1854
    %v1856 = vpop.f32.mrb[0].mxu0
    %v1857 = vadd.f32 %v1744, %v1856
    %1858 = vdwg.mxu0
    %v1859 = vmax.f32 %v1813, 0.0
    %v1860 = vmax.f32 %v1815, 0.0
    %v1861 = vmax.f32 %v1819, 0.0
    %v1862 = vmax.f32 %v1821, 0.0
    %v1863 = vmax.f32 %v1825, 0.0
    %v1864 = vmax.f32 %v1827, 0.0
    %v1865 = vmax.f32 %v1831, 0.0
    %v1866 = vmax.f32 %v1833, 0.0
    %v1867 = vmax.f32 %v1837, 0.0
    %v1868 = vmax.f32 %v1839, 0.0
    %v1869 = vmax.f32 %v1843, 0.0
    %v1870 = vmax.f32 %v1845, 0.0
    %v1871 = vmax.f32 %v1849, 0.0
    %v1872 = vmax.f32 %v1851, 0.0
    %v1873 = vmax.f32 %v1855, 0.0
    %v1874 = vmax.f32 %v1857, 0.0
    %v1875 = vld [vmem:[%s4] sm:$0xff]
    %v1876 = vld [vmem:[%s4 + $0x8] sm:$0xff]
    %v1877 = vld [vmem:[%s4 + $0x10] sm:$0xff]
    %v1878 = vld [vmem:[%s4 + $0x48] sm:$0xff]
    %v1879 = vld [vmem:[%s4 + $0x50] sm:$0xff]
    %v1880 = vld [vmem:[%s4 + $0x58] sm:$0xff]
    %v1881 = vld [vmem:[%s4 + $0x90] sm:$0xff]
    %v1882 = vld [vmem:[%s4 + $0x98] sm:$0xff]
    %v1883 = vld [vmem:[%s4 + $0xa0] sm:$0xff]
    %v1884 = vld [vmem:[%s4 + $0xd8] sm:$0xff]
    %v1885 = vld [vmem:[%s4 + $0xe0] sm:$0xff]
    %v1886 = vld [vmem:[%s4 + $0xe8] sm:$0xff]
    %v1887 = vld [vmem:[%s4 + $0x120] sm:$0xff]
    %v1888 = vld [vmem:[%s4 + $0x128] sm:$0xff]
    %v1889 = vld [vmem:[%s4 + $0x130] sm:$0xff]
    %v1890 = vld [vmem:[%s4 + $0x168] sm:$0xff]
    %v1891 = vld [vmem:[%s4 + $0x170] sm:$0xff]
    %v1892 = vld [vmem:[%s4 + $0x178] sm:$0xff]
    %v1893 = vld [vmem:[%s4 + $0x1b0] sm:$0xff]
    %v1894 = vld [vmem:[%s4 + $0x1b8] sm:$0xff]
    %v1895 = vld [vmem:[%s4 + $0x1c0] sm:$0xff]
    %v1896 = vld [vmem:[%s4 + $0x1f8] sm:$0xff]
    %v1897 = vld [vmem:[%s4 + $0x200] sm:$0xff]
    %v1898 = vld [vmem:[%s4 + $0x208] sm:$0xff]
    %v1899 = vld [vmem:[%s4 + $0x240] sm:$0xff]
    %v1900 = vld [vmem:[%s4 + $0x248] sm:$0xff]
    %v1901 = vld [vmem:[%s4 + $0x250] sm:$0xff]
    %v1902 = vld [vmem:[%s4 + $0x288] sm:$0xff]
    %v1903 = vld [vmem:[%s4 + $0x290] sm:$0xff]
    %v1904 = vld [vmem:[%s4 + $0x298] sm:$0xff]
    %v1905 = vld [vmem:[%s4 + $0x2d0] sm:$0xff]
    %v1906 = vld [vmem:[%s4 + $0x2d8] sm:$0xff]
    %v1907 = vld [vmem:[%s4 + $0x2e0] sm:$0xff]
    %v1908 = vld [vmem:[%s4 + $0x318] sm:$0xff]
    %v1909 = vld [vmem:[%s4 + $0x320] sm:$0xff]
    %v1910 = vld [vmem:[%s4 + $0x328] sm:$0xff]
    %v1911 = vld [vmem:[%s4 + $0x360] sm:$0xff]
    %v1912 = vld [vmem:[%s4 + $0x368] sm:$0xff]
    %v1913 = vld [vmem:[%s4 + $0x370] sm:$0xff]
    %v1914 = vld [vmem:[%s4 + $0x3a8] sm:$0xff]
    %v1915 = vld [vmem:[%s4 + $0x3b0] sm:$0xff]
    %v1916 = vld [vmem:[%s4 + $0x3b8] sm:$0xff]
    %v1917 = vld [vmem:[%s4 + $0x3f0] sm:$0xff]
    %v1918 = vld [vmem:[%s4 + $0x3f8] sm:$0xff]
    %v1919 = vld [vmem:[%s4 + $0x400] sm:$0xff]
    %v1920 = vld [vmem:[%s4 + $0x438] sm:$0xff]
    %v1921 = vld [vmem:[%s4 + $0x440] sm:$0xff]
    %v1922 = vld [vmem:[%s4 + $0x448] sm:$0xff]
    %s1923 = scalar_lea.vmem %s7, 2
    %v1924 = vld [vmem:[%s1923] ss:$8 sm:$0x7]
    %v1926 = vlaneseq
    %v1927 = vshrl.u32 %v1926, 7
    %v1928 = vsub.s32 0, %v1927
    %v1929 = vrot.slane %v1924, %v1928
    %v1930 = vlaneseq
    %v1931 = vshrl.u32 %v1930, 7
    %v1932 = vsub.s32 1, %v1931
    %v1933 = vrot.slane %v1924, %v1932
    %v1934 = vlaneseq
    %v1935 = vshrl.u32 %v1934, 7
    %v1936 = vsub.s32 2, %v1935
    %v1937 = vrot.slane %v1924, %v1936
    %1941 = vmatprep.subr.mxu0 %v1876
    %1942 = vmatpush1.msra.mxu0 %v1875
    %1943 = vmatprep.subr.mxu0 %v1879
    %1944 = vmatpush1.msra.mxu0 %v1878
    %1945 = vmatprep.subr.mxu0 %v1882
    %1946 = vmatpush1.msra.mxu0 %v1881
    %1947 = vmatprep.subr.mxu0 %v1885
    %1948 = vmatpush1.msra.mxu0 %v1884
    %1949 = vmatprep.subr.mxu0 %v1888
    %1950 = vmatpush1.msra.mxu0 %v1887
    %1951 = vmatprep.subr.mxu0 %v1891
    %1952 = vmatpush1.msra.mxu0 %v1890
    %1953 = vmatprep.subr.mxu0 %v1894
    %1954 = vmatpush1.msra.mxu0 %v1893
    %1955 = vmatprep.subr.mxu0 %v1897
    %1956 = vmatpush1.msra.mxu0 %v1896
    %1957 = vmatprep.subr.mxu0 %v1900
    %1958 = vmatpush1.msra.mxu0 %v1899
    %1959 = vmatprep.subr.mxu0 %v1903
    %1960 = vmatpush1.msra.mxu0 %v1902
    %1961 = vmatprep.subr.mxu0 %v1906
    %1962 = vmatpush1.msra.mxu0 %v1905
    %1963 = vmatprep.subr.mxu0 %v1909
    %1964 = vmatpush1.msra.mxu0 %v1908
    %1965 = vmatprep.subr.mxu0 %v1912
    %1966 = vmatpush1.msra.mxu0 %v1911
    %1967 = vmatprep.subr.mxu0 %v1915
    %1968 = vmatpush1.msra.mxu0 %v1914
    %1969 = vmatprep.subr.mxu0 %v1918
    %1970 = vmatpush1.msra.mxu0 %v1917
    %1971 = vmatprep.subr.mxu0 %v1921
    %1972 = vmatpush1.msra.mxu0 %v1920
    %1973 = vmatprep.subr.mxu0 0.0
    %1974 = vmatpush1.msra.mxu0 0.0
    %1975 = vmatprep.subr.mxu0 0.0
    %1976 = vmatpush1.msra.mxu0 0.0
    %1977 = vmatprep.subr.mxu0 0.0
    %1978 = vmatpush1.msra.mxu0 0.0
    %1979 = vmatprep.subr.mxu0 0.0
    %1980 = vmatpush1.msra.mxu0 0.0
    %1981 = vmatprep.subr.mxu0 0.0
    %1982 = vmatpush1.msra.mxu0 0.0
    %1983 = vmatprep.subr.mxu0 0.0
    %1984 = vmatpush1.msra.mxu0 0.0
    %1985 = vmatprep.subr.mxu0 0.0
    %1986 = vmatpush1.msra.mxu0 0.0
    %1987 = vmatprep.subr.mxu0 0.0
    %1988 = vmatpush1.msra.mxu0 0.0
    %1989 = vmatprep.subr.mxu0 0.0
    %1990 = vmatpush1.msra.mxu0 0.0
    %1991 = vmatprep.subr.mxu0 0.0
    %1992 = vmatpush1.msra.mxu0 0.0
    %1993 = vmatprep.subr.mxu0 0.0
    %1994 = vmatpush1.msra.mxu0 0.0
    %1995 = vmatprep.subr.mxu0 0.0
    %1996 = vmatpush1.msra.mxu0 0.0
    %1997 = vmatprep.subr.mxu0 0.0
    %1998 = vmatpush1.msra.mxu0 0.0
    %1999 = vmatprep.subr.mxu0 0.0
    %2000 = vmatpush1.msra.mxu0 0.0
    %2001 = vmatprep.subr.mxu0 0.0
    %2002 = vmatpush1.msra.mxu0 0.0
    %2003 = vmatprep.subr.mxu0 0.0
    %2004 = vmatpush1.msra.mxu0 0.0
    %2005 = vmatprep.mubr.f32.mxu0 0.0
    %2006 = vmatmul.mubr.f32.gmra.mrb[0].mxu0 %v1484
    %v2007 = vpop.f32.mrb[0].mxu0
    %v2008 = vadd.f32 %v1929, %v2007
    %v2009 = vpop.f32.mrb[0].mxu0
    %v2010 = vadd.f32 %v1933, %v2009
    %2011 = vmatprep.mubr.f32.mxu0 0.0
    %2012 = vmatmul.mubr.f32.gmra.mrb[0].mxu0 %v1485
    %v2013 = vpop.f32.mrb[0].mxu0
    %v2014 = vadd.f32 %v1929, %v2013
    %v2015 = vpop.f32.mrb[0].mxu0
    %v2016 = vadd.f32 %v1933, %v2015
    %2017 = vmatprep.mubr.f32.mxu0 0.0
    %2018 = vmatmul.mubr.f32.gmra.mrb[0].mxu0 %v1486
    %v2019 = vpop.f32.mrb[0].mxu0
    %v2020 = vadd.f32 %v1929, %v2019
    %v2021 = vpop.f32.mrb[0].mxu0
    %v2022 = vadd.f32 %v1933, %v2021
    %2023 = vmatprep.mubr.f32.mxu0 0.0
    %2024 = vmatmul.mubr.f32.gmra.mrb[0].mxu0 %v1487
    %v2025 = vpop.f32.mrb[0].mxu0
    %v2026 = vadd.f32 %v1929, %v2025
    %v2027 = vpop.f32.mrb[0].mxu0
    %v2028 = vadd.f32 %v1933, %v2027
    %2029 = vmatprep.mubr.f32.mxu0 0.0
    %2030 = vmatmul.mubr.f32.gmra.mrb[0].mxu0 %v1488
    %v2031 = vpop.f32.mrb[0].mxu0
    %v2032 = vadd.f32 %v1929, %v2031
    %v2033 = vpop.f32.mrb[0].mxu0
    %v2034 = vadd.f32 %v1933, %v2033
    %2035 = vmatprep.mubr.f32.mxu0 0.0
    %2036 = vmatmul.mubr.f32.gmra.mrb[0].mxu0 %v1489
    %v2037 = vpop.f32.mrb[0].mxu0
    %v2038 = vadd.f32 %v1929, %v2037
    %v2039 = vpop.f32.mrb[0].mxu0
    %v2040 = vadd.f32 %v1933, %v2039
    %2041 = vmatprep.mubr.f32.mxu0 0.0
    %2042 = vmatmul.mubr.f32.gmra.mrb[0].mxu0 %v1490
    %v2043 = vpop.f32.mrb[0].mxu0
    %v2044 = vadd.f32 %v1929, %v2043
    %v2045 = vpop.f32.mrb[0].mxu0
    %v2046 = vadd.f32 %v1933, %v2045
    %2047 = vmatprep.mubr.f32.mxu0 0.0
    %2048 = vmatmul.mubr.f32.gmra.mrb[0].mxu0 %v1491
    %v2049 = vpop.f32.mrb[0].mxu0
    %v2050 = vadd.f32 %v1929, %v2049
    %v2051 = vpop.f32.mrb[0].mxu0
    %v2052 = vadd.f32 %v1933, %v2051
    %2053 = vdwg.mxu0
    %2054 = vmatprep.subr.mxu0 0.0
    %2055 = vmatpush1.msra.mxu0 %v1877
    %2056 = vmatprep.subr.mxu0 0.0
    %2057 = vmatpush1.msra.mxu0 %v1880
    %2058 = vmatprep.subr.mxu0 0.0
    %2059 = vmatpush1.msra.mxu0 %v1883
    %2060 = vmatprep.subr.mxu0 0.0
    %2061 = vmatpush1.msra.mxu0 %v1886
    %2062 = vmatprep.subr.mxu0 0.0
    %2063 = vmatpush1.msra.mxu0 %v1889
    %2064 = vmatprep.subr.mxu0 0.0
    %2065 = vmatpush1.msra.mxu0 %v1892
    %2066 = vmatprep.subr.mxu0 0.0
    %2067 = vmatpush1.msra.mxu0 %v1895
    %2068 = vmatprep.subr.mxu0 0.0
    %2069 = vmatpush1.msra.mxu0 %v1898
    %2070 = vmatprep.subr.mxu0 0.0
    %2071 = vmatpush1.msra.mxu0 %v1901
    %2072 = vmatprep.subr.mxu0 0.0
    %2073 = vmatpush1.msra.mxu0 %v1904
    %2074 = vmatprep.subr.mxu0 0.0
    %2075 = vmatpush1.msra.mxu0 %v1907
    %2076 = vmatprep.subr.mxu0 0.0
    %2077 = vmatpush1.msra.mxu0 %v1910
    %2078 = vmatprep.subr.mxu0 0.0
    %2079 = vmatpush1.msra.mxu0 %v1913
    %2080 = vmatprep.subr.mxu0 0.0
    %2081 = vmatpush1.msra.mxu0 %v1916
    %2082 = vmatprep.subr.mxu0 0.0
    %2083 = vmatpush1.msra.mxu0 %v1919
    %2084 = vmatprep.subr.mxu0 0.0
    %2085 = vmatpush1.msra.mxu0 %v1922
    %2086 = vmatprep.subr.mxu0 0.0
    %2087 = vmatpush1.msra.mxu0 0.0
    %2088 = vmatprep.subr.mxu0 0.0
    %2089 = vmatpush1.msra.mxu0 0.0
    %2090 = vmatprep.subr.mxu0 0.0
    %2091 = vmatpush1.msra.mxu0 0.0
    %2092 = vmatprep.subr.mxu0 0.0
    %2093 = vmatpush1.msra.mxu0 0.0
    %2094 = vmatprep.subr.mxu0 0.0
    %2095 = vmatpush1.msra.mxu0 0.0
    %2096 = vmatprep.subr.mxu0 0.0
    %2097 = vmatpush1.msra.mxu0 0.0
    %2098 = vmatprep.subr.mxu0 0.0
    %2099 = vmatpush1.msra.mxu0 0.0
    %2100 = vmatprep.subr.mxu0 0.0
    %2101 = vmatpush1.msra.mxu0 0.0
    %2102 = vmatprep.subr.mxu0 0.0
    %2103 = vmatpush1.msra.mxu0 0.0
    %2104 = vmatprep.subr.mxu0 0.0
    %2105 = vmatpush1.msra.mxu0 0.0
    %2106 = vmatprep.subr.mxu0 0.0
    %2107 = vmatpush1.msra.mxu0 0.0
    %2108 = vmatprep.subr.mxu0 0.0
    %2109 = vmatpush1.msra.mxu0 0.0
    %2110 = vmatprep.subr.mxu0 0.0
    %2111 = vmatpush1.msra.mxu0 0.0
    %2112 = vmatprep.subr.mxu0 0.0
    %2113 = vmatpush1.msra.mxu0 0.0
    %2114 = vmatprep.subr.mxu0 0.0
    %2115 = vmatpush1.msra.mxu0 0.0
    %2116 = vmatprep.subr.mxu0 0.0
    %2117 = vmatpush1.msra.mxu0 0.0
    %2118 = vmatprep.mubr.f32.mxu0 0.0
    %2119 = vmatmul.mubr.f32.gmra.mrb[0].mxu0 %v1484
    %v2120 = vpop.f32.mrb[0].mxu0
    %v2121 = vadd.f32 %v1937, %v2120
    %v2122 = vpop.f32.mrb[0].mxu0
    %2123 = vmatprep.mubr.f32.mxu0 0.0
    %2124 = vmatmul.mubr.f32.gmra.mrb[0].mxu0 %v1485
    %v2125 = vpop.f32.mrb[0].mxu0
    %v2126 = vadd.f32 %v1937, %v2125
    %v2127 = vpop.f32.mrb[0].mxu0
    %2128 = vmatprep.mubr.f32.mxu0 0.0
    %2129 = vmatmul.mubr.f32.gmra.mrb[0].mxu0 %v1486
    %v2130 = vpop.f32.mrb[0].mxu0
    %v2131 = vadd.f32 %v1937, %v2130
    %v2132 = vpop.f32.mrb[0].mxu0
    %2133 = vmatprep.mubr.f32.mxu0 0.0
    %2134 = vmatmul.mubr.f32.gmra.mrb[0].mxu0 %v1487
    %v2135 = vpop.f32.mrb[0].mxu0
    %v2136 = vadd.f32 %v1937, %v2135
    %v2137 = vpop.f32.mrb[0].mxu0
    %2138 = vmatprep.mubr.f32.mxu0 0.0
    %2139 = vmatmul.mubr.f32.gmra.mrb[0].mxu0 %v1488
    %v2140 = vpop.f32.mrb[0].mxu0
    %v2141 = vadd.f32 %v1937, %v2140
    %v2142 = vpop.f32.mrb[0].mxu0
    %2143 = vmatprep.mubr.f32.mxu0 0.0
    %2144 = vmatmul.mubr.f32.gmra.mrb[0].mxu0 %v1489
    %v2145 = vpop.f32.mrb[0].mxu0
    %v2146 = vadd.f32 %v1937, %v2145
    %v2147 = vpop.f32.mrb[0].mxu0
    %2148 = vmatprep.mubr.f32.mxu0 0.0
    %2149 = vmatmul.mubr.f32.gmra.mrb[0].mxu0 %v1490
    %v2150 = vpop.f32.mrb[0].mxu0
    %v2151 = vadd.f32 %v1937, %v2150
    %v2152 = vpop.f32.mrb[0].mxu0
    %2153 = vmatprep.mubr.f32.mxu0 0.0
    %2154 = vmatmul.mubr.f32.gmra.mrb[0].mxu0 %v1491
    %v2155 = vpop.f32.mrb[0].mxu0
    %v2156 = vadd.f32 %v1937, %v2155
    %v2157 = vpop.f32.mrb[0].mxu0
    %2158 = vdwg.mxu0
    %v2159 = vxor.u32 %v2008, 2147483648
    %v2160 = vxor.u32 %v2014, 2147483648
    %v2161 = vxor.u32 %v2020, 2147483648
    %v2162 = vxor.u32 %v2026, 2147483648
    %v2163 = vxor.u32 %v2032, 2147483648
    %v2164 = vxor.u32 %v2038, 2147483648
    %v2165 = vxor.u32 %v2044, 2147483648
    %v2166 = vxor.u32 %v2050, 2147483648
    %v2167 = vmul.f32 %v2159, 1.442695
    %v2168 = vpow.pop %v2167
    %v2169 = vmul.f32 %v2160, 1.442695
    %v2170 = vpow.pop %v2169
    %v2171 = vmul.f32 %v2161, 1.442695
    %v2172 = vpow.pop %v2171
    %v2173 = vmul.f32 %v2162, 1.442695
    %v2174 = vpow.pop %v2173
    %v2175 = vmul.f32 %v2163, 1.442695
    %v2176 = vpow.pop %v2175
    %v2177 = vmul.f32 %v2164, 1.442695
    %v2178 = vpow.pop %v2177
    %v2179 = vmul.f32 %v2165, 1.442695
    %v2180 = vpow.pop %v2179
    %v2181 = vmul.f32 %v2166, 1.442695
    %v2182 = vpow.pop %v2181
    %v2183 = vadd.f32 %v2168, 1.0
    %v2184 = vadd.f32 %v2170, 1.0
    %v2185 = vadd.f32 %v2172, 1.0
    %v2186 = vadd.f32 %v2174, 1.0
    %v2187 = vadd.f32 %v2176, 1.0
    %v2188 = vadd.f32 %v2178, 1.0
    %v2189 = vadd.f32 %v2180, 1.0
    %v2190 = vadd.f32 %v2182, 1.0
    %v2191 = vrcp.pop %v2183
    %v2192 = vmul.f32 1.0, %v2191
    %v2193 = vrcp.pop %v2184
    %v2194 = vmul.f32 1.0, %v2193
    %v2195 = vrcp.pop %v2185
    %v2196 = vmul.f32 1.0, %v2195
    %v2197 = vrcp.pop %v2186
    %v2198 = vmul.f32 1.0, %v2197
    %v2199 = vrcp.pop %v2187
    %v2200 = vmul.f32 1.0, %v2199
    %v2201 = vrcp.pop %v2188
    %v2202 = vmul.f32 1.0, %v2201
    %v2203 = vrcp.pop %v2189
    %v2204 = vmul.f32 1.0, %v2203
    %v2205 = vrcp.pop %v2190
    %v2206 = vmul.f32 1.0, %v2205
    %v2207 = vtanh.pop %v2010
    %v2208 = vtanh.pop %v2016
    %v2209 = vtanh.pop %v2022
    %v2210 = vtanh.pop %v2028
    %v2211 = vtanh.pop %v2034
    %v2212 = vtanh.pop %v2040
    %v2213 = vtanh.pop %v2046
    %v2214 = vtanh.pop %v2052
    %v2215 = vxor.u32 %v2121, 2147483648
    %v2216 = vxor.u32 %v2126, 2147483648
    %v2217 = vxor.u32 %v2131, 2147483648
    %v2218 = vxor.u32 %v2136, 2147483648
    %v2219 = vxor.u32 %v2141, 2147483648
    %v2220 = vxor.u32 %v2146, 2147483648
    %v2221 = vxor.u32 %v2151, 2147483648
    %v2222 = vxor.u32 %v2156, 2147483648
    %v2223 = vmul.f32 %v2215, 1.442695
    %v2224 = vpow.pop %v2223
    %v2225 = vmul.f32 %v2216, 1.442695
    %v2226 = vpow.pop %v2225
    %v2227 = vmul.f32 %v2217, 1.442695
    %v2228 = vpow.pop %v2227
    %v2229 = vmul.f32 %v2218, 1.442695
    %v2230 = vpow.pop %v2229
    %v2231 = vmul.f32 %v2219, 1.442695
    %v2232 = vpow.pop %v2231
    %v2233 = vmul.f32 %v2220, 1.442695
    %v2234 = vpow.pop %v2233
    %v2235 = vmul.f32 %v2221, 1.442695
    %v2236 = vpow.pop %v2235
    %v2237 = vmul.f32 %v2222, 1.442695
    %v2238 = vpow.pop %v2237
    %v2239 = vadd.f32 %v2224, 1.0
    %v2240 = vadd.f32 %v2226, 1.0
    %v2241 = vadd.f32 %v2228, 1.0
    %v2242 = vadd.f32 %v2230, 1.0
    %v2243 = vadd.f32 %v2232, 1.0
    %v2244 = vadd.f32 %v2234, 1.0
    %v2245 = vadd.f32 %v2236, 1.0
    %v2246 = vadd.f32 %v2238, 1.0
    %v2247 = vrcp.pop %v2239
    %v2248 = vmul.f32 1.0, %v2247
    %v2249 = vrcp.pop %v2240
    %v2250 = vmul.f32 1.0, %v2249
    %v2251 = vrcp.pop %v2241
    %v2252 = vmul.f32 1.0, %v2251
    %v2253 = vrcp.pop %v2242
    %v2254 = vmul.f32 1.0, %v2253
    %v2255 = vrcp.pop %v2243
    %v2256 = vmul.f32 1.0, %v2255
    %v2257 = vrcp.pop %v2244
    %v2258 = vmul.f32 1.0, %v2257
    %v2259 = vrcp.pop %v2245
    %v2260 = vmul.f32 1.0, %v2259
    %v2261 = vrcp.pop %v2246
    %v2262 = vmul.f32 1.0, %v2261
    %v2263 = vmul.f32 %v2192, %v2207
    %v2264 = vmul.f32 %v2194, %v2208
    %v2265 = vmul.f32 %v2196, %v2209
    %v2266 = vmul.f32 %v2198, %v2210
    %v2267 = vmul.f32 %v2200, %v2211
    %v2268 = vmul.f32 %v2202, %v2212
    %v2269 = vmul.f32 %v2204, %v2213
    %v2270 = vmul.f32 %v2206, %v2214
    %v2271 = vtanh.pop %v2263
    %v2272 = vtanh.pop %v2264
    %v2273 = vtanh.pop %v2265
    %v2274 = vtanh.pop %v2266
    %v2275 = vtanh.pop %v2267
    %v2276 = vtanh.pop %v2268
    %v2277 = vtanh.pop %v2269
    %v2278 = vtanh.pop %v2270
    %v2279 = vmul.f32 %v2248, %v2271
    %v2280 = vmul.f32 %v2250, %v2272
    %v2281 = vmul.f32 %v2252, %v2273
    %v2282 = vmul.f32 %v2254, %v2274
    %v2283 = vmul.f32 %v2256, %v2275
    %v2284 = vmul.f32 %v2258, %v2276
    %v2285 = vmul.f32 %v2260, %v2277
    %v2286 = vmul.f32 %v2262, %v2278
    %v2287 = vld [vmem:[%s3 + $0x18] sm:$0xff]
    %v2288 = vld [vmem:[%s3 + $0x40] sm:$0xff]
    %v2289 = vld [vmem:[%s3 + $0x68] sm:$0xff]
    %v2290 = vld [vmem:[%s3 + $0x90] sm:$0xff]
    %v2291 = vld [vmem:[%s3 + $0xb8] sm:$0xff]
    %v2292 = vld [vmem:[%s3 + $0xe0] sm:$0xff]
    %v2293 = vld [vmem:[%s3 + $0x108] sm:$0xff]
    %v2294 = vld [vmem:[%s3 + $0x130] sm:$0xff]
    %v2295 = vld [vmem:[%s3 + $0x158] sm:$0xff]
    %v2296 = vld [vmem:[%s3 + $0x180] sm:$0xff]
    %v2297 = vld [vmem:[%s3 + $0x1a8] sm:$0xff]
    %v2298 = vld [vmem:[%s3 + $0x1d0] sm:$0xff]
    %v2299 = vld [vmem:[%s3 + $0x1f8] sm:$0xff]
    %v2300 = vld [vmem:[%s3 + $0x220] sm:$0xff]
    %v2301 = vld [vmem:[%s3 + $0x248] sm:$0xff]
    %v2302 = vld [vmem:[%s3 + $0x270] sm:$0xff]
    %v2303 = vld [vmem:[%s3 + $0x298] sm:$0xff]
    %v2304 = vld [vmem:[%s3 + $0x2c0] sm:$0xff]
    %v2305 = vld [vmem:[%s3 + $0x2e8] sm:$0xff]
    %v2306 = vld [vmem:[%s3 + $0x310] sm:$0xff]
    %v2307 = vld [vmem:[%s3 + $0x338] sm:$0xff]
    %v2308 = vld [vmem:[%s3 + $0x360] sm:$0xff]
    %v2309 = vld [vmem:[%s3 + $0x388] sm:$0xff]
    %v2310 = vld [vmem:[%s3 + $0x3b0] sm:$0xff]
    %v2311 = vld [vmem:[%s3 + $0x3d8] sm:$0xff]
    %v2312 = vld [vmem:[%s3 + $0x400] sm:$0xff]
    %v2313 = vld [vmem:[%s3 + $0x428] sm:$0xff]
    %v2314 = vld [vmem:[%s3 + $0x450] sm:$0xff]
    %v2315 = vld [vmem:[%s3 + $0x478] sm:$0xff]
    %v2316 = vld [vmem:[%s3 + $0x4a0] sm:$0xff]
    %v2317 = vld [vmem:[%s3 + $0x4c8] sm:$0xff]
    %v2318 = vld [vmem:[%s3 + $0x4f0] sm:$0xff]
    %v2319 = vld [vmem:[%s7 + $0x4] ss:$0 sm:$0xff]
    %2320 = vmatprep.subr.mxu0 0.0
    %2321 = vmatpush1.msra.mxu0 %v2287
    %2322 = vmatprep.subr.mxu0 0.0
    %2323 = vmatpush1.msra.mxu0 %v2288
    %2324 = vmatprep.subr.mxu0 0.0
    %2325 = vmatpush1.msra.mxu0 %v2289
    %2326 = vmatprep.subr.mxu0 0.0
    %2327 = vmatpush1.msra.mxu0 %v2290
    %2328 = vmatprep.subr.mxu0 0.0
    %2329 = vmatpush1.msra.mxu0 %v2291
    %2330 = vmatprep.subr.mxu0 0.0
    %2331 = vmatpush1.msra.mxu0 %v2292
    %2332 = vmatprep.subr.mxu0 0.0
    %2333 = vmatpush1.msra.mxu0 %v2293
    %2334 = vmatprep.subr.mxu0 0.0
    %2335 = vmatpush1.msra.mxu0 %v2294
    %2336 = vmatprep.subr.mxu0 0.0
    %2337 = vmatpush1.msra.mxu0 %v2295
    %2338 = vmatprep.subr.mxu0 0.0
    %2339 = vmatpush1.msra.mxu0 %v2296
    %2340 = vmatprep.subr.mxu0 0.0
    %2341 = vmatpush1.msra.mxu0 %v2297
    %2342 = vmatprep.subr.mxu0 0.0
    %2343 = vmatpush1.msra.mxu0 %v2298
    %2344 = vmatprep.subr.mxu0 0.0
    %2345 = vmatpush1.msra.mxu0 %v2299
    %2346 = vmatprep.subr.mxu0 0.0
    %2347 = vmatpush1.msra.mxu0 %v2300
    %2348 = vmatprep.subr.mxu0 0.0
    %2349 = vmatpush1.msra.mxu0 %v2301
    %2350 = vmatprep.subr.mxu0 0.0
    %2351 = vmatpush1.msra.mxu0 %v2302
    %2352 = vmatprep.subr.mxu0 0.0
    %2353 = vmatpush1.msra.mxu0 %v2303
    %2354 = vmatprep.subr.mxu0 0.0
    %2355 = vmatpush1.msra.mxu0 %v2304
    %2356 = vmatprep.subr.mxu0 0.0
    %2357 = vmatpush1.msra.mxu0 %v2305
    %2358 = vmatprep.subr.mxu0 0.0
    %2359 = vmatpush1.msra.mxu0 %v2306
    %2360 = vmatprep.subr.mxu0 0.0
    %2361 = vmatpush1.msra.mxu0 %v2307
    %2362 = vmatprep.subr.mxu0 0.0
    %2363 = vmatpush1.msra.mxu0 %v2308
    %2364 = vmatprep.subr.mxu0 0.0
    %2365 = vmatpush1.msra.mxu0 %v2309
    %2366 = vmatprep.subr.mxu0 0.0
    %2367 = vmatpush1.msra.mxu0 %v2310
    %2368 = vmatprep.subr.mxu0 0.0
    %2369 = vmatpush1.msra.mxu0 %v2311
    %2370 = vmatprep.subr.mxu0 0.0
    %2371 = vmatpush1.msra.mxu0 %v2312
    %2372 = vmatprep.subr.mxu0 0.0
    %2373 = vmatpush1.msra.mxu0 %v2313
    %2374 = vmatprep.subr.mxu0 0.0
    %2375 = vmatpush1.msra.mxu0 %v2314
    %2376 = vmatprep.subr.mxu0 0.0
    %2377 = vmatpush1.msra.mxu0 %v2315
    %2378 = vmatprep.subr.mxu0 0.0
    %2379 = vmatpush1.msra.mxu0 %v2316
    %2380 = vmatprep.subr.mxu0 0.0
    %2381 = vmatpush1.msra.mxu0 %v2317
    %2382 = vmatprep.subr.mxu0 0.0
    %2383 = vmatpush1.msra.mxu0 %v2318
    %2384 = vmatprep.mubr.f32.mxu0 %v1860
    %2385 = vmatmul.mubr.f32.gmra.mrb[0].mxu0 %v1859
    %v2386 = vpop.f32.mrb[0].mxu0
    %v2387 = vadd.f32 %v2319, %v2386
    %v2388 = vpop.f32.mrb[0].mxu0
    %2389 = vmatprep.mubr.f32.mxu0 %v1862
    %2390 = vmatmul.mubr.f32.gmra.mrb[0].mxu0 %v1861
    %v2391 = vpop.f32.mrb[0].mxu0
    %v2392 = vadd.f32 %v2319, %v2391
    %v2393 = vpop.f32.mrb[0].mxu0
    %2394 = vmatprep.mubr.f32.mxu0 %v1864
    %2395 = vmatmul.mubr.f32.gmra.mrb[0].mxu0 %v1863
    %v2396 = vpop.f32.mrb[0].mxu0
    %v2397 = vadd.f32 %v2319, %v2396
    %v2398 = vpop.f32.mrb[0].mxu0
    %2399 = vmatprep.mubr.f32.mxu0 %v1866
    %2400 = vmatmul.mubr.f32.gmra.mrb[0].mxu0 %v1865
    %v2401 = vpop.f32.mrb[0].mxu0
    %v2402 = vadd.f32 %v2319, %v2401
    %v2403 = vpop.f32.mrb[0].mxu0
    %2404 = vmatprep.mubr.f32.mxu0 %v1868
    %2405 = vmatmul.mubr.f32.gmra.mrb[0].mxu0 %v1867
    %v2406 = vpop.f32.mrb[0].mxu0
    %v2407 = vadd.f32 %v2319, %v2406
    %v2408 = vpop.f32.mrb[0].mxu0
    %2409 = vmatprep.mubr.f32.mxu0 %v1870
    %2410 = vmatmul.mubr.f32.gmra.mrb[0].mxu0 %v1869
    %v2411 = vpop.f32.mrb[0].mxu0
    %v2412 = vadd.f32 %v2319, %v2411
    %v2413 = vpop.f32.mrb[0].mxu0
    %2414 = vmatprep.mubr.f32.mxu0 %v1872
    %2415 = vmatmul.mubr.f32.gmra.mrb[0].mxu0 %v1871
    %v2416 = vpop.f32.mrb[0].mxu0
    %v2417 = vadd.f32 %v2319, %v2416
    %v2418 = vpop.f32.mrb[0].mxu0
    %2419 = vmatprep.mubr.f32.mxu0 %v1874
    %2420 = vmatmul.mubr.f32.gmra.mrb[0].mxu0 %v1873
    %v2421 = vpop.f32.mrb[0].mxu0
    %v2422 = vadd.f32 %v2319, %v2421
    %v2423 = vpop.f32.mrb[0].mxu0
    %2424 = vdwg.mxu0
    %v2425 = vmax.f32 %v2387, 0.0
    %v2426 = vmax.f32 %v2392, 0.0
    %v2427 = vmax.f32 %v2397, 0.0
    %v2428 = vmax.f32 %v2402, 0.0
    %v2429 = vmax.f32 %v2407, 0.0
    %v2430 = vmax.f32 %v2412, 0.0
    %v2431 = vmax.f32 %v2417, 0.0
    %v2432 = vmax.f32 %v2422, 0.0
    %v2433 = vld [vmem:[%s4 + $0x40] sm:$0xff]
    %v2434 = vld [vmem:[%s4 + $0x88] sm:$0xff]
    %v2435 = vld [vmem:[%s4 + $0xd0] sm:$0xff]
    %v2436 = vld [vmem:[%s4 + $0x118] sm:$0xff]
    %v2437 = vld [vmem:[%s4 + $0x160] sm:$0xff]
    %v2438 = vld [vmem:[%s4 + $0x1a8] sm:$0xff]
    %v2439 = vld [vmem:[%s4 + $0x1f0] sm:$0xff]
    %v2440 = vld [vmem:[%s4 + $0x238] sm:$0xff]
    %v2441 = vld [vmem:[%s4 + $0x280] sm:$0xff]
    %v2442 = vld [vmem:[%s4 + $0x2c8] sm:$0xff]
    %v2443 = vld [vmem:[%s4 + $0x310] sm:$0xff]
    %v2444 = vld [vmem:[%s4 + $0x358] sm:$0xff]
    %v2445 = vld [vmem:[%s4 + $0x3a0] sm:$0xff]
    %v2446 = vld [vmem:[%s4 + $0x3e8] sm:$0xff]
    %v2447 = vld [vmem:[%s4 + $0x430] sm:$0xff]
    %v2448 = vld [vmem:[%s4 + $0x478] sm:$0xff]
    %v2449 = vld [vmem:[%s7 + $0x5] ss:$0 sm:$0xff]
    %2450 = vmatprep.subr.mxu0 0.0
    %2451 = vmatpush1.msra.mxu0 %v2433
    %2452 = vmatprep.subr.mxu0 0.0
    %2453 = vmatpush1.msra.mxu0 %v2434
    %2454 = vmatprep.subr.mxu0 0.0
    %2455 = vmatpush1.msra.mxu0 %v2435
    %2456 = vmatprep.subr.mxu0 0.0
    %2457 = vmatpush1.msra.mxu0 %v2436
    %2458 = vmatprep.subr.mxu0 0.0
    %2459 = vmatpush1.msra.mxu0 %v2437
    %2460 = vmatprep.subr.mxu0 0.0
    %2461 = vmatpush1.msra.mxu0 %v2438
    %2462 = vmatprep.subr.mxu0 0.0
    %2463 = vmatpush1.msra.mxu0 %v2439
    %2464 = vmatprep.subr.mxu0 0.0
    %2465 = vmatpush1.msra.mxu0 %v2440
    %2466 = vmatprep.subr.mxu0 0.0
    %2467 = vmatpush1.msra.mxu0 %v2441
    %2468 = vmatprep.subr.mxu0 0.0
    %2469 = vmatpush1.msra.mxu0 %v2442
    %2470 = vmatprep.subr.mxu0 0.0
    %2471 = vmatpush1.msra.mxu0 %v2443
    %2472 = vmatprep.subr.mxu0 0.0
    %2473 = vmatpush1.msra.mxu0 %v2444
    %2474 = vmatprep.subr.mxu0 0.0
    %2475 = vmatpush1.msra.mxu0 %v2445
    %2476 = vmatprep.subr.mxu0 0.0
    %2477 = vmatpush1.msra.mxu0 %v2446
    %2478 = vmatprep.subr.mxu0 0.0
    %2479 = vmatpush1.msra.mxu0 %v2447
    %2480 = vmatprep.subr.mxu0 0.0
    %2481 = vmatpush1.msra.mxu0 %v2448
    %2482 = vmatprep.subr.mxu0 0.0
    %2483 = vmatpush1.msra.mxu0 0.0
    %2484 = vmatprep.subr.mxu0 0.0
    %2485 = vmatpush1.msra.mxu0 0.0
    %2486 = vmatprep.subr.mxu0 0.0
    %2487 = vmatpush1.msra.mxu0 0.0
    %2488 = vmatprep.subr.mxu0 0.0
    %2489 = vmatpush1.msra.mxu0 0.0
    %2490 = vmatprep.subr.mxu0 0.0
    %2491 = vmatpush1.msra.mxu0 0.0
    %2492 = vmatprep.subr.mxu0 0.0
    %2493 = vmatpush1.msra.mxu0 0.0
    %2494 = vmatprep.subr.mxu0 0.0
    %2495 = vmatpush1.msra.mxu0 0.0
    %2496 = vmatprep.subr.mxu0 0.0
    %2497 = vmatpush1.msra.mxu0 0.0
    %2498 = vmatprep.subr.mxu0 0.0
    %2499 = vmatpush1.msra.mxu0 0.0
    %2500 = vmatprep.subr.mxu0 0.0
    %2501 = vmatpush1.msra.mxu0 0.0
    %2502 = vmatprep.subr.mxu0 0.0
    %2503 = vmatpush1.msra.mxu0 0.0
    %2504 = vmatprep.subr.mxu0 0.0
    %2505 = vmatpush1.msra.mxu0 0.0
    %2506 = vmatprep.subr.mxu0 0.0
    %2507 = vmatpush1.msra.mxu0 0.0
    %2508 = vmatprep.subr.mxu0 0.0
    %2509 = vmatpush1.msra.mxu0 0.0
    %2510 = vmatprep.subr.mxu0 0.0
    %2511 = vmatpush1.msra.mxu0 0.0
    %2512 = vmatprep.subr.mxu0 0.0
    %2513 = vmatpush1.msra.mxu0 0.0
    %2514 = vmatprep.mubr.f32.mxu0 0.0
    %2515 = vmatmul.mubr.f32.gmra.mrb[0].mxu0 %v2425
    %v2516 = vpop.f32.mrb[0].mxu0
    %v2517 = vadd.f32 %v2449, %v2516
    %v2518 = vpop.f32.mrb[0].mxu0
    %2519 = vmatprep.mubr.f32.mxu0 0.0
    %2520 = vmatmul.mubr.f32.gmra.mrb[0].mxu0 %v2426
    %v2521 = vpop.f32.mrb[0].mxu0
    %v2522 = vadd.f32 %v2449, %v2521
    %v2523 = vpop.f32.mrb[0].mxu0
    %2524 = vmatprep.mubr.f32.mxu0 0.0
    %2525 = vmatmul.mubr.f32.gmra.mrb[0].mxu0 %v2427
    %v2526 = vpop.f32.mrb[0].mxu0
    %v2527 = vadd.f32 %v2449, %v2526
    %v2528 = vpop.f32.mrb[0].mxu0
    %2529 = vmatprep.mubr.f32.mxu0 0.0
    %2530 = vmatmul.mubr.f32.gmra.mrb[0].mxu0 %v2428
    %v2531 = vpop.f32.mrb[0].mxu0
    %v2532 = vadd.f32 %v2449, %v2531
    %v2533 = vpop.f32.mrb[0].mxu0
    %2534 = vmatprep.mubr.f32.mxu0 0.0
    %2535 = vmatmul.mubr.f32.gmra.mrb[0].mxu0 %v2429
    %v2536 = vpop.f32.mrb[0].mxu0
    %v2537 = vadd.f32 %v2449, %v2536
    %v2538 = vpop.f32.mrb[0].mxu0
    %2539 = vmatprep.mubr.f32.mxu0 0.0
    %2540 = vmatmul.mubr.f32.gmra.mrb[0].mxu0 %v2430
    %v2541 = vpop.f32.mrb[0].mxu0
    %v2542 = vadd.f32 %v2449, %v2541
    %v2543 = vpop.f32.mrb[0].mxu0
    %2544 = vmatprep.mubr.f32.mxu0 0.0
    %2545 = vmatmul.mubr.f32.gmra.mrb[0].mxu0 %v2431
    %v2546 = vpop.f32.mrb[0].mxu0
    %v2547 = vadd.f32 %v2449, %v2546
    %v2548 = vpop.f32.mrb[0].mxu0
    %2549 = vmatprep.mubr.f32.mxu0 0.0
    %2550 = vmatmul.mubr.f32.gmra.mrb[0].mxu0 %v2432
    %v2551 = vpop.f32.mrb[0].mxu0
    %v2552 = vadd.f32 %v2449, %v2551
    %v2553 = vpop.f32.mrb[0].mxu0
    %2554 = vdwg.mxu0
    %s2555 = scalar_lea.vmem %s7, 6
    %v2556 = vld [vmem:[%s2555] ss:$8 sm:$0xf]
    %2558 = vset.pattern.permute.xlu0 0
    %2559 = vperm.xlu0 %2558, %v38
    %v2560 = vpop.permute.xlu0 %2559
    %2563 = vset.pattern.permute.xlu0 0
    %2564 = vperm.xlu0 %2563, %v39
    %v2565 = vpop.permute.xlu0 %2564
    %2568 = vset.pattern.permute.xlu0 0
    %2569 = vperm.xlu0 %2568, %v40
    %v2570 = vpop.permute.xlu0 %2569
    %2573 = vset.pattern.permute.xlu0 0
    %2574 = vperm.xlu0 %2573, %v41
    %v2575 = vpop.permute.xlu0 %2574
    %2578 = vset.pattern.permute.xlu0 0
    %2579 = vperm.xlu0 %2578, %v42
    %v2580 = vpop.permute.xlu0 %2579
    %2583 = vset.pattern.permute.xlu0 0
    %2584 = vperm.xlu0 %2583, %v43
    %v2585 = vpop.permute.xlu0 %2584
    %2588 = vset.pattern.permute.xlu0 0
    %2589 = vperm.xlu0 %2588, %v44
    %v2590 = vpop.permute.xlu0 %2589
    %2593 = vset.pattern.permute.xlu0 0
    %2594 = vperm.xlu0 %2593, %v45
    %v2595 = vpop.permute.xlu0 %2594
    %v2598 = vlaneseq
    %v2599 = vshrl.u32 %v2598, 7
    %v2600 = vsub.s32 0, %v2599
    %v2601 = vrot.slane %v2556, %v2600
    %v2602 = vlaneseq
    %v2603 = vshrl.u32 %v2602, 7
    %v2604 = vsub.s32 1, %v2603
    %v2605 = vrot.slane %v2556, %v2604
    %v2606 = vlaneseq
    %v2607 = vshrl.u32 %v2606, 7
    %v2608 = vsub.s32 2, %v2607
    %v2609 = vrot.slane %v2556, %v2608
    %v2610 = vlaneseq
    %v2611 = vshrl.u32 %v2610, 7
    %v2612 = vsub.s32 3, %v2611
    %v2613 = vrot.slane %v2556, %v2612
    %v2618 = vmul.f32 %v2560, %v2601
    %v2619 = vmul.f32 %v2560, %v2605
    %v2620 = vmul.f32 %v2560, %v2609
    %v2621 = vmul.f32 %v2560, %v2613
    %v2622 = vmul.f32 %v2565, %v2601
    %v2623 = vmul.f32 %v2565, %v2605
    %v2624 = vmul.f32 %v2565, %v2609
    %v2625 = vmul.f32 %v2565, %v2613
    %v2626 = vmul.f32 %v2570, %v2601
    %v2627 = vmul.f32 %v2570, %v2605
    %v2628 = vmul.f32 %v2570, %v2609
    %v2629 = vmul.f32 %v2570, %v2613
    %v2630 = vmul.f32 %v2575, %v2601
    %v2631 = vmul.f32 %v2575, %v2605
    %v2632 = vmul.f32 %v2575, %v2609
    %v2633 = vmul.f32 %v2575, %v2613
    %v2634 = vmul.f32 %v2580, %v2601
    %v2635 = vmul.f32 %v2580, %v2605
    %v2636 = vmul.f32 %v2580, %v2609
    %v2637 = vmul.f32 %v2580, %v2613
    %v2638 = vmul.f32 %v2585, %v2601
    %v2639 = vmul.f32 %v2585, %v2605
    %v2640 = vmul.f32 %v2585, %v2609
    %v2641 = vmul.f32 %v2585, %v2613
    %v2642 = vmul.f32 %v2590, %v2601
    %v2643 = vmul.f32 %v2590, %v2605
    %v2644 = vmul.f32 %v2590, %v2609
    %v2645 = vmul.f32 %v2590, %v2613
    %v2646 = vmul.f32 %v2595, %v2601
    %v2647 = vmul.f32 %v2595, %v2605
    %v2648 = vmul.f32 %v2595, %v2609
    %v2649 = vmul.f32 %v2595, %v2613
    %s2650 = scalar_lea.vmem %s7, 7
    %v2651 = vld [vmem:[%s2650] ss:$8 sm:$0xf]
    %v2653 = vlaneseq
    %v2654 = vshrl.u32 %v2653, 7
    %v2655 = vsub.s32 0, %v2654
    %v2656 = vrot.slane %v2651, %v2655
    %v2657 = vlaneseq
    %v2658 = vshrl.u32 %v2657, 7
    %v2659 = vsub.s32 1, %v2658
    %v2660 = vrot.slane %v2651, %v2659
    %v2661 = vlaneseq
    %v2662 = vshrl.u32 %v2661, 7
    %v2663 = vsub.s32 2, %v2662
    %v2664 = vrot.slane %v2651, %v2663
    %v2665 = vlaneseq
    %v2666 = vshrl.u32 %v2665, 7
    %v2667 = vsub.s32 3, %v2666
    %v2668 = vrot.slane %v2651, %v2667
    %v2673 = vadd.f32 %v2618, %v2656
    %v2674 = vadd.f32 %v2619, %v2660
    %v2675 = vadd.f32 %v2620, %v2664
    %v2676 = vadd.f32 %v2621, %v2668
    %v2677 = vadd.f32 %v2622, %v2656
    %v2678 = vadd.f32 %v2623, %v2660
    %v2679 = vadd.f32 %v2624, %v2664
    %v2680 = vadd.f32 %v2625, %v2668
    %v2681 = vadd.f32 %v2626, %v2656
    %v2682 = vadd.f32 %v2627, %v2660
    %v2683 = vadd.f32 %v2628, %v2664
    %v2684 = vadd.f32 %v2629, %v2668
    %v2685 = vadd.f32 %v2630, %v2656
    %v2686 = vadd.f32 %v2631, %v2660
    %v2687 = vadd.f32 %v2632, %v2664
    %v2688 = vadd.f32 %v2633, %v2668
    %v2689 = vadd.f32 %v2634, %v2656
    %v2690 = vadd.f32 %v2635, %v2660
    %v2691 = vadd.f32 %v2636, %v2664
    %v2692 = vadd.f32 %v2637, %v2668
    %v2693 = vadd.f32 %v2638, %v2656
    %v2694 = vadd.f32 %v2639, %v2660
    %v2695 = vadd.f32 %v2640, %v2664
    %v2696 = vadd.f32 %v2641, %v2668
    %v2697 = vadd.f32 %v2642, %v2656
    %v2698 = vadd.f32 %v2643, %v2660
    %v2699 = vadd.f32 %v2644, %v2664
    %v2700 = vadd.f32 %v2645, %v2668
    %v2701 = vadd.f32 %v2646, %v2656
    %v2702 = vadd.f32 %v2647, %v2660
    %v2703 = vadd.f32 %v2648, %v2664
    %v2704 = vadd.f32 %v2649, %v2668
    %v2705 = vmax.f32 %v2673, 0.0
    %v2706 = vmax.f32 %v2674, 0.0
    %v2707 = vmax.f32 %v2675, 0.0
    %v2708 = vmax.f32 %v2676, 0.0
    %v2709 = vmax.f32 %v2677, 0.0
    %v2710 = vmax.f32 %v2678, 0.0
    %v2711 = vmax.f32 %v2679, 0.0
    %v2712 = vmax.f32 %v2680, 0.0
    %v2713 = vmax.f32 %v2681, 0.0
    %v2714 = vmax.f32 %v2682, 0.0
    %v2715 = vmax.f32 %v2683, 0.0
    %v2716 = vmax.f32 %v2684, 0.0
    %v2717 = vmax.f32 %v2685, 0.0
    %v2718 = vmax.f32 %v2686, 0.0
    %v2719 = vmax.f32 %v2687, 0.0
    %v2720 = vmax.f32 %v2688, 0.0
    %v2721 = vmax.f32 %v2689, 0.0
    %v2722 = vmax.f32 %v2690, 0.0
    %v2723 = vmax.f32 %v2691, 0.0
    %v2724 = vmax.f32 %v2692, 0.0
    %v2725 = vmax.f32 %v2693, 0.0
    %v2726 = vmax.f32 %v2694, 0.0
    %v2727 = vmax.f32 %v2695, 0.0
    %v2728 = vmax.f32 %v2696, 0.0
    %v2729 = vmax.f32 %v2697, 0.0
    %v2730 = vmax.f32 %v2698, 0.0
    %v2731 = vmax.f32 %v2699, 0.0
    %v2732 = vmax.f32 %v2700, 0.0
    %v2733 = vmax.f32 %v2701, 0.0
    %v2734 = vmax.f32 %v2702, 0.0
    %v2735 = vmax.f32 %v2703, 0.0
    %v2736 = vmax.f32 %v2704, 0.0
    %v2737 = vld [vmem:[%s5 + $0x20] sm:$0xff]
    %v2738 = vld [vmem:[%s5 + $0x48] sm:$0xff]
    %v2739 = vld [vmem:[%s5 + $0x70] sm:$0xff]
    %v2740 = vld [vmem:[%s5 + $0x98] sm:$0xff]
    %v2741 = vld [vmem:[%s5 + $0xc0] sm:$0xff]
    %v2742 = vld [vmem:[%s5 + $0xe8] sm:$0xff]
    %v2743 = vld [vmem:[%s5 + $0x110] sm:$0xff]
    %v2744 = vld [vmem:[%s5 + $0x138] sm:$0xff]
    %v2745 = vld [vmem:[%s5 + $0x160] sm:$0xff]
    %v2746 = vld [vmem:[%s5 + $0x188] sm:$0xff]
    %v2747 = vld [vmem:[%s5 + $0x1b0] sm:$0xff]
    %v2748 = vld [vmem:[%s5 + $0x1d8] sm:$0xff]
    %v2749 = vld [vmem:[%s5 + $0x200] sm:$0xff]
    %v2750 = vld [vmem:[%s5 + $0x228] sm:$0xff]
    %v2751 = vld [vmem:[%s5 + $0x250] sm:$0xff]
    %v2752 = vld [vmem:[%s5 + $0x278] sm:$0xff]
    %v2753 = vld [vmem:[%s5 + $0x2a0] sm:$0xff]
    %v2754 = vld [vmem:[%s5 + $0x2c8] sm:$0xff]
    %v2755 = vld [vmem:[%s5 + $0x2f0] sm:$0xff]
    %v2756 = vld [vmem:[%s5 + $0x318] sm:$0xff]
    %v2757 = vld [vmem:[%s5 + $0x340] sm:$0xff]
    %v2758 = vld [vmem:[%s5 + $0x368] sm:$0xff]
    %v2759 = vld [vmem:[%s5 + $0x390] sm:$0xff]
    %v2760 = vld [vmem:[%s5 + $0x3b8] sm:$0xff]
    %v2761 = vld [vmem:[%s5 + $0x3e0] sm:$0xff]
    %v2762 = vld [vmem:[%s5 + $0x408] sm:$0xff]
    %v2763 = vld [vmem:[%s5 + $0x430] sm:$0xff]
    %v2764 = vld [vmem:[%s5 + $0x458] sm:$0xff]
    %v2765 = vld [vmem:[%s5 + $0x480] sm:$0xff]
    %v2766 = vld [vmem:[%s5 + $0x4a8] sm:$0xff]
    %v2767 = vld [vmem:[%s5 + $0x4d0] sm:$0xff]
    %v2768 = vld [vmem:[%s5 + $0x4f8] sm:$0xff]
    %v2769 = vld [vmem:[%s5 + $0x520] sm:$0xff]
    %v2770 = vld [vmem:[%s5 + $0x548] sm:$0xff]
    %v2771 = vld [vmem:[%s5 + $0x570] sm:$0xff]
    %v2772 = vld [vmem:[%s5 + $0x598] sm:$0xff]
    %v2773 = vld [vmem:[%s5 + $0x5c0] sm:$0xff]
    %v2774 = vld [vmem:[%s5 + $0x5e8] sm:$0xff]
    %v2775 = vld [vmem:[%s5 + $0x610] sm:$0xff]
    %v2776 = vld [vmem:[%s5 + $0x638] sm:$0xff]
    %v2777 = vld [vmem:[%s5 + $0x660] sm:$0xff]
    %v2778 = vld [vmem:[%s5 + $0x688] sm:$0xff]
    %v2779 = vld [vmem:[%s5 + $0x6b0] sm:$0xff]
    %v2780 = vld [vmem:[%s5 + $0x6d8] sm:$0xff]
    %v2781 = vld [vmem:[%s5 + $0x700] sm:$0xff]
    %v2782 = vld [vmem:[%s5 + $0x728] sm:$0xff]
    %v2783 = vld [vmem:[%s5 + $0x750] sm:$0xff]
    %v2784 = vld [vmem:[%s5 + $0x778] sm:$0xff]
    %v2785 = vld [vmem:[%s5 + $0x7a0] sm:$0xff]
    %v2786 = vld [vmem:[%s5 + $0x7c8] sm:$0xff]
    %v2787 = vld [vmem:[%s5 + $0x7f0] sm:$0xff]
    %v2788 = vld [vmem:[%s5 + $0x818] sm:$0xff]
    %v2789 = vld [vmem:[%s5 + $0x840] sm:$0xff]
    %v2790 = vld [vmem:[%s5 + $0x868] sm:$0xff]
    %v2791 = vld [vmem:[%s5 + $0x890] sm:$0xff]
    %v2792 = vld [vmem:[%s5 + $0x8b8] sm:$0xff]
    %v2793 = vld [vmem:[%s5 + $0x8e0] sm:$0xff]
    %v2794 = vld [vmem:[%s5 + $0x908] sm:$0xff]
    %v2795 = vld [vmem:[%s5 + $0x930] sm:$0xff]
    %v2796 = vld [vmem:[%s5 + $0x958] sm:$0xff]
    %v2797 = vld [vmem:[%s5 + $0x980] sm:$0xff]
    %v2798 = vld [vmem:[%s5 + $0x9a8] sm:$0xff]
    %v2799 = vld [vmem:[%s5 + $0x9d0] sm:$0xff]
    %v2800 = vld [vmem:[%s5 + $0x9f8] sm:$0xff]
    %v2801 = vld [vmem:[%s7 + $0x50] ss:$0 sm:$0xff]
    %2802 = vmatprep.subr.mxu0 0.0
    %2803 = vmatpush1.msra.mxu0 %v2737
    %2804 = vmatprep.subr.mxu0 0.0
    %2805 = vmatpush1.msra.mxu0 %v2738
    %2806 = vmatprep.subr.mxu0 0.0
    %2807 = vmatpush1.msra.mxu0 %v2739
    %2808 = vmatprep.subr.mxu0 0.0
    %2809 = vmatpush1.msra.mxu0 %v2740
    %2810 = vmatprep.subr.mxu0 0.0
    %2811 = vmatpush1.msra.mxu0 %v2741
    %2812 = vmatprep.subr.mxu0 0.0
    %2813 = vmatpush1.msra.mxu0 %v2742
    %2814 = vmatprep.subr.mxu0 0.0
    %2815 = vmatpush1.msra.mxu0 %v2743
    %2816 = vmatprep.subr.mxu0 0.0
    %2817 = vmatpush1.msra.mxu0 %v2744
    %2818 = vmatprep.subr.mxu0 0.0
    %2819 = vmatpush1.msra.mxu0 %v2745
    %2820 = vmatprep.subr.mxu0 0.0
    %2821 = vmatpush1.msra.mxu0 %v2746
    %2822 = vmatprep.subr.mxu0 0.0
    %2823 = vmatpush1.msra.mxu0 %v2747
    %2824 = vmatprep.subr.mxu0 0.0
    %2825 = vmatpush1.msra.mxu0 %v2748
    %2826 = vmatprep.subr.mxu0 0.0
    %2827 = vmatpush1.msra.mxu0 %v2749
    %2828 = vmatprep.subr.mxu0 0.0
    %2829 = vmatpush1.msra.mxu0 %v2750
    %2830 = vmatprep.subr.mxu0 0.0
    %2831 = vmatpush1.msra.mxu0 %v2751
    %2832 = vmatprep.subr.mxu0 0.0
    %2833 = vmatpush1.msra.mxu0 %v2752
    %2834 = vmatprep.subr.mxu0 0.0
    %2835 = vmatpush1.msra.mxu0 %v2753
    %2836 = vmatprep.subr.mxu0 0.0
    %2837 = vmatpush1.msra.mxu0 %v2754
    %2838 = vmatprep.subr.mxu0 0.0
    %2839 = vmatpush1.msra.mxu0 %v2755
    %2840 = vmatprep.subr.mxu0 0.0
    %2841 = vmatpush1.msra.mxu0 %v2756
    %2842 = vmatprep.subr.mxu0 0.0
    %2843 = vmatpush1.msra.mxu0 %v2757
    %2844 = vmatprep.subr.mxu0 0.0
    %2845 = vmatpush1.msra.mxu0 %v2758
    %2846 = vmatprep.subr.mxu0 0.0
    %2847 = vmatpush1.msra.mxu0 %v2759
    %2848 = vmatprep.subr.mxu0 0.0
    %2849 = vmatpush1.msra.mxu0 %v2760
    %2850 = vmatprep.subr.mxu0 0.0
    %2851 = vmatpush1.msra.mxu0 %v2761
    %2852 = vmatprep.subr.mxu0 0.0
    %2853 = vmatpush1.msra.mxu0 %v2762
    %2854 = vmatprep.subr.mxu0 0.0
    %2855 = vmatpush1.msra.mxu0 %v2763
    %2856 = vmatprep.subr.mxu0 0.0
    %2857 = vmatpush1.msra.mxu0 %v2764
    %2858 = vmatprep.subr.mxu0 0.0
    %2859 = vmatpush1.msra.mxu0 %v2765
    %2860 = vmatprep.subr.mxu0 0.0
    %2861 = vmatpush1.msra.mxu0 %v2766
    %2862 = vmatprep.subr.mxu0 0.0
    %2863 = vmatpush1.msra.mxu0 %v2767
    %2864 = vmatprep.subr.mxu0 0.0
    %2865 = vmatpush1.msra.mxu0 %v2768
    %2866 = vmatprep.mubr.f32.mxu0 %v2706
    %2867 = vmatmul.mubr.f32.gmra.mrb[0].mxu0 %v2705
    %v2868 = vpop.f32.mrb[0].mxu0
    %v2869 = vadd.f32 %v2801, %v2868
    %v2870 = vpop.f32.mrb[0].mxu0
    %2871 = vmatprep.mubr.f32.mxu0 %v2710
    %2872 = vmatmul.mubr.f32.gmra.mrb[0].mxu0 %v2709
    %v2873 = vpop.f32.mrb[0].mxu0
    %v2874 = vadd.f32 %v2801, %v2873
    %v2875 = vpop.f32.mrb[0].mxu0
    %2876 = vmatprep.mubr.f32.mxu0 %v2714
    %2877 = vmatmul.mubr.f32.gmra.mrb[0].mxu0 %v2713
    %v2878 = vpop.f32.mrb[0].mxu0
    %v2879 = vadd.f32 %v2801, %v2878
    %v2880 = vpop.f32.mrb[0].mxu0
    %2881 = vmatprep.mubr.f32.mxu0 %v2718
    %2882 = vmatmul.mubr.f32.gmra.mrb[0].mxu0 %v2717
    %v2883 = vpop.f32.mrb[0].mxu0
    %v2884 = vadd.f32 %v2801, %v2883
    %v2885 = vpop.f32.mrb[0].mxu0
    %2886 = vmatprep.mubr.f32.mxu0 %v2722
    %2887 = vmatmul.mubr.f32.gmra.mrb[0].mxu0 %v2721
    %v2888 = vpop.f32.mrb[0].mxu0
    %v2889 = vadd.f32 %v2801, %v2888
    %v2890 = vpop.f32.mrb[0].mxu0
    %2891 = vmatprep.mubr.f32.mxu0 %v2726
    %2892 = vmatmul.mubr.f32.gmra.mrb[0].mxu0 %v2725
    %v2893 = vpop.f32.mrb[0].mxu0
    %v2894 = vadd.f32 %v2801, %v2893
    %v2895 = vpop.f32.mrb[0].mxu0
    %2896 = vmatprep.mubr.f32.mxu0 %v2730
    %2897 = vmatmul.mubr.f32.gmra.mrb[0].mxu0 %v2729
    %v2898 = vpop.f32.mrb[0].mxu0
    %v2899 = vadd.f32 %v2801, %v2898
    %v2900 = vpop.f32.mrb[0].mxu0
    %2901 = vmatprep.mubr.f32.mxu0 %v2734
    %2902 = vmatmul.mubr.f32.gmra.mrb[0].mxu0 %v2733
    %v2903 = vpop.f32.mrb[0].mxu0
    %v2904 = vadd.f32 %v2801, %v2903
    %v2905 = vpop.f32.mrb[0].mxu0
    %2906 = vdwg.mxu0
    %2907 = vmatprep.subr.mxu0 0.0
    %2908 = vmatpush1.msra.mxu0 %v2769
    %2909 = vmatprep.subr.mxu0 0.0
    %2910 = vmatpush1.msra.mxu0 %v2770
    %2911 = vmatprep.subr.mxu0 0.0
    %2912 = vmatpush1.msra.mxu0 %v2771
    %2913 = vmatprep.subr.mxu0 0.0
    %2914 = vmatpush1.msra.mxu0 %v2772
    %2915 = vmatprep.subr.mxu0 0.0
    %2916 = vmatpush1.msra.mxu0 %v2773
    %2917 = vmatprep.subr.mxu0 0.0
    %2918 = vmatpush1.msra.mxu0 %v2774
    %2919 = vmatprep.subr.mxu0 0.0
    %2920 = vmatpush1.msra.mxu0 %v2775
    %2921 = vmatprep.subr.mxu0 0.0
    %2922 = vmatpush1.msra.mxu0 %v2776
    %2923 = vmatprep.subr.mxu0 0.0
    %2924 = vmatpush1.msra.mxu0 %v2777
    %2925 = vmatprep.subr.mxu0 0.0
    %2926 = vmatpush1.msra.mxu0 %v2778
    %2927 = vmatprep.subr.mxu0 0.0
    %2928 = vmatpush1.msra.mxu0 %v2779
    %2929 = vmatprep.subr.mxu0 0.0
    %2930 = vmatpush1.msra.mxu0 %v2780
    %2931 = vmatprep.subr.mxu0 0.0
    %2932 = vmatpush1.msra.mxu0 %v2781
    %2933 = vmatprep.subr.mxu0 0.0
    %2934 = vmatpush1.msra.mxu0 %v2782
    %2935 = vmatprep.subr.mxu0 0.0
    %2936 = vmatpush1.msra.mxu0 %v2783
    %2937 = vmatprep.subr.mxu0 0.0
    %2938 = vmatpush1.msra.mxu0 %v2784
    %2939 = vmatprep.subr.mxu0 0.0
    %2940 = vmatpush1.msra.mxu0 %v2785
    %2941 = vmatprep.subr.mxu0 0.0
    %2942 = vmatpush1.msra.mxu0 %v2786
    %2943 = vmatprep.subr.mxu0 0.0
    %2944 = vmatpush1.msra.mxu0 %v2787
    %2945 = vmatprep.subr.mxu0 0.0
    %2946 = vmatpush1.msra.mxu0 %v2788
    %2947 = vmatprep.subr.mxu0 0.0
    %2948 = vmatpush1.msra.mxu0 %v2789
    %2949 = vmatprep.subr.mxu0 0.0
    %2950 = vmatpush1.msra.mxu0 %v2790
    %2951 = vmatprep.subr.mxu0 0.0
    %2952 = vmatpush1.msra.mxu0 %v2791
    %2953 = vmatprep.subr.mxu0 0.0
    %2954 = vmatpush1.msra.mxu0 %v2792
    %2955 = vmatprep.subr.mxu0 0.0
    %2956 = vmatpush1.msra.mxu0 %v2793
    %2957 = vmatprep.subr.mxu0 0.0
    %2958 = vmatpush1.msra.mxu0 %v2794
    %2959 = vmatprep.subr.mxu0 0.0
    %2960 = vmatpush1.msra.mxu0 %v2795
    %2961 = vmatprep.subr.mxu0 0.0
    %2962 = vmatpush1.msra.mxu0 %v2796
    %2963 = vmatprep.subr.mxu0 0.0
    %2964 = vmatpush1.msra.mxu0 %v2797
    %2965 = vmatprep.subr.mxu0 0.0
    %2966 = vmatpush1.msra.mxu0 %v2798
    %2967 = vmatprep.subr.mxu0 0.0
    %2968 = vmatpush1.msra.mxu0 %v2799
    %2969 = vmatprep.subr.mxu0 0.0
    %2970 = vmatpush1.msra.mxu0 %v2800
    %2971 = vmatprep.mubr.f32.mxu0 %v2708
    %2972 = vmatmul.mubr.f32.gmra.mrb[0].mxu0 %v2707
    %v2973 = vpop.f32.mrb[0].mxu0
    %v2974 = vadd.f32 %v2869, %v2973
    %v2975 = vpop.f32.mrb[0].mxu0
    %2976 = vmatprep.mubr.f32.mxu0 %v2712
    %2977 = vmatmul.mubr.f32.gmra.mrb[0].mxu0 %v2711
    %v2978 = vpop.f32.mrb[0].mxu0
    %v2979 = vadd.f32 %v2874, %v2978
    %v2980 = vpop.f32.mrb[0].mxu0
    %2981 = vmatprep.mubr.f32.mxu0 %v2716
    %2982 = vmatmul.mubr.f32.gmra.mrb[0].mxu0 %v2715
    %v2983 = vpop.f32.mrb[0].mxu0
    %v2984 = vadd.f32 %v2879, %v2983
    %v2985 = vpop.f32.mrb[0].mxu0
    %2986 = vmatprep.mubr.f32.mxu0 %v2720
    %2987 = vmatmul.mubr.f32.gmra.mrb[0].mxu0 %v2719
    %v2988 = vpop.f32.mrb[0].mxu0
    %v2989 = vadd.f32 %v2884, %v2988
    %v2990 = vpop.f32.mrb[0].mxu0
    %2991 = vmatprep.mubr.f32.mxu0 %v2724
    %2992 = vmatmul.mubr.f32.gmra.mrb[0].mxu0 %v2723
    %v2993 = vpop.f32.mrb[0].mxu0
    %v2994 = vadd.f32 %v2889, %v2993
    %v2995 = vpop.f32.mrb[0].mxu0
    %2996 = vmatprep.mubr.f32.mxu0 %v2728
    %2997 = vmatmul.mubr.f32.gmra.mrb[0].mxu0 %v2727
    %v2998 = vpop.f32.mrb[0].mxu0
    %v2999 = vadd.f32 %v2894, %v2998
    %v3000 = vpop.f32.mrb[0].mxu0
    %3001 = vmatprep.mubr.f32.mxu0 %v2732
    %3002 = vmatmul.mubr.f32.gmra.mrb[0].mxu0 %v2731
    %v3003 = vpop.f32.mrb[0].mxu0
    %v3004 = vadd.f32 %v2899, %v3003
    %v3005 = vpop.f32.mrb[0].mxu0
    %3006 = vmatprep.mubr.f32.mxu0 %v2736
    %3007 = vmatmul.mubr.f32.gmra.mrb[0].mxu0 %v2735
    %v3008 = vpop.f32.mrb[0].mxu0
    %v3009 = vadd.f32 %v2904, %v3008
    %v3010 = vpop.f32.mrb[0].mxu0
    %3011 = vdwg.mxu0
    %v3012 = vld [vmem:[%s4 + $0x18] sm:$0xff]
    %v3013 = vld [vmem:[%s4 + $0x20] sm:$0xff]
    %v3014 = vld [vmem:[%s4 + $0x28] sm:$0xff]
    %v3015 = vld [vmem:[%s4 + $0x30] sm:$0xff]
    %v3016 = vld [vmem:[%s4 + $0x60] sm:$0xff]
    %v3017 = vld [vmem:[%s4 + $0x68] sm:$0xff]
    %v3018 = vld [vmem:[%s4 + $0x70] sm:$0xff]
    %v3019 = vld [vmem:[%s4 + $0x78] sm:$0xff]
    %v3020 = vld [vmem:[%s4 + $0xa8] sm:$0xff]
    %v3021 = vld [vmem:[%s4 + $0xb0] sm:$0xff]
    %v3022 = vld [vmem:[%s4 + $0xb8] sm:$0xff]
    %v3023 = vld [vmem:[%s4 + $0xc0] sm:$0xff]
    %v3024 = vld [vmem:[%s4 + $0xf0] sm:$0xff]
    %v3025 = vld [vmem:[%s4 + $0xf8] sm:$0xff]
    %v3026 = vld [vmem:[%s4 + $0x100] sm:$0xff]
    %v3027 = vld [vmem:[%s4 + $0x108] sm:$0xff]
    %v3028 = vld [vmem:[%s4 + $0x138] sm:$0xff]
    %v3029 = vld [vmem:[%s4 + $0x140] sm:$0xff]
    %v3030 = vld [vmem:[%s4 + $0x148] sm:$0xff]
    %v3031 = vld [vmem:[%s4 + $0x150] sm:$0xff]
    %v3032 = vld [vmem:[%s4 + $0x180] sm:$0xff]
    %v3033 = vld [vmem:[%s4 + $0x188] sm:$0xff]
    %v3034 = vld [vmem:[%s4 + $0x190] sm:$0xff]
    %v3035 = vld [vmem:[%s4 + $0x198] sm:$0xff]
    %v3036 = vld [vmem:[%s4 + $0x1c8] sm:$0xff]
    %v3037 = vld [vmem:[%s4 + $0x1d0] sm:$0xff]
    %v3038 = vld [vmem:[%s4 + $0x1d8] sm:$0xff]
    %v3039 = vld [vmem:[%s4 + $0x1e0] sm:$0xff]
    %v3040 = vld [vmem:[%s4 + $0x210] sm:$0xff]
    %v3041 = vld [vmem:[%s4 + $0x218] sm:$0xff]
    %v3042 = vld [vmem:[%s4 + $0x220] sm:$0xff]
    %v3043 = vld [vmem:[%s4 + $0x228] sm:$0xff]
    %v3044 = vld [vmem:[%s4 + $0x258] sm:$0xff]
    %v3045 = vld [vmem:[%s4 + $0x260] sm:$0xff]
    %v3046 = vld [vmem:[%s4 + $0x268] sm:$0xff]
    %v3047 = vld [vmem:[%s4 + $0x270] sm:$0xff]
    %v3048 = vld [vmem:[%s4 + $0x2a0] sm:$0xff]
    %v3049 = vld [vmem:[%s4 + $0x2a8] sm:$0xff]
    %v3050 = vld [vmem:[%s4 + $0x2b0] sm:$0xff]
    %v3051 = vld [vmem:[%s4 + $0x2b8] sm:$0xff]
    %v3052 = vld [vmem:[%s4 + $0x2e8] sm:$0xff]
    %v3053 = vld [vmem:[%s4 + $0x2f0] sm:$0xff]
    %v3054 = vld [vmem:[%s4 + $0x2f8] sm:$0xff]
    %v3055 = vld [vmem:[%s4 + $0x300] sm:$0xff]
    %v3056 = vld [vmem:[%s4 + $0x330] sm:$0xff]
    %v3057 = vld [vmem:[%s4 + $0x338] sm:$0xff]
    %v3058 = vld [vmem:[%s4 + $0x340] sm:$0xff]
    %v3059 = vld [vmem:[%s4 + $0x348] sm:$0xff]
    %v3060 = vld [vmem:[%s4 + $0x378] sm:$0xff]
    %v3061 = vld [vmem:[%s4 + $0x380] sm:$0xff]
    %v3062 = vld [vmem:[%s4 + $0x388] sm:$0xff]
    %v3063 = vld [vmem:[%s4 + $0x390] sm:$0xff]
    %v3064 = vld [vmem:[%s4 + $0x3c0] sm:$0xff]
    %v3065 = vld [vmem:[%s4 + $0x3c8] sm:$0xff]
    %v3066 = vld [vmem:[%s4 + $0x3d0] sm:$0xff]
    %v3067 = vld [vmem:[%s4 + $0x3d8] sm:$0xff]
    %v3068 = vld [vmem:[%s4 + $0x408] sm:$0xff]
    %v3069 = vld [vmem:[%s4 + $0x410] sm:$0xff]
    %v3070 = vld [vmem:[%s4 + $0x418] sm:$0xff]
    %v3071 = vld [vmem:[%s4 + $0x420] sm:$0xff]
    %v3072 = vld [vmem:[%s4 + $0x450] sm:$0xff]
    %v3073 = vld [vmem:[%s4 + $0x458] sm:$0xff]
    %v3074 = vld [vmem:[%s4 + $0x460] sm:$0xff]
    %v3075 = vld [vmem:[%s4 + $0x468] sm:$0xff]
    %v3076 = vld [vmem:[%s6] sm:$0xff]
    %v3077 = vld [vmem:[%s6 + $0x8] sm:$0xff]
    %v3078 = vld [vmem:[%s6 + $0x10] sm:$0xff]
    %v3079 = vld [vmem:[%s6 + $0x18] sm:$0xff]
    %v3080 = vld [vmem:[%s6 + $0x40] sm:$0xff]
    %v3081 = vld [vmem:[%s6 + $0x48] sm:$0xff]
    %v3082 = vld [vmem:[%s6 + $0x50] sm:$0xff]
    %v3083 = vld [vmem:[%s6 + $0x58] sm:$0xff]
    %v3084 = vld [vmem:[%s6 + $0x80] sm:$0xff]
    %v3085 = vld [vmem:[%s6 + $0x88] sm:$0xff]
    %v3086 = vld [vmem:[%s6 + $0x90] sm:$0xff]
    %v3087 = vld [vmem:[%s6 + $0x98] sm:$0xff]
    %v3088 = vld [vmem:[%s6 + $0xc0] sm:$0xff]
    %v3089 = vld [vmem:[%s6 + $0xc8] sm:$0xff]
    %v3090 = vld [vmem:[%s6 + $0xd0] sm:$0xff]
    %v3091 = vld [vmem:[%s6 + $0xd8] sm:$0xff]
    %v3092 = vld [vmem:[%s6 + $0x100] sm:$0xff]
    %v3093 = vld [vmem:[%s6 + $0x108] sm:$0xff]
    %v3094 = vld [vmem:[%s6 + $0x110] sm:$0xff]
    %v3095 = vld [vmem:[%s6 + $0x118] sm:$0xff]
    %v3096 = vld [vmem:[%s6 + $0x140] sm:$0xff]
    %v3097 = vld [vmem:[%s6 + $0x148] sm:$0xff]
    %v3098 = vld [vmem:[%s6 + $0x150] sm:$0xff]
    %v3099 = vld [vmem:[%s6 + $0x158] sm:$0xff]
    %v3100 = vld [vmem:[%s6 + $0x180] sm:$0xff]
    %v3101 = vld [vmem:[%s6 + $0x188] sm:$0xff]
    %v3102 = vld [vmem:[%s6 + $0x190] sm:$0xff]
    %v3103 = vld [vmem:[%s6 + $0x198] sm:$0xff]
    %v3104 = vld [vmem:[%s6 + $0x1c0] sm:$0xff]
    %v3105 = vld [vmem:[%s6 + $0x1c8] sm:$0xff]
    %v3106 = vld [vmem:[%s6 + $0x1d0] sm:$0xff]
    %v3107 = vld [vmem:[%s6 + $0x1d8] sm:$0xff]
    %vm3108 = vcmask 523264
    %v3110 = vsel %vm3108, %v2974, 0
    %v3113 = vsel %vm3108, %v2979, 0
    %v3116 = vsel %vm3108, %v2984, 0
    %v3119 = vsel %vm3108, %v2989, 0
    %v3122 = vsel %vm3108, %v2994, 0
    %v3125 = vsel %vm3108, %v2999, 0
    %v3128 = vsel %vm3108, %v3004, 0
    %v3131 = vsel %vm3108, %v3009, 0
    %3133 = vmatprep.subr.mxu0 %v3077
    %3134 = vmatpush1.msra.mxu0 %v3076
    %3135 = vmatprep.subr.mxu0 %v3081
    %3136 = vmatpush1.msra.mxu0 %v3080
    %3137 = vmatprep.subr.mxu0 %v3085
    %3138 = vmatpush1.msra.mxu0 %v3084
    %3139 = vmatprep.subr.mxu0 %v3089
    %3140 = vmatpush1.msra.mxu0 %v3088
    %3141 = vmatprep.subr.mxu0 %v3093
    %3142 = vmatpush1.msra.mxu0 %v3092
    %3143 = vmatprep.subr.mxu0 %v3097
    %3144 = vmatpush1.msra.mxu0 %v3096
    %3145 = vmatprep.subr.mxu0 %v3101
    %3146 = vmatpush1.msra.mxu0 %v3100
    %3147 = vmatprep.subr.mxu0 %v3105
    %3148 = vmatpush1.msra.mxu0 %v3104
    %3149 = vmatprep.subr.mxu0 0.0
    %3150 = vmatpush1.msra.mxu0 0.0
    %3151 = vmatprep.subr.mxu0 0.0
    %3152 = vmatpush1.msra.mxu0 0.0
    %3153 = vmatprep.subr.mxu0 0.0
    %3154 = vmatpush1.msra.mxu0 0.0
    %3155 = vmatprep.subr.mxu0 0.0
    %3156 = vmatpush1.msra.mxu0 0.0
    %3157 = vmatprep.subr.mxu0 0.0
    %3158 = vmatpush1.msra.mxu0 0.0
    %3159 = vmatprep.subr.mxu0 0.0
    %3160 = vmatpush1.msra.mxu0 0.0
    %3161 = vmatprep.subr.mxu0 0.0
    %3162 = vmatpush1.msra.mxu0 0.0
    %3163 = vmatprep.subr.mxu0 0.0
    %3164 = vmatpush1.msra.mxu0 0.0
    %3165 = vmatprep.subr.mxu0 0.0
    %3166 = vmatpush1.msra.mxu0 0.0
    %3167 = vmatprep.subr.mxu0 0.0
    %3168 = vmatpush1.msra.mxu0 0.0
    %3169 = vmatprep.subr.mxu0 0.0
    %3170 = vmatpush1.msra.mxu0 0.0
    %3171 = vmatprep.subr.mxu0 0.0
    %3172 = vmatpush1.msra.mxu0 0.0
    %3173 = vmatprep.subr.mxu0 0.0
    %3174 = vmatpush1.msra.mxu0 0.0
    %3175 = vmatprep.subr.mxu0 0.0
    %3176 = vmatpush1.msra.mxu0 0.0
    %3177 = vmatprep.subr.mxu0 0.0
    %3178 = vmatpush1.msra.mxu0 0.0
    %3179 = vmatprep.subr.mxu0 0.0
    %3180 = vmatpush1.msra.mxu0 0.0
    %3181 = vmatprep.subr.mxu0 0.0
    %3182 = vmatpush1.msra.mxu0 0.0
    %3183 = vmatprep.subr.mxu0 0.0
    %3184 = vmatpush1.msra.mxu0 0.0
    %3185 = vmatprep.subr.mxu0 0.0
    %3186 = vmatpush1.msra.mxu0 0.0
    %3187 = vmatprep.subr.mxu0 0.0
    %3188 = vmatpush1.msra.mxu0 0.0
    %3189 = vmatprep.subr.mxu0 0.0
    %3190 = vmatpush1.msra.mxu0 0.0
    %3191 = vmatprep.subr.mxu0 0.0
    %3192 = vmatpush1.msra.mxu0 0.0
    %3193 = vmatprep.subr.mxu0 0.0
    %3194 = vmatpush1.msra.mxu0 0.0
    %3195 = vmatprep.subr.mxu0 0.0
    %3196 = vmatpush1.msra.mxu0 0.0
    %3197 = vmatprep.mubr.f32.mxu0 0.0
    %3198 = vmatmul.mubr.f32.gmra.mrb[0].mxu0 %v3110
    %v3199 = vpop.f32.mrb[0].mxu0
    %v3200 = vadd.f32 0.0, %v3199
    %v3201 = vpop.f32.mrb[0].mxu0
    %v3202 = vadd.f32 0.0, %v3201
    %3203 = vmatprep.mubr.f32.mxu0 0.0
    %3204 = vmatmul.mubr.f32.gmra.mrb[0].mxu0 %v3113
    %v3205 = vpop.f32.mrb[0].mxu0
    %v3206 = vadd.f32 0.0, %v3205
    %v3207 = vpop.f32.mrb[0].mxu0
    %v3208 = vadd.f32 0.0, %v3207
    %3209 = vmatprep.mubr.f32.mxu0 0.0
    %3210 = vmatmul.mubr.f32.gmra.mrb[0].mxu0 %v3116
    %v3211 = vpop.f32.mrb[0].mxu0
    %v3212 = vadd.f32 0.0, %v3211
    %v3213 = vpop.f32.mrb[0].mxu0
    %v3214 = vadd.f32 0.0, %v3213
    %3215 = vmatprep.mubr.f32.mxu0 0.0
    %3216 = vmatmul.mubr.f32.gmra.mrb[0].mxu0 %v3119
    %v3217 = vpop.f32.mrb[0].mxu0
    %v3218 = vadd.f32 0.0, %v3217
    %v3219 = vpop.f32.mrb[0].mxu0
    %v3220 = vadd.f32 0.0, %v3219
    %3221 = vmatprep.mubr.f32.mxu0 0.0
    %3222 = vmatmul.mubr.f32.gmra.mrb[0].mxu0 %v3122
    %v3223 = vpop.f32.mrb[0].mxu0
    %v3224 = vadd.f32 0.0, %v3223
    %v3225 = vpop.f32.mrb[0].mxu0
    %v3226 = vadd.f32 0.0, %v3225
    %3227 = vmatprep.mubr.f32.mxu0 0.0
    %3228 = vmatmul.mubr.f32.gmra.mrb[0].mxu0 %v3125
    %v3229 = vpop.f32.mrb[0].mxu0
    %v3230 = vadd.f32 0.0, %v3229
    %v3231 = vpop.f32.mrb[0].mxu0
    %v3232 = vadd.f32 0.0, %v3231
    %3233 = vmatprep.mubr.f32.mxu0 0.0
    %3234 = vmatmul.mubr.f32.gmra.mrb[0].mxu0 %v3128
    %v3235 = vpop.f32.mrb[0].mxu0
    %v3236 = vadd.f32 0.0, %v3235
    %v3237 = vpop.f32.mrb[0].mxu0
    %v3238 = vadd.f32 0.0, %v3237
    %3239 = vmatprep.mubr.f32.mxu0 0.0
    %3240 = vmatmul.mubr.f32.gmra.mrb[0].mxu0 %v3131
    %v3241 = vpop.f32.mrb[0].mxu0
    %v3242 = vadd.f32 0.0, %v3241
    %v3243 = vpop.f32.mrb[0].mxu0
    %v3244 = vadd.f32 0.0, %v3243
    %3245 = vdwg.mxu0
    %3246 = vmatprep.subr.mxu0 %v3079
    %3247 = vmatpush1.msra.mxu0 %v3078
    %3248 = vmatprep.subr.mxu0 %v3083
    %3249 = vmatpush1.msra.mxu0 %v3082
    %3250 = vmatprep.subr.mxu0 %v3087
    %3251 = vmatpush1.msra.mxu0 %v3086
    %3252 = vmatprep.subr.mxu0 %v3091
    %3253 = vmatpush1.msra.mxu0 %v3090
    %3254 = vmatprep.subr.mxu0 %v3095
    %3255 = vmatpush1.msra.mxu0 %v3094
    %3256 = vmatprep.subr.mxu0 %v3099
    %3257 = vmatpush1.msra.mxu0 %v3098
    %3258 = vmatprep.subr.mxu0 %v3103
    %3259 = vmatpush1.msra.mxu0 %v3102
    %3260 = vmatprep.subr.mxu0 %v3107
    %3261 = vmatpush1.msra.mxu0 %v3106
    %3262 = vmatprep.subr.mxu0 0.0
    %3263 = vmatpush1.msra.mxu0 0.0
    %3264 = vmatprep.subr.mxu0 0.0
    %3265 = vmatpush1.msra.mxu0 0.0
    %3266 = vmatprep.subr.mxu0 0.0
    %3267 = vmatpush1.msra.mxu0 0.0
    %3268 = vmatprep.subr.mxu0 0.0
    %3269 = vmatpush1.msra.mxu0 0.0
    %3270 = vmatprep.subr.mxu0 0.0
    %3271 = vmatpush1.msra.mxu0 0.0
    %3272 = vmatprep.subr.mxu0 0.0
    %3273 = vmatpush1.msra.mxu0 0.0
    %3274 = vmatprep.subr.mxu0 0.0
    %3275 = vmatpush1.msra.mxu0 0.0
    %3276 = vmatprep.subr.mxu0 0.0
    %3277 = vmatpush1.msra.mxu0 0.0
    %3278 = vmatprep.subr.mxu0 0.0
    %3279 = vmatpush1.msra.mxu0 0.0
    %3280 = vmatprep.subr.mxu0 0.0
    %3281 = vmatpush1.msra.mxu0 0.0
    %3282 = vmatprep.subr.mxu0 0.0
    %3283 = vmatpush1.msra.mxu0 0.0
    %3284 = vmatprep.subr.mxu0 0.0
    %3285 = vmatpush1.msra.mxu0 0.0
    %3286 = vmatprep.subr.mxu0 0.0
    %3287 = vmatpush1.msra.mxu0 0.0
    %3288 = vmatprep.subr.mxu0 0.0
    %3289 = vmatpush1.msra.mxu0 0.0
    %3290 = vmatprep.subr.mxu0 0.0
    %3291 = vmatpush1.msra.mxu0 0.0
    %3292 = vmatprep.subr.mxu0 0.0
    %3293 = vmatpush1.msra.mxu0 0.0
    %3294 = vmatprep.subr.mxu0 0.0
    %3295 = vmatpush1.msra.mxu0 0.0
    %3296 = vmatprep.subr.mxu0 0.0
    %3297 = vmatpush1.msra.mxu0 0.0
    %3298 = vmatprep.subr.mxu0 0.0
    %3299 = vmatpush1.msra.mxu0 0.0
    %3300 = vmatprep.subr.mxu0 0.0
    %3301 = vmatpush1.msra.mxu0 0.0
    %3302 = vmatprep.subr.mxu0 0.0
    %3303 = vmatpush1.msra.mxu0 0.0
    %3304 = vmatprep.subr.mxu0 0.0
    %3305 = vmatpush1.msra.mxu0 0.0
    %3306 = vmatprep.subr.mxu0 0.0
    %3307 = vmatpush1.msra.mxu0 0.0
    %3308 = vmatprep.subr.mxu0 0.0
    %3309 = vmatpush1.msra.mxu0 0.0
    %3310 = vmatprep.mubr.f32.mxu0 0.0
    %3311 = vmatmul.mubr.f32.gmra.mrb[0].mxu0 %v3110
    %v3312 = vpop.f32.mrb[0].mxu0
    %v3313 = vadd.f32 0.0, %v3312
    %v3314 = vpop.f32.mrb[0].mxu0
    %v3315 = vadd.f32 0.0, %v3314
    %3316 = vmatprep.mubr.f32.mxu0 0.0
    %3317 = vmatmul.mubr.f32.gmra.mrb[0].mxu0 %v3113
    %v3318 = vpop.f32.mrb[0].mxu0
    %v3319 = vadd.f32 0.0, %v3318
    %v3320 = vpop.f32.mrb[0].mxu0
    %v3321 = vadd.f32 0.0, %v3320
    %3322 = vmatprep.mubr.f32.mxu0 0.0
    %3323 = vmatmul.mubr.f32.gmra.mrb[0].mxu0 %v3116
    %v3324 = vpop.f32.mrb[0].mxu0
    %v3325 = vadd.f32 0.0, %v3324
    %v3326 = vpop.f32.mrb[0].mxu0
    %v3327 = vadd.f32 0.0, %v3326
    %3328 = vmatprep.mubr.f32.mxu0 0.0
    %3329 = vmatmul.mubr.f32.gmra.mrb[0].mxu0 %v3119
    %v3330 = vpop.f32.mrb[0].mxu0
    %v3331 = vadd.f32 0.0, %v3330
    %v3332 = vpop.f32.mrb[0].mxu0
    %v3333 = vadd.f32 0.0, %v3332
    %3334 = vmatprep.mubr.f32.mxu0 0.0
    %3335 = vmatmul.mubr.f32.gmra.mrb[0].mxu0 %v3122
    %v3336 = vpop.f32.mrb[0].mxu0
    %v3337 = vadd.f32 0.0, %v3336
    %v3338 = vpop.f32.mrb[0].mxu0
    %v3339 = vadd.f32 0.0, %v3338
    %3340 = vmatprep.mubr.f32.mxu0 0.0
    %3341 = vmatmul.mubr.f32.gmra.mrb[0].mxu0 %v3125
    %v3342 = vpop.f32.mrb[0].mxu0
    %v3343 = vadd.f32 0.0, %v3342
    %v3344 = vpop.f32.mrb[0].mxu0
    %v3345 = vadd.f32 0.0, %v3344
    %3346 = vmatprep.mubr.f32.mxu0 0.0
    %3347 = vmatmul.mubr.f32.gmra.mrb[0].mxu0 %v3128
    %v3348 = vpop.f32.mrb[0].mxu0
    %v3349 = vadd.f32 0.0, %v3348
    %v3350 = vpop.f32.mrb[0].mxu0
    %v3351 = vadd.f32 0.0, %v3350
    %3352 = vmatprep.mubr.f32.mxu0 0.0
    %3353 = vmatmul.mubr.f32.gmra.mrb[0].mxu0 %v3131
    %v3354 = vpop.f32.mrb[0].mxu0
    %v3355 = vadd.f32 0.0, %v3354
    %v3356 = vpop.f32.mrb[0].mxu0
    %v3357 = vadd.f32 0.0, %v3356
    %3358 = vdwg.mxu0
    %3359 = vmatprep.subr.mxu0 %v3013
    %3360 = vmatpush1.msra.mxu0 %v3012
    %3361 = vmatprep.subr.mxu0 %v3017
    %3362 = vmatpush1.msra.mxu0 %v3016
    %3363 = vmatprep.subr.mxu0 %v3021
    %3364 = vmatpush1.msra.mxu0 %v3020
    %3365 = vmatprep.subr.mxu0 %v3025
    %3366 = vmatpush1.msra.mxu0 %v3024
    %3367 = vmatprep.subr.mxu0 %v3029
    %3368 = vmatpush1.msra.mxu0 %v3028
    %3369 = vmatprep.subr.mxu0 %v3033
    %3370 = vmatpush1.msra.mxu0 %v3032
    %3371 = vmatprep.subr.mxu0 %v3037
    %3372 = vmatpush1.msra.mxu0 %v3036
    %3373 = vmatprep.subr.mxu0 %v3041
    %3374 = vmatpush1.msra.mxu0 %v3040
    %3375 = vmatprep.subr.mxu0 %v3045
    %3376 = vmatpush1.msra.mxu0 %v3044
    %3377 = vmatprep.subr.mxu0 %v3049
    %3378 = vmatpush1.msra.mxu0 %v3048
    %3379 = vmatprep.subr.mxu0 %v3053
    %3380 = vmatpush1.msra.mxu0 %v3052
    %3381 = vmatprep.subr.mxu0 %v3057
    %3382 = vmatpush1.msra.mxu0 %v3056
    %3383 = vmatprep.subr.mxu0 %v3061
    %3384 = vmatpush1.msra.mxu0 %v3060
    %3385 = vmatprep.subr.mxu0 %v3065
    %3386 = vmatpush1.msra.mxu0 %v3064
    %3387 = vmatprep.subr.mxu0 %v3069
    %3388 = vmatpush1.msra.mxu0 %v3068
    %3389 = vmatprep.subr.mxu0 %v3073
    %3390 = vmatpush1.msra.mxu0 %v3072
    %3391 = vmatprep.subr.mxu0 0.0
    %3392 = vmatpush1.msra.mxu0 0.0
    %3393 = vmatprep.subr.mxu0 0.0
    %3394 = vmatpush1.msra.mxu0 0.0
    %3395 = vmatprep.subr.mxu0 0.0
    %3396 = vmatpush1.msra.mxu0 0.0
    %3397 = vmatprep.subr.mxu0 0.0
    %3398 = vmatpush1.msra.mxu0 0.0
    %3399 = vmatprep.subr.mxu0 0.0
    %3400 = vmatpush1.msra.mxu0 0.0
    %3401 = vmatprep.subr.mxu0 0.0
    %3402 = vmatpush1.msra.mxu0 0.0
    %3403 = vmatprep.subr.mxu0 0.0
    %3404 = vmatpush1.msra.mxu0 0.0
    %3405 = vmatprep.subr.mxu0 0.0
    %3406 = vmatpush1.msra.mxu0 0.0
    %3407 = vmatprep.subr.mxu0 0.0
    %3408 = vmatpush1.msra.mxu0 0.0
    %3409 = vmatprep.subr.mxu0 0.0
    %3410 = vmatpush1.msra.mxu0 0.0
    %3411 = vmatprep.subr.mxu0 0.0
    %3412 = vmatpush1.msra.mxu0 0.0
    %3413 = vmatprep.subr.mxu0 0.0
    %3414 = vmatpush1.msra.mxu0 0.0
    %3415 = vmatprep.subr.mxu0 0.0
    %3416 = vmatpush1.msra.mxu0 0.0
    %3417 = vmatprep.subr.mxu0 0.0
    %3418 = vmatpush1.msra.mxu0 0.0
    %3419 = vmatprep.subr.mxu0 0.0
    %3420 = vmatpush1.msra.mxu0 0.0
    %3421 = vmatprep.subr.mxu0 0.0
    %3422 = vmatpush1.msra.mxu0 0.0
    %3423 = vmatprep.mubr.f32.mxu0 0.0
    %3424 = vmatmul.mubr.f32.gmra.mrb[0].mxu0 %v2279
    %v3425 = vpop.f32.mrb[0].mxu0
    %v3426 = vadd.f32 %v3200, %v3425
    %v3427 = vpop.f32.mrb[0].mxu0
    %v3428 = vadd.f32 %v3202, %v3427
    %3429 = vmatprep.mubr.f32.mxu0 0.0
    %3430 = vmatmul.mubr.f32.gmra.mrb[0].mxu0 %v2280
    %v3431 = vpop.f32.mrb[0].mxu0
    %v3432 = vadd.f32 %v3206, %v3431
    %v3433 = vpop.f32.mrb[0].mxu0
    %v3434 = vadd.f32 %v3208, %v3433
    %3435 = vmatprep.mubr.f32.mxu0 0.0
    %3436 = vmatmul.mubr.f32.gmra.mrb[0].mxu0 %v2281
    %v3437 = vpop.f32.mrb[0].mxu0
    %v3438 = vadd.f32 %v3212, %v3437
    %v3439 = vpop.f32.mrb[0].mxu0
    %v3440 = vadd.f32 %v3214, %v3439
    %3441 = vmatprep.mubr.f32.mxu0 0.0
    %3442 = vmatmul.mubr.f32.gmra.mrb[0].mxu0 %v2282
    %v3443 = vpop.f32.mrb[0].mxu0
    %v3444 = vadd.f32 %v3218, %v3443
    %v3445 = vpop.f32.mrb[0].mxu0
    %v3446 = vadd.f32 %v3220, %v3445
    %3447 = vmatprep.mubr.f32.mxu0 0.0
    %3448 = vmatmul.mubr.f32.gmra.mrb[0].mxu0 %v2283
    %v3449 = vpop.f32.mrb[0].mxu0
    %v3450 = vadd.f32 %v3224, %v3449
    %v3451 = vpop.f32.mrb[0].mxu0
    %v3452 = vadd.f32 %v3226, %v3451
    %3453 = vmatprep.mubr.f32.mxu0 0.0
    %3454 = vmatmul.mubr.f32.gmra.mrb[0].mxu0 %v2284
    %v3455 = vpop.f32.mrb[0].mxu0
    %v3456 = vadd.f32 %v3230, %v3455
    %v3457 = vpop.f32.mrb[0].mxu0
    %v3458 = vadd.f32 %v3232, %v3457
    %3459 = vmatprep.mubr.f32.mxu0 0.0
    %3460 = vmatmul.mubr.f32.gmra.mrb[0].mxu0 %v2285
    %v3461 = vpop.f32.mrb[0].mxu0
    %v3462 = vadd.f32 %v3236, %v3461
    %v3463 = vpop.f32.mrb[0].mxu0
    %v3464 = vadd.f32 %v3238, %v3463
    %3465 = vmatprep.mubr.f32.mxu0 0.0
    %3466 = vmatmul.mubr.f32.gmra.mrb[0].mxu0 %v2286
    %v3467 = vpop.f32.mrb[0].mxu0
    %v3468 = vadd.f32 %v3242, %v3467
    %v3469 = vpop.f32.mrb[0].mxu0
    %v3470 = vadd.f32 %v3244, %v3469
    %3471 = vdwg.mxu0
    %3472 = vmatprep.subr.mxu0 %v3015
    %3473 = vmatpush1.msra.mxu0 %v3014
    %3474 = vmatprep.subr.mxu0 %v3019
    %3475 = vmatpush1.msra.mxu0 %v3018
    %3476 = vmatprep.subr.mxu0 %v3023
    %3477 = vmatpush1.msra.mxu0 %v3022
    %3478 = vmatprep.subr.mxu0 %v3027
    %3479 = vmatpush1.msra.mxu0 %v3026
    %3480 = vmatprep.subr.mxu0 %v3031
    %3481 = vmatpush1.msra.mxu0 %v3030
    %3482 = vmatprep.subr.mxu0 %v3035
    %3483 = vmatpush1.msra.mxu0 %v3034
    %3484 = vmatprep.subr.mxu0 %v3039
    %3485 = vmatpush1.msra.mxu0 %v3038
    %3486 = vmatprep.subr.mxu0 %v3043
    %3487 = vmatpush1.msra.mxu0 %v3042
    %3488 = vmatprep.subr.mxu0 %v3047
    %3489 = vmatpush1.msra.mxu0 %v3046
    %3490 = vmatprep.subr.mxu0 %v3051
    %3491 = vmatpush1.msra.mxu0 %v3050
    %3492 = vmatprep.subr.mxu0 %v3055
    %3493 = vmatpush1.msra.mxu0 %v3054
    %3494 = vmatprep.subr.mxu0 %v3059
    %3495 = vmatpush1.msra.mxu0 %v3058
    %3496 = vmatprep.subr.mxu0 %v3063
    %3497 = vmatpush1.msra.mxu0 %v3062
    %3498 = vmatprep.subr.mxu0 %v3067
    %3499 = vmatpush1.msra.mxu0 %v3066
    %3500 = vmatprep.subr.mxu0 %v3071
    %3501 = vmatpush1.msra.mxu0 %v3070
    %3502 = vmatprep.subr.mxu0 %v3075
    %3503 = vmatpush1.msra.mxu0 %v3074
    %3504 = vmatprep.subr.mxu0 0.0
    %3505 = vmatpush1.msra.mxu0 0.0
    %3506 = vmatprep.subr.mxu0 0.0
    %3507 = vmatpush1.msra.mxu0 0.0
    %3508 = vmatprep.subr.mxu0 0.0
    %3509 = vmatpush1.msra.mxu0 0.0
    %3510 = vmatprep.subr.mxu0 0.0
    %3511 = vmatpush1.msra.mxu0 0.0
    %3512 = vmatprep.subr.mxu0 0.0
    %3513 = vmatpush1.msra.mxu0 0.0
    %3514 = vmatprep.subr.mxu0 0.0
    %3515 = vmatpush1.msra.mxu0 0.0
    %3516 = vmatprep.subr.mxu0 0.0
    %3517 = vmatpush1.msra.mxu0 0.0
    %3518 = vmatprep.subr.mxu0 0.0
    %3519 = vmatpush1.msra.mxu0 0.0
    %3520 = vmatprep.subr.mxu0 0.0
    %3521 = vmatpush1.msra.mxu0 0.0
    %3522 = vmatprep.subr.mxu0 0.0
    %3523 = vmatpush1.msra.mxu0 0.0
    %3524 = vmatprep.subr.mxu0 0.0
    %3525 = vmatpush1.msra.mxu0 0.0
    %3526 = vmatprep.subr.mxu0 0.0
    %3527 = vmatpush1.msra.mxu0 0.0
    %3528 = vmatprep.subr.mxu0 0.0
    %3529 = vmatpush1.msra.mxu0 0.0
    %3530 = vmatprep.subr.mxu0 0.0
    %3531 = vmatpush1.msra.mxu0 0.0
    %3532 = vmatprep.subr.mxu0 0.0
    %3533 = vmatpush1.msra.mxu0 0.0
    %3534 = vmatprep.subr.mxu0 0.0
    %3535 = vmatpush1.msra.mxu0 0.0
    %3536 = vmatprep.mubr.f32.mxu0 0.0
    %3537 = vmatmul.mubr.f32.gmra.mrb[0].mxu0 %v2279
    %v3538 = vpop.f32.mrb[0].mxu0
    %v3539 = vadd.f32 %v3313, %v3538
    %v3540 = vpop.f32.mrb[0].mxu0
    %v3541 = vadd.f32 %v3315, %v3540
    %3542 = vmatprep.mubr.f32.mxu0 0.0
    %3543 = vmatmul.mubr.f32.gmra.mrb[0].mxu0 %v2280
    %v3544 = vpop.f32.mrb[0].mxu0
    %v3545 = vadd.f32 %v3319, %v3544
    %v3546 = vpop.f32.mrb[0].mxu0
    %v3547 = vadd.f32 %v3321, %v3546
    %3548 = vmatprep.mubr.f32.mxu0 0.0
    %3549 = vmatmul.mubr.f32.gmra.mrb[0].mxu0 %v2281
    %v3550 = vpop.f32.mrb[0].mxu0
    %v3551 = vadd.f32 %v3325, %v3550
    %v3552 = vpop.f32.mrb[0].mxu0
    %v3553 = vadd.f32 %v3327, %v3552
    %3554 = vmatprep.mubr.f32.mxu0 0.0
    %3555 = vmatmul.mubr.f32.gmra.mrb[0].mxu0 %v2282
    %v3556 = vpop.f32.mrb[0].mxu0
    %v3557 = vadd.f32 %v3331, %v3556
    %v3558 = vpop.f32.mrb[0].mxu0
    %v3559 = vadd.f32 %v3333, %v3558
    %3560 = vmatprep.mubr.f32.mxu0 0.0
    %3561 = vmatmul.mubr.f32.gmra.mrb[0].mxu0 %v2283
    %v3562 = vpop.f32.mrb[0].mxu0
    %v3563 = vadd.f32 %v3337, %v3562
    %v3564 = vpop.f32.mrb[0].mxu0
    %v3565 = vadd.f32 %v3339, %v3564
    %3566 = vmatprep.mubr.f32.mxu0 0.0
    %3567 = vmatmul.mubr.f32.gmra.mrb[0].mxu0 %v2284
    %v3568 = vpop.f32.mrb[0].mxu0
    %v3569 = vadd.f32 %v3343, %v3568
    %v3570 = vpop.f32.mrb[0].mxu0
    %v3571 = vadd.f32 %v3345, %v3570
    %3572 = vmatprep.mubr.f32.mxu0 0.0
    %3573 = vmatmul.mubr.f32.gmra.mrb[0].mxu0 %v2285
    %v3574 = vpop.f32.mrb[0].mxu0
    %v3575 = vadd.f32 %v3349, %v3574
    %v3576 = vpop.f32.mrb[0].mxu0
    %v3577 = vadd.f32 %v3351, %v3576
    %3578 = vmatprep.mubr.f32.mxu0 0.0
    %3579 = vmatmul.mubr.f32.gmra.mrb[0].mxu0 %v2286
    %v3580 = vpop.f32.mrb[0].mxu0
    %v3581 = vadd.f32 %v3355, %v3580
    %v3582 = vpop.f32.mrb[0].mxu0
    %v3583 = vadd.f32 %v3357, %v3582
    %3584 = vdwg.mxu0
    %v3585 = vld [vmem:[%s6 + $0x20] sm:$0xff]
    %v3586 = vld [vmem:[%s6 + $0x28] sm:$0xff]
    %v3587 = vld [vmem:[%s6 + $0x30] sm:$0xff]
    %v3588 = vld [vmem:[%s6 + $0x38] sm:$0xff]
    %v3589 = vld [vmem:[%s6 + $0x60] sm:$0xff]
    %v3590 = vld [vmem:[%s6 + $0x68] sm:$0xff]
    %v3591 = vld [vmem:[%s6 + $0x70] sm:$0xff]
    %v3592 = vld [vmem:[%s6 + $0x78] sm:$0xff]
    %v3593 = vld [vmem:[%s6 + $0xa0] sm:$0xff]
    %v3594 = vld [vmem:[%s6 + $0xa8] sm:$0xff]
    %v3595 = vld [vmem:[%s6 + $0xb0] sm:$0xff]
    %v3596 = vld [vmem:[%s6 + $0xb8] sm:$0xff]
    %v3597 = vld [vmem:[%s6 + $0xe0] sm:$0xff]
    %v3598 = vld [vmem:[%s6 + $0xe8] sm:$0xff]
    %v3599 = vld [vmem:[%s6 + $0xf0] sm:$0xff]
    %v3600 = vld [vmem:[%s6 + $0xf8] sm:$0xff]
    %v3601 = vld [vmem:[%s6 + $0x120] sm:$0xff]
    %v3602 = vld [vmem:[%s6 + $0x128] sm:$0xff]
    %v3603 = vld [vmem:[%s6 + $0x130] sm:$0xff]
    %v3604 = vld [vmem:[%s6 + $0x138] sm:$0xff]
    %v3605 = vld [vmem:[%s6 + $0x160] sm:$0xff]
    %v3606 = vld [vmem:[%s6 + $0x168] sm:$0xff]
    %v3607 = vld [vmem:[%s6 + $0x170] sm:$0xff]
    %v3608 = vld [vmem:[%s6 + $0x178] sm:$0xff]
    %v3609 = vld [vmem:[%s6 + $0x1a0] sm:$0xff]
    %v3610 = vld [vmem:[%s6 + $0x1a8] sm:$0xff]
    %v3611 = vld [vmem:[%s6 + $0x1b0] sm:$0xff]
    %v3612 = vld [vmem:[%s6 + $0x1b8] sm:$0xff]
    %v3613 = vld [vmem:[%s6 + $0x1e0] sm:$0xff]
    %v3614 = vld [vmem:[%s6 + $0x1e8] sm:$0xff]
    %v3615 = vld [vmem:[%s6 + $0x1f0] sm:$0xff]
    %v3616 = vld [vmem:[%s6 + $0x1f8] sm:$0xff]
    %v3618 = vsel %vm3108, %v2517, 0
    %v3621 = vsel %vm3108, %v2522, 0
    %v3624 = vsel %vm3108, %v2527, 0
    %v3627 = vsel %vm3108, %v2532, 0
    %v3630 = vsel %vm3108, %v2537, 0
    %v3633 = vsel %vm3108, %v2542, 0
    %v3636 = vsel %vm3108, %v2547, 0
    %v3639 = vsel %vm3108, %v2552, 0
    %3641 = vmatprep.subr.mxu0 %v3586
    %3642 = vmatpush1.msra.mxu0 %v3585
    %3643 = vmatprep.subr.mxu0 %v3590
    %3644 = vmatpush1.msra.mxu0 %v3589
    %3645 = vmatprep.subr.mxu0 %v3594
    %3646 = vmatpush1.msra.mxu0 %v3593
    %3647 = vmatprep.subr.mxu0 %v3598
    %3648 = vmatpush1.msra.mxu0 %v3597
    %3649 = vmatprep.subr.mxu0 %v3602
    %3650 = vmatpush1.msra.mxu0 %v3601
    %3651 = vmatprep.subr.mxu0 %v3606
    %3652 = vmatpush1.msra.mxu0 %v3605
    %3653 = vmatprep.subr.mxu0 %v3610
    %3654 = vmatpush1.msra.mxu0 %v3609
    %3655 = vmatprep.subr.mxu0 %v3614
    %3656 = vmatpush1.msra.mxu0 %v3613
    %3657 = vmatprep.subr.mxu0 0.0
    %3658 = vmatpush1.msra.mxu0 0.0
    %3659 = vmatprep.subr.mxu0 0.0
    %3660 = vmatpush1.msra.mxu0 0.0
    %3661 = vmatprep.subr.mxu0 0.0
    %3662 = vmatpush1.msra.mxu0 0.0
    %3663 = vmatprep.subr.mxu0 0.0
    %3664 = vmatpush1.msra.mxu0 0.0
    %3665 = vmatprep.subr.mxu0 0.0
    %3666 = vmatpush1.msra.mxu0 0.0
    %3667 = vmatprep.subr.mxu0 0.0
    %3668 = vmatpush1.msra.mxu0 0.0
    %3669 = vmatprep.subr.mxu0 0.0
    %3670 = vmatpush1.msra.mxu0 0.0
    %3671 = vmatprep.subr.mxu0 0.0
    %3672 = vmatpush1.msra.mxu0 0.0
    %3673 = vmatprep.subr.mxu0 0.0
    %3674 = vmatpush1.msra.mxu0 0.0
    %3675 = vmatprep.subr.mxu0 0.0
    %3676 = vmatpush1.msra.mxu0 0.0
    %3677 = vmatprep.subr.mxu0 0.0
    %3678 = vmatpush1.msra.mxu0 0.0
    %3679 = vmatprep.subr.mxu0 0.0
    %3680 = vmatpush1.msra.mxu0 0.0
    %3681 = vmatprep.subr.mxu0 0.0
    %3682 = vmatpush1.msra.mxu0 0.0
    %3683 = vmatprep.subr.mxu0 0.0
    %3684 = vmatpush1.msra.mxu0 0.0
    %3685 = vmatprep.subr.mxu0 0.0
    %3686 = vmatpush1.msra.mxu0 0.0
    %3687 = vmatprep.subr.mxu0 0.0
    %3688 = vmatpush1.msra.mxu0 0.0
    %3689 = vmatprep.subr.mxu0 0.0
    %3690 = vmatpush1.msra.mxu0 0.0
    %3691 = vmatprep.subr.mxu0 0.0
    %3692 = vmatpush1.msra.mxu0 0.0
    %3693 = vmatprep.subr.mxu0 0.0
    %3694 = vmatpush1.msra.mxu0 0.0
    %3695 = vmatprep.subr.mxu0 0.0
    %3696 = vmatpush1.msra.mxu0 0.0
    %3697 = vmatprep.subr.mxu0 0.0
    %3698 = vmatpush1.msra.mxu0 0.0
    %3699 = vmatprep.subr.mxu0 0.0
    %3700 = vmatpush1.msra.mxu0 0.0
    %3701 = vmatprep.subr.mxu0 0.0
    %3702 = vmatpush1.msra.mxu0 0.0
    %3703 = vmatprep.subr.mxu0 0.0
    %3704 = vmatpush1.msra.mxu0 0.0
    %3705 = vmatprep.mubr.f32.mxu0 0.0
    %3706 = vmatmul.mubr.f32.gmra.mrb[0].mxu0 %v3618
    %v3707 = vpop.f32.mrb[0].mxu0
    %v3708 = vadd.f32 0.0, %v3707
    %v3709 = vpop.f32.mrb[0].mxu0
    %v3710 = vadd.f32 0.0, %v3709
    %3711 = vmatprep.mubr.f32.mxu0 0.0
    %3712 = vmatmul.mubr.f32.gmra.mrb[0].mxu0 %v3621
    %v3713 = vpop.f32.mrb[0].mxu0
    %v3714 = vadd.f32 0.0, %v3713
    %v3715 = vpop.f32.mrb[0].mxu0
    %v3716 = vadd.f32 0.0, %v3715
    %3717 = vmatprep.mubr.f32.mxu0 0.0
    %3718 = vmatmul.mubr.f32.gmra.mrb[0].mxu0 %v3624
    %v3719 = vpop.f32.mrb[0].mxu0
    %v3720 = vadd.f32 0.0, %v3719
    %v3721 = vpop.f32.mrb[0].mxu0
    %v3722 = vadd.f32 0.0, %v3721
    %3723 = vmatprep.mubr.f32.mxu0 0.0
    %3724 = vmatmul.mubr.f32.gmra.mrb[0].mxu0 %v3627
    %v3725 = vpop.f32.mrb[0].mxu0
    %v3726 = vadd.f32 0.0, %v3725
    %v3727 = vpop.f32.mrb[0].mxu0
    %v3728 = vadd.f32 0.0, %v3727
    %3729 = vmatprep.mubr.f32.mxu0 0.0
    %3730 = vmatmul.mubr.f32.gmra.mrb[0].mxu0 %v3630
    %v3731 = vpop.f32.mrb[0].mxu0
    %v3732 = vadd.f32 0.0, %v3731
    %v3733 = vpop.f32.mrb[0].mxu0
    %v3734 = vadd.f32 0.0, %v3733
    %3735 = vmatprep.mubr.f32.mxu0 0.0
    %3736 = vmatmul.mubr.f32.gmra.mrb[0].mxu0 %v3633
    %v3737 = vpop.f32.mrb[0].mxu0
    %v3738 = vadd.f32 0.0, %v3737
    %v3739 = vpop.f32.mrb[0].mxu0
    %v3740 = vadd.f32 0.0, %v3739
    %3741 = vmatprep.mubr.f32.mxu0 0.0
    %3742 = vmatmul.mubr.f32.gmra.mrb[0].mxu0 %v3636
    %v3743 = vpop.f32.mrb[0].mxu0
    %v3744 = vadd.f32 0.0, %v3743
    %v3745 = vpop.f32.mrb[0].mxu0
    %v3746 = vadd.f32 0.0, %v3745
    %3747 = vmatprep.mubr.f32.mxu0 0.0
    %3748 = vmatmul.mubr.f32.gmra.mrb[0].mxu0 %v3639
    %v3749 = vpop.f32.mrb[0].mxu0
    %v3750 = vadd.f32 0.0, %v3749
    %v3751 = vpop.f32.mrb[0].mxu0
    %v3752 = vadd.f32 0.0, %v3751
    %3753 = vdwg.mxu0
    %3754 = vmatprep.subr.mxu0 %v3588
    %3755 = vmatpush1.msra.mxu0 %v3587
    %3756 = vmatprep.subr.mxu0 %v3592
    %3757 = vmatpush1.msra.mxu0 %v3591
    %3758 = vmatprep.subr.mxu0 %v3596
    %3759 = vmatpush1.msra.mxu0 %v3595
    %3760 = vmatprep.subr.mxu0 %v3600
    %3761 = vmatpush1.msra.mxu0 %v3599
    %3762 = vmatprep.subr.mxu0 %v3604
    %3763 = vmatpush1.msra.mxu0 %v3603
    %3764 = vmatprep.subr.mxu0 %v3608
    %3765 = vmatpush1.msra.mxu0 %v3607
    %3766 = vmatprep.subr.mxu0 %v3612
    %3767 = vmatpush1.msra.mxu0 %v3611
    %3768 = vmatprep.subr.mxu0 %v3616
    %3769 = vmatpush1.msra.mxu0 %v3615
    %3770 = vmatprep.subr.mxu0 0.0
    %3771 = vmatpush1.msra.mxu0 0.0
    %3772 = vmatprep.subr.mxu0 0.0
    %3773 = vmatpush1.msra.mxu0 0.0
    %3774 = vmatprep.subr.mxu0 0.0
    %3775 = vmatpush1.msra.mxu0 0.0
    %3776 = vmatprep.subr.mxu0 0.0
    %3777 = vmatpush1.msra.mxu0 0.0
    %3778 = vmatprep.subr.mxu0 0.0
    %3779 = vmatpush1.msra.mxu0 0.0
    %3780 = vmatprep.subr.mxu0 0.0
    %3781 = vmatpush1.msra.mxu0 0.0
    %3782 = vmatprep.subr.mxu0 0.0
    %3783 = vmatpush1.msra.mxu0 0.0
    %3784 = vmatprep.subr.mxu0 0.0
    %3785 = vmatpush1.msra.mxu0 0.0
    %3786 = vmatprep.subr.mxu0 0.0
    %3787 = vmatpush1.msra.mxu0 0.0
    %3788 = vmatprep.subr.mxu0 0.0
    %3789 = vmatpush1.msra.mxu0 0.0
    %3790 = vmatprep.subr.mxu0 0.0
    %3791 = vmatpush1.msra.mxu0 0.0
    %3792 = vmatprep.subr.mxu0 0.0
    %3793 = vmatpush1.msra.mxu0 0.0
    %3794 = vmatprep.subr.mxu0 0.0
    %3795 = vmatpush1.msra.mxu0 0.0
    %3796 = vmatprep.subr.mxu0 0.0
    %3797 = vmatpush1.msra.mxu0 0.0
    %3798 = vmatprep.subr.mxu0 0.0
    %3799 = vmatpush1.msra.mxu0 0.0
    %3800 = vmatprep.subr.mxu0 0.0
    %3801 = vmatpush1.msra.mxu0 0.0
    %3802 = vmatprep.subr.mxu0 0.0
    %3803 = vmatpush1.msra.mxu0 0.0
    %3804 = vmatprep.subr.mxu0 0.0
    %3805 = vmatpush1.msra.mxu0 0.0
    %3806 = vmatprep.subr.mxu0 0.0
    %3807 = vmatpush1.msra.mxu0 0.0
    %3808 = vmatprep.subr.mxu0 0.0
    %3809 = vmatpush1.msra.mxu0 0.0
    %3810 = vmatprep.subr.mxu0 0.0
    %3811 = vmatpush1.msra.mxu0 0.0
    %3812 = vmatprep.subr.mxu0 0.0
    %3813 = vmatpush1.msra.mxu0 0.0
    %3814 = vmatprep.subr.mxu0 0.0
    %3815 = vmatpush1.msra.mxu0 0.0
    %3816 = vmatprep.subr.mxu0 0.0
    %3817 = vmatpush1.msra.mxu0 0.0
    %3818 = vmatprep.mubr.f32.mxu0 0.0
    %3819 = vmatmul.mubr.f32.gmra.mrb[0].mxu0 %v3618
    %v3820 = vpop.f32.mrb[0].mxu0
    %v3821 = vadd.f32 0.0, %v3820
    %v3822 = vpop.f32.mrb[0].mxu0
    %v3823 = vadd.f32 0.0, %v3822
    %3824 = vmatprep.mubr.f32.mxu0 0.0
    %3825 = vmatmul.mubr.f32.gmra.mrb[0].mxu0 %v3621
    %v3826 = vpop.f32.mrb[0].mxu0
    %v3827 = vadd.f32 0.0, %v3826
    %v3828 = vpop.f32.mrb[0].mxu0
    %v3829 = vadd.f32 0.0, %v3828
    %3830 = vmatprep.mubr.f32.mxu0 0.0
    %3831 = vmatmul.mubr.f32.gmra.mrb[0].mxu0 %v3624
    %v3832 = vpop.f32.mrb[0].mxu0
    %v3833 = vadd.f32 0.0, %v3832
    %v3834 = vpop.f32.mrb[0].mxu0
    %v3835 = vadd.f32 0.0, %v3834
    %3836 = vmatprep.mubr.f32.mxu0 0.0
    %3837 = vmatmul.mubr.f32.gmra.mrb[0].mxu0 %v3627
    %v3838 = vpop.f32.mrb[0].mxu0
    %v3839 = vadd.f32 0.0, %v3838
    %v3840 = vpop.f32.mrb[0].mxu0
    %v3841 = vadd.f32 0.0, %v3840
    %3842 = vmatprep.mubr.f32.mxu0 0.0
    %3843 = vmatmul.mubr.f32.gmra.mrb[0].mxu0 %v3630
    %v3844 = vpop.f32.mrb[0].mxu0
    %v3845 = vadd.f32 0.0, %v3844
    %v3846 = vpop.f32.mrb[0].mxu0
    %v3847 = vadd.f32 0.0, %v3846
    %3848 = vmatprep.mubr.f32.mxu0 0.0
    %3849 = vmatmul.mubr.f32.gmra.mrb[0].mxu0 %v3633
    %v3850 = vpop.f32.mrb[0].mxu0
    %v3851 = vadd.f32 0.0, %v3850
    %v3852 = vpop.f32.mrb[0].mxu0
    %v3853 = vadd.f32 0.0, %v3852
    %3854 = vmatprep.mubr.f32.mxu0 0.0
    %3855 = vmatmul.mubr.f32.gmra.mrb[0].mxu0 %v3636
    %v3856 = vpop.f32.mrb[0].mxu0
    %v3857 = vadd.f32 0.0, %v3856
    %v3858 = vpop.f32.mrb[0].mxu0
    %v3859 = vadd.f32 0.0, %v3858
    %3860 = vmatprep.mubr.f32.mxu0 0.0
    %3861 = vmatmul.mubr.f32.gmra.mrb[0].mxu0 %v3639
    %v3862 = vpop.f32.mrb[0].mxu0
    %v3863 = vadd.f32 0.0, %v3862
    %v3864 = vpop.f32.mrb[0].mxu0
    %v3865 = vadd.f32 0.0, %v3864
    %3866 = vdwg.mxu0
    %v3867 = vadd.f32 %v3426, %v3708
    %v3868 = vadd.f32 %v3428, %v3710
    %v3869 = vadd.f32 %v3539, %v3821
    %v3870 = vadd.f32 %v3541, %v3823
    %v3871 = vadd.f32 %v3432, %v3714
    %v3872 = vadd.f32 %v3434, %v3716
    %v3873 = vadd.f32 %v3545, %v3827
    %v3874 = vadd.f32 %v3547, %v3829
    %v3875 = vadd.f32 %v3438, %v3720
    %v3876 = vadd.f32 %v3440, %v3722
    %v3877 = vadd.f32 %v3551, %v3833
    %v3878 = vadd.f32 %v3553, %v3835
    %v3879 = vadd.f32 %v3444, %v3726
    %v3880 = vadd.f32 %v3446, %v3728
    %v3881 = vadd.f32 %v3557, %v3839
    %v3882 = vadd.f32 %v3559, %v3841
    %v3883 = vadd.f32 %v3450, %v3732
    %v3884 = vadd.f32 %v3452, %v3734
    %v3885 = vadd.f32 %v3563, %v3845
    %v3886 = vadd.f32 %v3565, %v3847
    %v3887 = vadd.f32 %v3456, %v3738
    %v3888 = vadd.f32 %v3458, %v3740
    %v3889 = vadd.f32 %v3569, %v3851
    %v3890 = vadd.f32 %v3571, %v3853
    %v3891 = vadd.f32 %v3462, %v3744
    %v3892 = vadd.f32 %v3464, %v3746
    %v3893 = vadd.f32 %v3575, %v3857
    %v3894 = vadd.f32 %v3577, %v3859
    %v3895 = vadd.f32 %v3468, %v3750
    %v3896 = vadd.f32 %v3470, %v3752
    %v3897 = vadd.f32 %v3581, %v3863
    %v3898 = vadd.f32 %v3583, %v3865
    %s3899 = scalar_lea.vmem %s7, 81
    %v3900 = vld [vmem:[%s3899] ss:$8 sm:$0xf]
    %v3902 = vlaneseq
    %v3903 = vshrl.u32 %v3902, 7
    %v3904 = vsub.s32 0, %v3903
    %v3905 = vrot.slane %v3900, %v3904
    %v3906 = vlaneseq
    %v3907 = vshrl.u32 %v3906, 7
    %v3908 = vsub.s32 1, %v3907
    %v3909 = vrot.slane %v3900, %v3908
    %v3910 = vlaneseq
    %v3911 = vshrl.u32 %v3910, 7
    %v3912 = vsub.s32 2, %v3911
    %v3913 = vrot.slane %v3900, %v3912
    %v3914 = vlaneseq
    %v3915 = vshrl.u32 %v3914, 7
    %v3916 = vsub.s32 3, %v3915
    %v3917 = vrot.slane %v3900, %v3916
    %v3922 = vadd.f32 %v3867, %v3905
    %v3923 = vadd.f32 %v3868, %v3909
    %v3924 = vadd.f32 %v3869, %v3913
    %v3925 = vadd.f32 %v3870, %v3917
    %v3926 = vadd.f32 %v3871, %v3905
    %v3927 = vadd.f32 %v3872, %v3909
    %v3928 = vadd.f32 %v3873, %v3913
    %v3929 = vadd.f32 %v3874, %v3917
    %v3930 = vadd.f32 %v3875, %v3905
    %v3931 = vadd.f32 %v3876, %v3909
    %v3932 = vadd.f32 %v3877, %v3913
    %v3933 = vadd.f32 %v3878, %v3917
    %v3934 = vadd.f32 %v3879, %v3905
    %v3935 = vadd.f32 %v3880, %v3909
    %v3936 = vadd.f32 %v3881, %v3913
    %v3937 = vadd.f32 %v3882, %v3917
    %v3938 = vadd.f32 %v3883, %v3905
    %v3939 = vadd.f32 %v3884, %v3909
    %v3940 = vadd.f32 %v3885, %v3913
    %v3941 = vadd.f32 %v3886, %v3917
    %v3942 = vadd.f32 %v3887, %v3905
    %v3943 = vadd.f32 %v3888, %v3909
    %v3944 = vadd.f32 %v3889, %v3913
    %v3945 = vadd.f32 %v3890, %v3917
    %v3946 = vadd.f32 %v3891, %v3905
    %v3947 = vadd.f32 %v3892, %v3909
    %v3948 = vadd.f32 %v3893, %v3913
    %v3949 = vadd.f32 %v3894, %v3917
    %v3950 = vadd.f32 %v3895, %v3905
    %v3951 = vadd.f32 %v3896, %v3909
    %v3952 = vadd.f32 %v3897, %v3913
    %v3953 = vadd.f32 %v3898, %v3917
    %v3954 = vmax.f32 %v3922, 0.0
    %v3955 = vmax.f32 %v3923, 0.0
    %v3956 = vmax.f32 %v3924, 0.0
    %v3957 = vmax.f32 %v3925, 0.0
    %v3958 = vmax.f32 %v3926, 0.0
    %v3959 = vmax.f32 %v3927, 0.0
    %v3960 = vmax.f32 %v3928, 0.0
    %v3961 = vmax.f32 %v3929, 0.0
    %v3962 = vmax.f32 %v3930, 0.0
    %v3963 = vmax.f32 %v3931, 0.0
    %v3964 = vmax.f32 %v3932, 0.0
    %v3965 = vmax.f32 %v3933, 0.0
    %v3966 = vmax.f32 %v3934, 0.0
    %v3967 = vmax.f32 %v3935, 0.0
    %v3968 = vmax.f32 %v3936, 0.0
    %v3969 = vmax.f32 %v3937, 0.0
    %v3970 = vmax.f32 %v3938, 0.0
    %v3971 = vmax.f32 %v3939, 0.0
    %v3972 = vmax.f32 %v3940, 0.0
    %v3973 = vmax.f32 %v3941, 0.0
    %v3974 = vmax.f32 %v3942, 0.0
    %v3975 = vmax.f32 %v3943, 0.0
    %v3976 = vmax.f32 %v3944, 0.0
    %v3977 = vmax.f32 %v3945, 0.0
    %v3978 = vmax.f32 %v3946, 0.0
    %v3979 = vmax.f32 %v3947, 0.0
    %v3980 = vmax.f32 %v3948, 0.0
    %v3981 = vmax.f32 %v3949, 0.0
    %v3982 = vmax.f32 %v3950, 0.0
    %v3983 = vmax.f32 %v3951, 0.0
    %v3984 = vmax.f32 %v3952, 0.0
    %v3985 = vmax.f32 %v3953, 0.0
    %v3986 = vld [vmem:[%s5 + $0x10] sm:$0xff]
    %v3987 = vld [vmem:[%s5 + $0x18] sm:$0xff]
    %v3988 = vld [vmem:[%s5 + $0x38] sm:$0xff]
    %v3989 = vld [vmem:[%s5 + $0x40] sm:$0xff]
    %v3990 = vld [vmem:[%s5 + $0x60] sm:$0xff]
    %v3991 = vld [vmem:[%s5 + $0x68] sm:$0xff]
    %v3992 = vld [vmem:[%s5 + $0x88] sm:$0xff]
    %v3993 = vld [vmem:[%s5 + $0x90] sm:$0xff]
    %v3994 = vld [vmem:[%s5 + $0xb0] sm:$0xff]
    %v3995 = vld [vmem:[%s5 + $0xb8] sm:$0xff]
    %v3996 = vld [vmem:[%s5 + $0xd8] sm:$0xff]
    %v3997 = vld [vmem:[%s5 + $0xe0] sm:$0xff]
    %v3998 = vld [vmem:[%s5 + $0x100] sm:$0xff]
    %v3999 = vld [vmem:[%s5 + $0x108] sm:$0xff]
    %v4000 = vld [vmem:[%s5 + $0x128] sm:$0xff]
    %v4001 = vld [vmem:[%s5 + $0x130] sm:$0xff]
    %v4002 = vld [vmem:[%s5 + $0x150] sm:$0xff]
    %v4003 = vld [vmem:[%s5 + $0x158] sm:$0xff]
    %v4004 = vld [vmem:[%s5 + $0x178] sm:$0xff]
    %v4005 = vld [vmem:[%s5 + $0x180] sm:$0xff]
    %v4006 = vld [vmem:[%s5 + $0x1a0] sm:$0xff]
    %v4007 = vld [vmem:[%s5 + $0x1a8] sm:$0xff]
    %v4008 = vld [vmem:[%s5 + $0x1c8] sm:$0xff]
    %v4009 = vld [vmem:[%s5 + $0x1d0] sm:$0xff]
    %v4010 = vld [vmem:[%s5 + $0x1f0] sm:$0xff]
    %v4011 = vld [vmem:[%s5 + $0x1f8] sm:$0xff]
    %v4012 = vld [vmem:[%s5 + $0x218] sm:$0xff]
    %v4013 = vld [vmem:[%s5 + $0x220] sm:$0xff]
    %v4014 = vld [vmem:[%s5 + $0x240] sm:$0xff]
    %v4015 = vld [vmem:[%s5 + $0x248] sm:$0xff]
    %v4016 = vld [vmem:[%s5 + $0x268] sm:$0xff]
    %v4017 = vld [vmem:[%s5 + $0x270] sm:$0xff]
    %v4018 = vld [vmem:[%s5 + $0x290] sm:$0xff]
    %v4019 = vld [vmem:[%s5 + $0x298] sm:$0xff]
    %v4020 = vld [vmem:[%s5 + $0x2b8] sm:$0xff]
    %v4021 = vld [vmem:[%s5 + $0x2c0] sm:$0xff]
    %v4022 = vld [vmem:[%s5 + $0x2e0] sm:$0xff]
    %v4023 = vld [vmem:[%s5 + $0x2e8] sm:$0xff]
    %v4024 = vld [vmem:[%s5 + $0x308] sm:$0xff]
    %v4025 = vld [vmem:[%s5 + $0x310] sm:$0xff]
    %v4026 = vld [vmem:[%s5 + $0x330] sm:$0xff]
    %v4027 = vld [vmem:[%s5 + $0x338] sm:$0xff]
    %v4028 = vld [vmem:[%s5 + $0x358] sm:$0xff]
    %v4029 = vld [vmem:[%s5 + $0x360] sm:$0xff]
    %v4030 = vld [vmem:[%s5 + $0x380] sm:$0xff]
    %v4031 = vld [vmem:[%s5 + $0x388] sm:$0xff]
    %v4032 = vld [vmem:[%s5 + $0x3a8] sm:$0xff]
    %v4033 = vld [vmem:[%s5 + $0x3b0] sm:$0xff]
    %v4034 = vld [vmem:[%s5 + $0x3d0] sm:$0xff]
    %v4035 = vld [vmem:[%s5 + $0x3d8] sm:$0xff]
    %v4036 = vld [vmem:[%s5 + $0x3f8] sm:$0xff]
    %v4037 = vld [vmem:[%s5 + $0x400] sm:$0xff]
    %v4038 = vld [vmem:[%s5 + $0x420] sm:$0xff]
    %v4039 = vld [vmem:[%s5 + $0x428] sm:$0xff]
    %v4040 = vld [vmem:[%s5 + $0x448] sm:$0xff]
    %v4041 = vld [vmem:[%s5 + $0x450] sm:$0xff]
    %v4042 = vld [vmem:[%s5 + $0x470] sm:$0xff]
    %v4043 = vld [vmem:[%s5 + $0x478] sm:$0xff]
    %v4044 = vld [vmem:[%s5 + $0x498] sm:$0xff]
    %v4045 = vld [vmem:[%s5 + $0x4a0] sm:$0xff]
    %v4046 = vld [vmem:[%s5 + $0x4c0] sm:$0xff]
    %v4047 = vld [vmem:[%s5 + $0x4c8] sm:$0xff]
    %v4048 = vld [vmem:[%s5 + $0x4e8] sm:$0xff]
    %v4049 = vld [vmem:[%s5 + $0x4f0] sm:$0xff]
    %v4050 = vld [vmem:[%s5 + $0x510] sm:$0xff]
    %v4051 = vld [vmem:[%s5 + $0x518] sm:$0xff]
    %v4052 = vld [vmem:[%s5 + $0x538] sm:$0xff]
    %v4053 = vld [vmem:[%s5 + $0x540] sm:$0xff]
    %v4054 = vld [vmem:[%s5 + $0x560] sm:$0xff]
    %v4055 = vld [vmem:[%s5 + $0x568] sm:$0xff]
    %v4056 = vld [vmem:[%s5 + $0x588] sm:$0xff]
    %v4057 = vld [vmem:[%s5 + $0x590] sm:$0xff]
    %v4058 = vld [vmem:[%s5 + $0x5b0] sm:$0xff]
    %v4059 = vld [vmem:[%s5 + $0x5b8] sm:$0xff]
    %v4060 = vld [vmem:[%s5 + $0x5d8] sm:$0xff]
    %v4061 = vld [vmem:[%s5 + $0x5e0] sm:$0xff]
    %v4062 = vld [vmem:[%s5 + $0x600] sm:$0xff]
    %v4063 = vld [vmem:[%s5 + $0x608] sm:$0xff]
    %v4064 = vld [vmem:[%s5 + $0x628] sm:$0xff]
    %v4065 = vld [vmem:[%s5 + $0x630] sm:$0xff]
    %v4066 = vld [vmem:[%s5 + $0x650] sm:$0xff]
    %v4067 = vld [vmem:[%s5 + $0x658] sm:$0xff]
    %v4068 = vld [vmem:[%s5 + $0x678] sm:$0xff]
    %v4069 = vld [vmem:[%s5 + $0x680] sm:$0xff]
    %v4070 = vld [vmem:[%s5 + $0x6a0] sm:$0xff]
    %v4071 = vld [vmem:[%s5 + $0x6a8] sm:$0xff]
    %v4072 = vld [vmem:[%s5 + $0x6c8] sm:$0xff]
    %v4073 = vld [vmem:[%s5 + $0x6d0] sm:$0xff]
    %v4074 = vld [vmem:[%s5 + $0x6f0] sm:$0xff]
    %v4075 = vld [vmem:[%s5 + $0x6f8] sm:$0xff]
    %v4076 = vld [vmem:[%s5 + $0x718] sm:$0xff]
    %v4077 = vld [vmem:[%s5 + $0x720] sm:$0xff]
    %v4078 = vld [vmem:[%s5 + $0x740] sm:$0xff]
    %v4079 = vld [vmem:[%s5 + $0x748] sm:$0xff]
    %v4080 = vld [vmem:[%s5 + $0x768] sm:$0xff]
    %v4081 = vld [vmem:[%s5 + $0x770] sm:$0xff]
    %v4082 = vld [vmem:[%s5 + $0x790] sm:$0xff]
    %v4083 = vld [vmem:[%s5 + $0x798] sm:$0xff]
    %v4084 = vld [vmem:[%s5 + $0x7b8] sm:$0xff]
    %v4085 = vld [vmem:[%s5 + $0x7c0] sm:$0xff]
    %v4086 = vld [vmem:[%s5 + $0x7e0] sm:$0xff]
    %v4087 = vld [vmem:[%s5 + $0x7e8] sm:$0xff]
    %v4088 = vld [vmem:[%s5 + $0x808] sm:$0xff]
    %v4089 = vld [vmem:[%s5 + $0x810] sm:$0xff]
    %v4090 = vld [vmem:[%s5 + $0x830] sm:$0xff]
    %v4091 = vld [vmem:[%s5 + $0x838] sm:$0xff]
    %v4092 = vld [vmem:[%s5 + $0x858] sm:$0xff]
    %v4093 = vld [vmem:[%s5 + $0x860] sm:$0xff]
    %v4094 = vld [vmem:[%s5 + $0x880] sm:$0xff]
    %v4095 = vld [vmem:[%s5 + $0x888] sm:$0xff]
    %v4096 = vld [vmem:[%s5 + $0x8a8] sm:$0xff]
    %v4097 = vld [vmem:[%s5 + $0x8b0] sm:$0xff]
    %v4098 = vld [vmem:[%s5 + $0x8d0] sm:$0xff]
    %v4099 = vld [vmem:[%s5 + $0x8d8] sm:$0xff]
    %v4100 = vld [vmem:[%s5 + $0x8f8] sm:$0xff]
    %v4101 = vld [vmem:[%s5 + $0x900] sm:$0xff]
    %v4102 = vld [vmem:[%s5 + $0x920] sm:$0xff]
    %v4103 = vld [vmem:[%s5 + $0x928] sm:$0xff]
    %v4104 = vld [vmem:[%s5 + $0x948] sm:$0xff]
    %v4105 = vld [vmem:[%s5 + $0x950] sm:$0xff]
    %v4106 = vld [vmem:[%s5 + $0x970] sm:$0xff]
    %v4107 = vld [vmem:[%s5 + $0x978] sm:$0xff]
    %v4108 = vld [vmem:[%s5 + $0x998] sm:$0xff]
    %v4109 = vld [vmem:[%s5 + $0x9a0] sm:$0xff]
    %v4110 = vld [vmem:[%s5 + $0x9c0] sm:$0xff]
    %v4111 = vld [vmem:[%s5 + $0x9c8] sm:$0xff]
    %v4112 = vld [vmem:[%s5 + $0x9e8] sm:$0xff]
    %v4113 = vld [vmem:[%s5 + $0x9f0] sm:$0xff]
    %s4114 = scalar_lea.vmem %s7, 82
    %v4115 = vld [vmem:[%s4114] ss:$8 sm:$0x3]
    %v4117 = vlaneseq
    %v4118 = vshrl.u32 %v4117, 7
    %v4119 = vsub.s32 0, %v4118
    %v4120 = vrot.slane %v4115, %v4119
    %v4121 = vlaneseq
    %v4122 = vshrl.u32 %v4121, 7
    %v4123 = vsub.s32 1, %v4122
    %v4124 = vrot.slane %v4115, %v4123
    %4127 = vmatprep.subr.mxu0 %v3987
    %4128 = vmatpush1.msra.mxu0 %v3986
    %4129 = vmatprep.subr.mxu0 %v3989
    %4130 = vmatpush1.msra.mxu0 %v3988
    %4131 = vmatprep.subr.mxu0 %v3991
    %4132 = vmatpush1.msra.mxu0 %v3990
    %4133 = vmatprep.subr.mxu0 %v3993
    %4134 = vmatpush1.msra.mxu0 %v3992
    %4135 = vmatprep.subr.mxu0 %v3995
    %4136 = vmatpush1.msra.mxu0 %v3994
    %4137 = vmatprep.subr.mxu0 %v3997
    %4138 = vmatpush1.msra.mxu0 %v3996
    %4139 = vmatprep.subr.mxu0 %v3999
    %4140 = vmatpush1.msra.mxu0 %v3998
    %4141 = vmatprep.subr.mxu0 %v4001
    %4142 = vmatpush1.msra.mxu0 %v4000
    %4143 = vmatprep.subr.mxu0 %v4003
    %4144 = vmatpush1.msra.mxu0 %v4002
    %4145 = vmatprep.subr.mxu0 %v4005
    %4146 = vmatpush1.msra.mxu0 %v4004
    %4147 = vmatprep.subr.mxu0 %v4007
    %4148 = vmatpush1.msra.mxu0 %v4006
    %4149 = vmatprep.subr.mxu0 %v4009
    %4150 = vmatpush1.msra.mxu0 %v4008
    %4151 = vmatprep.subr.mxu0 %v4011
    %4152 = vmatpush1.msra.mxu0 %v4010
    %4153 = vmatprep.subr.mxu0 %v4013
    %4154 = vmatpush1.msra.mxu0 %v4012
    %4155 = vmatprep.subr.mxu0 %v4015
    %4156 = vmatpush1.msra.mxu0 %v4014
    %4157 = vmatprep.subr.mxu0 %v4017
    %4158 = vmatpush1.msra.mxu0 %v4016
    %4159 = vmatprep.subr.mxu0 %v4019
    %4160 = vmatpush1.msra.mxu0 %v4018
    %4161 = vmatprep.subr.mxu0 %v4021
    %4162 = vmatpush1.msra.mxu0 %v4020
    %4163 = vmatprep.subr.mxu0 %v4023
    %4164 = vmatpush1.msra.mxu0 %v4022
    %4165 = vmatprep.subr.mxu0 %v4025
    %4166 = vmatpush1.msra.mxu0 %v4024
    %4167 = vmatprep.subr.mxu0 %v4027
    %4168 = vmatpush1.msra.mxu0 %v4026
    %4169 = vmatprep.subr.mxu0 %v4029
    %4170 = vmatpush1.msra.mxu0 %v4028
    %4171 = vmatprep.subr.mxu0 %v4031
    %4172 = vmatpush1.msra.mxu0 %v4030
    %4173 = vmatprep.subr.mxu0 %v4033
    %4174 = vmatpush1.msra.mxu0 %v4032
    %4175 = vmatprep.subr.mxu0 %v4035
    %4176 = vmatpush1.msra.mxu0 %v4034
    %4177 = vmatprep.subr.mxu0 %v4037
    %4178 = vmatpush1.msra.mxu0 %v4036
    %4179 = vmatprep.subr.mxu0 %v4039
    %4180 = vmatpush1.msra.mxu0 %v4038
    %4181 = vmatprep.subr.mxu0 %v4041
    %4182 = vmatpush1.msra.mxu0 %v4040
    %4183 = vmatprep.subr.mxu0 %v4043
    %4184 = vmatpush1.msra.mxu0 %v4042
    %4185 = vmatprep.subr.mxu0 %v4045
    %4186 = vmatpush1.msra.mxu0 %v4044
    %4187 = vmatprep.subr.mxu0 %v4047
    %4188 = vmatpush1.msra.mxu0 %v4046
    %4189 = vmatprep.subr.mxu0 %v4049
    %4190 = vmatpush1.msra.mxu0 %v4048
    %4191 = vmatprep.mubr.f32.mxu0 %v3955
    %4192 = vmatmul.mubr.f32.gmra.mrb[0].mxu0 %v3954
    %v4193 = vpop.f32.mrb[0].mxu0
    %v4194 = vadd.f32 %v4120, %v4193
    %v4195 = vpop.f32.mrb[0].mxu0
    %v4196 = vadd.f32 %v4124, %v4195
    %4197 = vmatprep.mubr.f32.mxu0 %v3959
    %4198 = vmatmul.mubr.f32.gmra.mrb[0].mxu0 %v3958
    %v4199 = vpop.f32.mrb[0].mxu0
    %v4200 = vadd.f32 %v4120, %v4199
    %v4201 = vpop.f32.mrb[0].mxu0
    %v4202 = vadd.f32 %v4124, %v4201
    %4203 = vmatprep.mubr.f32.mxu0 %v3963
    %4204 = vmatmul.mubr.f32.gmra.mrb[0].mxu0 %v3962
    %v4205 = vpop.f32.mrb[0].mxu0
    %v4206 = vadd.f32 %v4120, %v4205
    %v4207 = vpop.f32.mrb[0].mxu0
    %v4208 = vadd.f32 %v4124, %v4207
    %4209 = vmatprep.mubr.f32.mxu0 %v3967
    %4210 = vmatmul.mubr.f32.gmra.mrb[0].mxu0 %v3966
    %v4211 = vpop.f32.mrb[0].mxu0
    %v4212 = vadd.f32 %v4120, %v4211
    %v4213 = vpop.f32.mrb[0].mxu0
    %v4214 = vadd.f32 %v4124, %v4213
    %4215 = vmatprep.mubr.f32.mxu0 %v3971
    %4216 = vmatmul.mubr.f32.gmra.mrb[0].mxu0 %v3970
    %v4217 = vpop.f32.mrb[0].mxu0
    %v4218 = vadd.f32 %v4120, %v4217
    %v4219 = vpop.f32.mrb[0].mxu0
    %v4220 = vadd.f32 %v4124, %v4219
    %4221 = vmatprep.mubr.f32.mxu0 %v3975
    %4222 = vmatmul.mubr.f32.gmra.mrb[0].mxu0 %v3974
    %v4223 = vpop.f32.mrb[0].mxu0
    %v4224 = vadd.f32 %v4120, %v4223
    %v4225 = vpop.f32.mrb[0].mxu0
    %v4226 = vadd.f32 %v4124, %v4225
    %4227 = vmatprep.mubr.f32.mxu0 %v3979
    %4228 = vmatmul.mubr.f32.gmra.mrb[0].mxu0 %v3978
    %v4229 = vpop.f32.mrb[0].mxu0
    %v4230 = vadd.f32 %v4120, %v4229
    %v4231 = vpop.f32.mrb[0].mxu0
    %v4232 = vadd.f32 %v4124, %v4231
    %4233 = vmatprep.mubr.f32.mxu0 %v3983
    %4234 = vmatmul.mubr.f32.gmra.mrb[0].mxu0 %v3982
    %v4235 = vpop.f32.mrb[0].mxu0
    %v4236 = vadd.f32 %v4120, %v4235
    %v4237 = vpop.f32.mrb[0].mxu0
    %v4238 = vadd.f32 %v4124, %v4237
    %4239 = vdwg.mxu0
    %4240 = vmatprep.subr.mxu0 %v4051
    %4241 = vmatpush1.msra.mxu0 %v4050
    %4242 = vmatprep.subr.mxu0 %v4053
    %4243 = vmatpush1.msra.mxu0 %v4052
    %4244 = vmatprep.subr.mxu0 %v4055
    %4245 = vmatpush1.msra.mxu0 %v4054
    %4246 = vmatprep.subr.mxu0 %v4057
    %4247 = vmatpush1.msra.mxu0 %v4056
    %4248 = vmatprep.subr.mxu0 %v4059
    %4249 = vmatpush1.msra.mxu0 %v4058
    %4250 = vmatprep.subr.mxu0 %v4061
    %4251 = vmatpush1.msra.mxu0 %v4060
    %4252 = vmatprep.subr.mxu0 %v4063
    %4253 = vmatpush1.msra.mxu0 %v4062
    %4254 = vmatprep.subr.mxu0 %v4065
    %4255 = vmatpush1.msra.mxu0 %v4064
    %4256 = vmatprep.subr.mxu0 %v4067
    %4257 = vmatpush1.msra.mxu0 %v4066
    %4258 = vmatprep.subr.mxu0 %v4069
    %4259 = vmatpush1.msra.mxu0 %v4068
    %4260 = vmatprep.subr.mxu0 %v4071
    %4261 = vmatpush1.msra.mxu0 %v4070
    %4262 = vmatprep.subr.mxu0 %v4073
    %4263 = vmatpush1.msra.mxu0 %v4072
    %4264 = vmatprep.subr.mxu0 %v4075
    %4265 = vmatpush1.msra.mxu0 %v4074
    %4266 = vmatprep.subr.mxu0 %v4077
    %4267 = vmatpush1.msra.mxu0 %v4076
    %4268 = vmatprep.subr.mxu0 %v4079
    %4269 = vmatpush1.msra.mxu0 %v4078
    %4270 = vmatprep.subr.mxu0 %v4081
    %4271 = vmatpush1.msra.mxu0 %v4080
    %4272 = vmatprep.subr.mxu0 %v4083
    %4273 = vmatpush1.msra.mxu0 %v4082
    %4274 = vmatprep.subr.mxu0 %v4085
    %4275 = vmatpush1.msra.mxu0 %v4084
    %4276 = vmatprep.subr.mxu0 %v4087
    %4277 = vmatpush1.msra.mxu0 %v4086
    %4278 = vmatprep.subr.mxu0 %v4089
    %4279 = vmatpush1.msra.mxu0 %v4088
    %4280 = vmatprep.subr.mxu0 %v4091
    %4281 = vmatpush1.msra.mxu0 %v4090
    %4282 = vmatprep.subr.mxu0 %v4093
    %4283 = vmatpush1.msra.mxu0 %v4092
    %4284 = vmatprep.subr.mxu0 %v4095
    %4285 = vmatpush1.msra.mxu0 %v4094
    %4286 = vmatprep.subr.mxu0 %v4097
    %4287 = vmatpush1.msra.mxu0 %v4096
    %4288 = vmatprep.subr.mxu0 %v4099
    %4289 = vmatpush1.msra.mxu0 %v4098
    %4290 = vmatprep.subr.mxu0 %v4101
    %4291 = vmatpush1.msra.mxu0 %v4100
    %4292 = vmatprep.subr.mxu0 %v4103
    %4293 = vmatpush1.msra.mxu0 %v4102
    %4294 = vmatprep.subr.mxu0 %v4105
    %4295 = vmatpush1.msra.mxu0 %v4104
    %4296 = vmatprep.subr.mxu0 %v4107
    %4297 = vmatpush1.msra.mxu0 %v4106
    %4298 = vmatprep.subr.mxu0 %v4109
    %4299 = vmatpush1.msra.mxu0 %v4108
    %4300 = vmatprep.subr.mxu0 %v4111
    %4301 = vmatpush1.msra.mxu0 %v4110
    %4302 = vmatprep.subr.mxu0 %v4113
    %4303 = vmatpush1.msra.mxu0 %v4112
    %4304 = vmatprep.mubr.f32.mxu0 %v3957
    %4305 = vmatmul.mubr.f32.gmra.mrb[0].mxu0 %v3956
    %v4306 = vpop.f32.mrb[0].mxu0
    %v4307 = vadd.f32 %v4194, %v4306
    %v4308 = vpop.f32.mrb[0].mxu0
    %v4309 = vadd.f32 %v4196, %v4308
    %4310 = vmatprep.mubr.f32.mxu0 %v3961
    %4311 = vmatmul.mubr.f32.gmra.mrb[0].mxu0 %v3960
    %v4312 = vpop.f32.mrb[0].mxu0
    %v4313 = vadd.f32 %v4200, %v4312
    %v4314 = vpop.f32.mrb[0].mxu0
    %v4315 = vadd.f32 %v4202, %v4314
    %4316 = vmatprep.mubr.f32.mxu0 %v3965
    %4317 = vmatmul.mubr.f32.gmra.mrb[0].mxu0 %v3964
    %v4318 = vpop.f32.mrb[0].mxu0
    %v4319 = vadd.f32 %v4206, %v4318
    %v4320 = vpop.f32.mrb[0].mxu0
    %v4321 = vadd.f32 %v4208, %v4320
    %4322 = vmatprep.mubr.f32.mxu0 %v3969
    %4323 = vmatmul.mubr.f32.gmra.mrb[0].mxu0 %v3968
    %v4324 = vpop.f32.mrb[0].mxu0
    %v4325 = vadd.f32 %v4212, %v4324
    %v4326 = vpop.f32.mrb[0].mxu0
    %v4327 = vadd.f32 %v4214, %v4326
    %4328 = vmatprep.mubr.f32.mxu0 %v3973
    %4329 = vmatmul.mubr.f32.gmra.mrb[0].mxu0 %v3972
    %v4330 = vpop.f32.mrb[0].mxu0
    %v4331 = vadd.f32 %v4218, %v4330
    %v4332 = vpop.f32.mrb[0].mxu0
    %v4333 = vadd.f32 %v4220, %v4332
    %4334 = vmatprep.mubr.f32.mxu0 %v3977
    %4335 = vmatmul.mubr.f32.gmra.mrb[0].mxu0 %v3976
    %v4336 = vpop.f32.mrb[0].mxu0
    %v4337 = vadd.f32 %v4224, %v4336
    %v4338 = vpop.f32.mrb[0].mxu0
    %v4339 = vadd.f32 %v4226, %v4338
    %4340 = vmatprep.mubr.f32.mxu0 %v3981
    %4341 = vmatmul.mubr.f32.gmra.mrb[0].mxu0 %v3980
    %v4342 = vpop.f32.mrb[0].mxu0
    %v4343 = vadd.f32 %v4230, %v4342
    %v4344 = vpop.f32.mrb[0].mxu0
    %v4345 = vadd.f32 %v4232, %v4344
    %4346 = vmatprep.mubr.f32.mxu0 %v3985
    %4347 = vmatmul.mubr.f32.gmra.mrb[0].mxu0 %v3984
    %v4348 = vpop.f32.mrb[0].mxu0
    %v4349 = vadd.f32 %v4236, %v4348
    %v4350 = vpop.f32.mrb[0].mxu0
    %v4351 = vadd.f32 %v4238, %v4350
    %4352 = vdwg.mxu0
    %v4353 = vmax.f32 %v4307, 0.0
    %v4354 = vmax.f32 %v4309, 0.0
    %v4355 = vmax.f32 %v4313, 0.0
    %v4356 = vmax.f32 %v4315, 0.0
    %v4357 = vmax.f32 %v4319, 0.0
    %v4358 = vmax.f32 %v4321, 0.0
    %v4359 = vmax.f32 %v4325, 0.0
    %v4360 = vmax.f32 %v4327, 0.0
    %v4361 = vmax.f32 %v4331, 0.0
    %v4362 = vmax.f32 %v4333, 0.0
    %v4363 = vmax.f32 %v4337, 0.0
    %v4364 = vmax.f32 %v4339, 0.0
    %v4365 = vmax.f32 %v4343, 0.0
    %v4366 = vmax.f32 %v4345, 0.0
    %v4367 = vmax.f32 %v4349, 0.0
    %v4368 = vmax.f32 %v4351, 0.0
    %v4369 = vld [vmem:[%s3 + $0x20] sm:$0xff]
    %v4370 = vld [vmem:[%s3 + $0x48] sm:$0xff]
    %v4371 = vld [vmem:[%s3 + $0x70] sm:$0xff]
    %v4372 = vld [vmem:[%s3 + $0x98] sm:$0xff]
    %v4373 = vld [vmem:[%s3 + $0xc0] sm:$0xff]
    %v4374 = vld [vmem:[%s3 + $0xe8] sm:$0xff]
    %v4375 = vld [vmem:[%s3 + $0x110] sm:$0xff]
    %v4376 = vld [vmem:[%s3 + $0x138] sm:$0xff]
    %v4377 = vld [vmem:[%s3 + $0x160] sm:$0xff]
    %v4378 = vld [vmem:[%s3 + $0x188] sm:$0xff]
    %v4379 = vld [vmem:[%s3 + $0x1b0] sm:$0xff]
    %v4380 = vld [vmem:[%s3 + $0x1d8] sm:$0xff]
    %v4381 = vld [vmem:[%s3 + $0x200] sm:$0xff]
    %v4382 = vld [vmem:[%s3 + $0x228] sm:$0xff]
    %v4383 = vld [vmem:[%s3 + $0x250] sm:$0xff]
    %v4384 = vld [vmem:[%s3 + $0x278] sm:$0xff]
    %v4385 = vld [vmem:[%s3 + $0x2a0] sm:$0xff]
    %v4386 = vld [vmem:[%s3 + $0x2c8] sm:$0xff]
    %v4387 = vld [vmem:[%s3 + $0x2f0] sm:$0xff]
    %v4388 = vld [vmem:[%s3 + $0x318] sm:$0xff]
    %v4389 = vld [vmem:[%s3 + $0x340] sm:$0xff]
    %v4390 = vld [vmem:[%s3 + $0x368] sm:$0xff]
    %v4391 = vld [vmem:[%s3 + $0x390] sm:$0xff]
    %v4392 = vld [vmem:[%s3 + $0x3b8] sm:$0xff]
    %v4393 = vld [vmem:[%s3 + $0x3e0] sm:$0xff]
    %v4394 = vld [vmem:[%s3 + $0x408] sm:$0xff]
    %v4395 = vld [vmem:[%s3 + $0x430] sm:$0xff]
    %v4396 = vld [vmem:[%s3 + $0x458] sm:$0xff]
    %v4397 = vld [vmem:[%s3 + $0x480] sm:$0xff]
    %v4398 = vld [vmem:[%s3 + $0x4a8] sm:$0xff]
    %v4399 = vld [vmem:[%s3 + $0x4d0] sm:$0xff]
    %v4400 = vld [vmem:[%s3 + $0x4f8] sm:$0xff]
    %v4401 = vld [vmem:[%s7 + $0x53] ss:$0 sm:$0xff]
    %4402 = vmatprep.subr.mxu0 0.0
    %4403 = vmatpush1.msra.mxu0 %v4369
    %4404 = vmatprep.subr.mxu0 0.0
    %4405 = vmatpush1.msra.mxu0 %v4370
    %4406 = vmatprep.subr.mxu0 0.0
    %4407 = vmatpush1.msra.mxu0 %v4371
    %4408 = vmatprep.subr.mxu0 0.0
    %4409 = vmatpush1.msra.mxu0 %v4372
    %4410 = vmatprep.subr.mxu0 0.0
    %4411 = vmatpush1.msra.mxu0 %v4373
    %4412 = vmatprep.subr.mxu0 0.0
    %4413 = vmatpush1.msra.mxu0 %v4374
    %4414 = vmatprep.subr.mxu0 0.0
    %4415 = vmatpush1.msra.mxu0 %v4375
    %4416 = vmatprep.subr.mxu0 0.0
    %4417 = vmatpush1.msra.mxu0 %v4376
    %4418 = vmatprep.subr.mxu0 0.0
    %4419 = vmatpush1.msra.mxu0 %v4377
    %4420 = vmatprep.subr.mxu0 0.0
    %4421 = vmatpush1.msra.mxu0 %v4378
    %4422 = vmatprep.subr.mxu0 0.0
    %4423 = vmatpush1.msra.mxu0 %v4379
    %4424 = vmatprep.subr.mxu0 0.0
    %4425 = vmatpush1.msra.mxu0 %v4380
    %4426 = vmatprep.subr.mxu0 0.0
    %4427 = vmatpush1.msra.mxu0 %v4381
    %4428 = vmatprep.subr.mxu0 0.0
    %4429 = vmatpush1.msra.mxu0 %v4382
    %4430 = vmatprep.subr.mxu0 0.0
    %4431 = vmatpush1.msra.mxu0 %v4383
    %4432 = vmatprep.subr.mxu0 0.0
    %4433 = vmatpush1.msra.mxu0 %v4384
    %4434 = vmatprep.subr.mxu0 0.0
    %4435 = vmatpush1.msra.mxu0 %v4385
    %4436 = vmatprep.subr.mxu0 0.0
    %4437 = vmatpush1.msra.mxu0 %v4386
    %4438 = vmatprep.subr.mxu0 0.0
    %4439 = vmatpush1.msra.mxu0 %v4387
    %4440 = vmatprep.subr.mxu0 0.0
    %4441 = vmatpush1.msra.mxu0 %v4388
    %4442 = vmatprep.subr.mxu0 0.0
    %4443 = vmatpush1.msra.mxu0 %v4389
    %4444 = vmatprep.subr.mxu0 0.0
    %4445 = vmatpush1.msra.mxu0 %v4390
    %4446 = vmatprep.subr.mxu0 0.0
    %4447 = vmatpush1.msra.mxu0 %v4391
    %4448 = vmatprep.subr.mxu0 0.0
    %4449 = vmatpush1.msra.mxu0 %v4392
    %4450 = vmatprep.subr.mxu0 0.0
    %4451 = vmatpush1.msra.mxu0 %v4393
    %4452 = vmatprep.subr.mxu0 0.0
    %4453 = vmatpush1.msra.mxu0 %v4394
    %4454 = vmatprep.subr.mxu0 0.0
    %4455 = vmatpush1.msra.mxu0 %v4395
    %4456 = vmatprep.subr.mxu0 0.0
    %4457 = vmatpush1.msra.mxu0 %v4396
    %4458 = vmatprep.subr.mxu0 0.0
    %4459 = vmatpush1.msra.mxu0 %v4397
    %4460 = vmatprep.subr.mxu0 0.0
    %4461 = vmatpush1.msra.mxu0 %v4398
    %4462 = vmatprep.subr.mxu0 0.0
    %4463 = vmatpush1.msra.mxu0 %v4399
    %4464 = vmatprep.subr.mxu0 0.0
    %4465 = vmatpush1.msra.mxu0 %v4400
    %4466 = vmatprep.mubr.f32.mxu0 %v4354
    %4467 = vmatmul.mubr.f32.gmra.mrb[0].mxu0 %v4353
    %v4468 = vpop.f32.mrb[0].mxu0
    %v4469 = vadd.f32 %v4401, %v4468
    %v4470 = vpop.f32.mrb[0].mxu0
    %4471 = vmatprep.mubr.f32.mxu0 %v4356
    %4472 = vmatmul.mubr.f32.gmra.mrb[0].mxu0 %v4355
    %v4473 = vpop.f32.mrb[0].mxu0
    %v4474 = vadd.f32 %v4401, %v4473
    %v4475 = vpop.f32.mrb[0].mxu0
    %4476 = vmatprep.mubr.f32.mxu0 %v4358
    %4477 = vmatmul.mubr.f32.gmra.mrb[0].mxu0 %v4357
    %v4478 = vpop.f32.mrb[0].mxu0
    %v4479 = vadd.f32 %v4401, %v4478
    %v4480 = vpop.f32.mrb[0].mxu0
    %4481 = vmatprep.mubr.f32.mxu0 %v4360
    %4482 = vmatmul.mubr.f32.gmra.mrb[0].mxu0 %v4359
    %v4483 = vpop.f32.mrb[0].mxu0
    %v4484 = vadd.f32 %v4401, %v4483
    %v4485 = vpop.f32.mrb[0].mxu0
    %4486 = vmatprep.mubr.f32.mxu0 %v4362
    %4487 = vmatmul.mubr.f32.gmra.mrb[0].mxu0 %v4361
    %v4488 = vpop.f32.mrb[0].mxu0
    %v4489 = vadd.f32 %v4401, %v4488
    %v4490 = vpop.f32.mrb[0].mxu0
    %4491 = vmatprep.mubr.f32.mxu0 %v4364
    %4492 = vmatmul.mubr.f32.gmra.mrb[0].mxu0 %v4363
    %v4493 = vpop.f32.mrb[0].mxu0
    %v4494 = vadd.f32 %v4401, %v4493
    %v4495 = vpop.f32.mrb[0].mxu0
    %4496 = vmatprep.mubr.f32.mxu0 %v4366
    %4497 = vmatmul.mubr.f32.gmra.mrb[0].mxu0 %v4365
    %v4498 = vpop.f32.mrb[0].mxu0
    %v4499 = vadd.f32 %v4401, %v4498
    %v4500 = vpop.f32.mrb[0].mxu0
    %4501 = vmatprep.mubr.f32.mxu0 %v4368
    %4502 = vmatmul.mubr.f32.gmra.mrb[0].mxu0 %v4367
    %v4503 = vpop.f32.mrb[0].mxu0
    %v4504 = vadd.f32 %v4401, %v4503
    %v4505 = vpop.f32.mrb[0].mxu0
    %4506 = vdwg.mxu0
    %v4507 = vmax.f32 %v4469, 0.0
    %v4508 = vmax.f32 %v4474, 0.0
    %v4509 = vmax.f32 %v4479, 0.0
    %v4510 = vmax.f32 %v4484, 0.0
    %v4511 = vmax.f32 %v4489, 0.0
    %v4512 = vmax.f32 %v4494, 0.0
    %v4513 = vmax.f32 %v4499, 0.0
    %v4514 = vmax.f32 %v4504, 0.0
    %v4515 = vld [vmem:[%s4 + $0x38] sm:$0xff]
    %v4516 = vld [vmem:[%s4 + $0x80] sm:$0xff]
    %v4517 = vld [vmem:[%s4 + $0xc8] sm:$0xff]
    %v4518 = vld [vmem:[%s4 + $0x110] sm:$0xff]
    %v4519 = vld [vmem:[%s4 + $0x158] sm:$0xff]
    %v4520 = vld [vmem:[%s4 + $0x1a0] sm:$0xff]
    %v4521 = vld [vmem:[%s4 + $0x1e8] sm:$0xff]
    %v4522 = vld [vmem:[%s4 + $0x230] sm:$0xff]
    %v4523 = vld [vmem:[%s4 + $0x278] sm:$0xff]
    %v4524 = vld [vmem:[%s4 + $0x2c0] sm:$0xff]
    %v4525 = vld [vmem:[%s4 + $0x308] sm:$0xff]
    %v4526 = vld [vmem:[%s4 + $0x350] sm:$0xff]
    %v4527 = vld [vmem:[%s4 + $0x398] sm:$0xff]
    %v4528 = vld [vmem:[%s4 + $0x3e0] sm:$0xff]
    %v4529 = vld [vmem:[%s4 + $0x428] sm:$0xff]
    %v4530 = vld [vmem:[%s4 + $0x470] sm:$0xff]
    %v4531 = vld [vmem:[%s7 + $0x54] ss:$0 sm:$0xff]
    %4532 = vmatprep.subr.mxu0 0.0
    %4533 = vmatpush1.msra.mxu0 %v4515
    %4534 = vmatprep.subr.mxu0 0.0
    %4535 = vmatpush1.msra.mxu0 %v4516
    %4536 = vmatprep.subr.mxu0 0.0
    %4537 = vmatpush1.msra.mxu0 %v4517
    %4538 = vmatprep.subr.mxu0 0.0
    %4539 = vmatpush1.msra.mxu0 %v4518
    %4540 = vmatprep.subr.mxu0 0.0
    %4541 = vmatpush1.msra.mxu0 %v4519
    %4542 = vmatprep.subr.mxu0 0.0
    %4543 = vmatpush1.msra.mxu0 %v4520
    %4544 = vmatprep.subr.mxu0 0.0
    %4545 = vmatpush1.msra.mxu0 %v4521
    %4546 = vmatprep.subr.mxu0 0.0
    %4547 = vmatpush1.msra.mxu0 %v4522
    %4548 = vmatprep.subr.mxu0 0.0
    %4549 = vmatpush1.msra.mxu0 %v4523
    %4550 = vmatprep.subr.mxu0 0.0
    %4551 = vmatpush1.msra.mxu0 %v4524
    %4552 = vmatprep.subr.mxu0 0.0
    %4553 = vmatpush1.msra.mxu0 %v4525
    %4554 = vmatprep.subr.mxu0 0.0
    %4555 = vmatpush1.msra.mxu0 %v4526
    %4556 = vmatprep.subr.mxu0 0.0
    %4557 = vmatpush1.msra.mxu0 %v4527
    %4558 = vmatprep.subr.mxu0 0.0
    %4559 = vmatpush1.msra.mxu0 %v4528
    %4560 = vmatprep.subr.mxu0 0.0
    %4561 = vmatpush1.msra.mxu0 %v4529
    %4562 = vmatprep.subr.mxu0 0.0
    %4563 = vmatpush1.msra.mxu0 %v4530
    %4564 = vmatprep.subr.mxu0 0.0
    %4565 = vmatpush1.msra.mxu0 0.0
    %4566 = vmatprep.subr.mxu0 0.0
    %4567 = vmatpush1.msra.mxu0 0.0
    %4568 = vmatprep.subr.mxu0 0.0
    %4569 = vmatpush1.msra.mxu0 0.0
    %4570 = vmatprep.subr.mxu0 0.0
    %4571 = vmatpush1.msra.mxu0 0.0
    %4572 = vmatprep.subr.mxu0 0.0
    %4573 = vmatpush1.msra.mxu0 0.0
    %4574 = vmatprep.subr.mxu0 0.0
    %4575 = vmatpush1.msra.mxu0 0.0
    %4576 = vmatprep.subr.mxu0 0.0
    %4577 = vmatpush1.msra.mxu0 0.0
    %4578 = vmatprep.subr.mxu0 0.0
    %4579 = vmatpush1.msra.mxu0 0.0
    %4580 = vmatprep.subr.mxu0 0.0
    %4581 = vmatpush1.msra.mxu0 0.0
    %4582 = vmatprep.subr.mxu0 0.0
    %4583 = vmatpush1.msra.mxu0 0.0
    %4584 = vmatprep.subr.mxu0 0.0
    %4585 = vmatpush1.msra.mxu0 0.0
    %4586 = vmatprep.subr.mxu0 0.0
    %4587 = vmatpush1.msra.mxu0 0.0
    %4588 = vmatprep.subr.mxu0 0.0
    %4589 = vmatpush1.msra.mxu0 0.0
    %4590 = vmatprep.subr.mxu0 0.0
    %4591 = vmatpush1.msra.mxu0 0.0
    %4592 = vmatprep.subr.mxu0 0.0
    %4593 = vmatpush1.msra.mxu0 0.0
    %4594 = vmatprep.subr.mxu0 0.0
    %4595 = vmatpush1.msra.mxu0 0.0
    %4596 = vmatprep.mubr.f32.mxu0 0.0
    %4597 = vmatmul.mubr.f32.gmra.mrb[0].mxu0 %v4507
    %v4598 = vpop.f32.mrb[0].mxu0
    %v4599 = vadd.f32 %v4531, %v4598
    %v4600 = vpop.f32.mrb[0].mxu0
    %4601 = vmatprep.mubr.f32.mxu0 0.0
    %4602 = vmatmul.mubr.f32.gmra.mrb[0].mxu0 %v4508
    %v4603 = vpop.f32.mrb[0].mxu0
    %v4604 = vadd.f32 %v4531, %v4603
    %v4605 = vpop.f32.mrb[0].mxu0
    %4606 = vmatprep.mubr.f32.mxu0 0.0
    %4607 = vmatmul.mubr.f32.gmra.mrb[0].mxu0 %v4509
    %v4608 = vpop.f32.mrb[0].mxu0
    %v4609 = vadd.f32 %v4531, %v4608
    %v4610 = vpop.f32.mrb[0].mxu0
    %4611 = vmatprep.mubr.f32.mxu0 0.0
    %4612 = vmatmul.mubr.f32.gmra.mrb[0].mxu0 %v4510
    %v4613 = vpop.f32.mrb[0].mxu0
    %v4614 = vadd.f32 %v4531, %v4613
    %v4615 = vpop.f32.mrb[0].mxu0
    %4616 = vmatprep.mubr.f32.mxu0 0.0
    %4617 = vmatmul.mubr.f32.gmra.mrb[0].mxu0 %v4511
    %v4618 = vpop.f32.mrb[0].mxu0
    %v4619 = vadd.f32 %v4531, %v4618
    %v4620 = vpop.f32.mrb[0].mxu0
    %4621 = vmatprep.mubr.f32.mxu0 0.0
    %4622 = vmatmul.mubr.f32.gmra.mrb[0].mxu0 %v4512
    %v4623 = vpop.f32.mrb[0].mxu0
    %v4624 = vadd.f32 %v4531, %v4623
    %v4625 = vpop.f32.mrb[0].mxu0
    %4626 = vmatprep.mubr.f32.mxu0 0.0
    %4627 = vmatmul.mubr.f32.gmra.mrb[0].mxu0 %v4513
    %v4628 = vpop.f32.mrb[0].mxu0
    %v4629 = vadd.f32 %v4531, %v4628
    %v4630 = vpop.f32.mrb[0].mxu0
    %4631 = vmatprep.mubr.f32.mxu0 0.0
    %4632 = vmatmul.mubr.f32.gmra.mrb[0].mxu0 %v4514
    %v4633 = vpop.f32.mrb[0].mxu0
    %v4634 = vadd.f32 %v4531, %v4633
    %v4635 = vpop.f32.mrb[0].mxu0
    %4636 = vdwg.mxu0
    %4637 = vst [vmem:[#allocation2] sm:$0xff] %v4599
    %4638 = vst [vmem:[#allocation2 + $0x8] sm:$0xff] %v4604
    %4639 = vst [vmem:[#allocation2 + $0x10] sm:$0xff] %v4609
    %4640 = vst [vmem:[#allocation2 + $0x18] sm:$0xff] %v4614
    %4641 = vst [vmem:[#allocation2 + $0x20] sm:$0xff] %v4619
    %4642 = vst [vmem:[#allocation2 + $0x28] sm:$0xff] %v4624
    %4643 = vst [vmem:[#allocation2 + $0x30] sm:$0xff] %v4629
    %4644 = vst [vmem:[#allocation2 + $0x38] sm:$0xff] %v4634
    // Predicated region
    $region34: #{tpu_custom_call.1} parent=1 // pred_check
      _
    $region35: #{tpu_custom_call.1} parent=1 // pred_check_branch
      %4646 = sbr.rel (0) target = $region37
    $region36: #{tpu_custom_call.1} parent=1 // pred_region
      %s4648 = ssub.s32 1024, 1024
      %4649 = vsyncadd [#allocation3], %s4648
      %s4650 = sshll.u32 [#allocation2], 4
      %s4651 = int_to_ptr.vmem [resolvable:$true] %s4650
      %4656 = dma.vmem_to_hbm [thread:$0]  %s4651, 1024, %s8, [#allocation3], 128, 128, 8
    $region37: #{tpu_custom_call.1} parent=1 // pred_fallthru
      _
    // Predicated region
    $region38: #{tpu_custom_call.1} parent=1 // pred_check
      _
    $region39: #{tpu_custom_call.1} parent=1 // pred_check_branch
      %4658 = sbr.rel (0) target = $region41
    $region40: #{tpu_custom_call.1} parent=1 // pred_region
      %4659 = dma.done [#allocation3], 1024
    $region41: #{tpu_custom_call.1} parent=1 // pred_fallthru
      _
    %4660 = vsyncpa [#allocation3], 1

</llo_original>
